<compile_context>
chip_gen: v7x
topology: tpu7x:2x2x1
jax: 0.10.0
libtpu: 0.0.40
codegen_flags: <defaults>
</compile_context>

<pallas_src>
import jax
import jax.numpy as jnp
from jax import lax
from jax.experimental import pallas as pl
from jax.experimental.pallas import tpu as pltpu


# ----------------------------- Pallas kernel ------------------------------- #
def gru_pretext_kernel(robot_ref, humans_ref, h0_ref, lens_ref,
                       ew1rb_ref, ew1h_ref, eb1_ref, ew2_ref, eb2_ref,
                       wih_r_ref, wih_z_ref, wih_n_ref,
                       whh_r_ref, whh_z_ref, whh_n_ref,
                       b_r_ref, b_z_ref, b_in_ref, b_hn_ref,
                       ow_ref, ob_ref,
                       out_ref, hnew_ref):
    """Hoisted embedding/input-projection + unrolled masked GRU recurrence."""
    batch, seq, _ = robot_ref.shape
    H = h0_ref.shape[1]

    # ---- hoisted, time-invariant work (done once, off the serial path) ---- #
    robot = robot_ref[...]                                   # (batch, seq, 2)
    hum0 = humans_ref[...][:, :, 0:1]                        # (batch, seq, 1)
    robot_flat = robot.reshape(batch * seq, 2)               # (B*S, 2)
    hum_flat = hum0.reshape(batch * seq, 1)                  # (B*S, 1)

    # embedding layer 1: split the 3-feature input matmul into a K=2 matmul
    # plus a rank-1 broadcast-multiply (avoids a tiny lane-dim concat).
    e = jnp.dot(robot_flat, ew1rb_ref[...], preferred_element_type=jnp.float32)
    e = e + hum_flat * ew1h_ref[...] + eb1_ref[...]
    e = jnp.maximum(e, 0.0)
    # embedding layer 2
    e = jnp.maximum(
        jnp.dot(e, ew2_ref[...], preferred_element_type=jnp.float32) + eb2_ref[...],
        0.0)                                                 # (B*S, emb)

    # input projections for all timesteps, per gate, with folded biases
    gi_r = (jnp.dot(e, wih_r_ref[...], preferred_element_type=jnp.float32)
            + b_r_ref[...]).reshape(batch, seq, H)           # b_ir + b_hr folded
    gi_z = (jnp.dot(e, wih_z_ref[...], preferred_element_type=jnp.float32)
            + b_z_ref[...]).reshape(batch, seq, H)           # b_iz + b_hz folded
    gi_n = (jnp.dot(e, wih_n_ref[...], preferred_element_type=jnp.float32)
            + b_in_ref[...]).reshape(batch, seq, H)          # b_in only

    # pack_padded_sequence mask, precomputed once: valid while t < seq_len[b]
    lens = lens_ref[...]                                     # (batch, 1) int32
    step_ids = lax.broadcasted_iota(jnp.int32, (batch, seq), 1)
    mask_all = step_ids < lens                               # (batch, seq) bool

    whh_r = whh_r_ref[...]
    whh_z = whh_z_ref[...]
    whh_n = whh_n_ref[...]
    b_hn = b_hn_ref[...]

    # ---- serial recurrence: only gh = h @ W_hh + gates per step ----------- #
    h = h0_ref[...]
    for t in range(seq):                                     # static unroll
        gh_r = jnp.dot(h, whh_r, preferred_element_type=jnp.float32)
        gh_z = jnp.dot(h, whh_z, preferred_element_type=jnp.float32)
        gh_n = jnp.dot(h, whh_n, preferred_element_type=jnp.float32) + b_hn
        r = jax.nn.sigmoid(gi_r[:, t, :] + gh_r)
        z = jax.nn.sigmoid(gi_z[:, t, :] + gh_z)
        n = jnp.tanh(gi_n[:, t, :] + r * gh_n)
        h_cand = (1.0 - z) * n + z * h
        h = jnp.where(mask_all[:, t:t + 1], h_cand, h)

    hnew_ref[...] = h
    out_ref[...] = jnp.maximum(
        jnp.dot(h, ow_ref[...], preferred_element_type=jnp.float32) + ob_ref[...],
        0.0)


# ------------------------------ JAX wrapper -------------------------------- #
@jax.jit
def lstm_pretext_forward(pretext_nodes, pretext_spatial_edges, rnn_h,
                         each_seq_len, params):
    """One pallas_call; permute/concat folded into the kernel, params split per-gate."""
    batch, seq, _ = pretext_nodes.shape
    H = rnn_h.shape[-1]
    lens = each_seq_len.astype(jnp.int32).reshape(batch, 1)

    # NOTE: wih/whh/ow are stored (in, out); loading a real PyTorch checkpoint
    # requires transposing its (out, in) weights.
    ew1 = params['ew1']                                      # (3, 32)
    ew1_rb = ew1[0:2, :]                                     # robot features
    ew1_h = ew1[2:3, :]                                      # human feature 0
    wih, whh = params['wih'], params['whh']
    bih, bhh = params['bih'], params['bhh']
    wih_r, wih_z, wih_n = wih[:, 0:H], wih[:, H:2 * H], wih[:, 2 * H:3 * H]
    whh_r, whh_z, whh_n = whh[:, 0:H], whh[:, H:2 * H], whh[:, 2 * H:3 * H]
    b_r = bih[:, 0:H] + bhh[:, 0:H]
    b_z = bih[:, H:2 * H] + bhh[:, H:2 * H]
    b_in = bih[:, 2 * H:3 * H]
    b_hn = bhh[:, 2 * H:3 * H]

    args = (pretext_nodes.astype(jnp.float32),
            pretext_spatial_edges.astype(jnp.float32),
            rnn_h.astype(jnp.float32), lens,
            ew1_rb, ew1_h, params['eb1'], params['ew2'], params['eb2'],
            wih_r, wih_z, wih_n, whh_r, whh_z, whh_n,
            b_r, b_z, b_in, b_hn,
            params['ow'], params['ob'])

    vmem = pl.BlockSpec(memory_space=pltpu.MemorySpace.VMEM)
    out, h_new = pl.pallas_call(
        gru_pretext_kernel,
        out_shape=(jax.ShapeDtypeStruct((batch, H), jnp.float32),   # output after ReLU MLP
                   jax.ShapeDtypeStruct((batch, H), jnp.float32)),  # new hidden state
        in_specs=[vmem] * len(args),
        out_specs=(vmem, vmem),
    )(*args)
    return out, h_new


# --------------------------- parameter creation ----------------------------- #
def init_params(key, in_feat=3, emb=32, hidden=32):
    # Deterministic synthetic init (orthogonal-like scale); all biases = 0,
    # matching the module's nn.init.constant_(bias, 0).
    ks = jax.random.split(key, 5)

    def w(k, shape):
        fan_in = shape[0]
        return jax.random.normal(k, shape, dtype=jnp.float32) / jnp.sqrt(fan_in)

    return {
        'ew1': w(ks[0], (in_feat, 32)),        'eb1': jnp.zeros((1, 32), jnp.float32),
        'ew2': w(ks[1], (32, emb)),            'eb2': jnp.zeros((1, emb), jnp.float32),
        'wih': w(ks[2], (emb, 3 * hidden)),    'bih': jnp.zeros((1, 3 * hidden), jnp.float32),
        'whh': w(ks[3], (hidden, 3 * hidden)), 'bhh': jnp.zeros((1, 3 * hidden), jnp.float32),
        'ow':  w(ks[4], (hidden, hidden)),     'ob':  jnp.zeros((1, hidden), jnp.float32),
    }


# --------------------------- pure-JAX reference ----------------------------- #
def reference_forward(pretext_nodes, pretext_spatial_edges, rnn_h, each_seq_len, p):
    robot = jnp.transpose(pretext_nodes, (1, 0, 2))
    humans = jnp.transpose(pretext_spatial_edges, (1, 0, 2))
    x = jnp.concatenate([robot, humans[:, :, 0:1]], axis=-1)
    e = jax.nn.relu(x @ p['ew1'] + p['eb1'][0])
    e = jax.nn.relu(e @ p['ew2'] + p['eb2'][0])
    H = rnn_h.shape[-1]

    def step(h, inp):
        et, t = inp
        gi = et @ p['wih'] + p['bih'][0]
        gh = h @ p['whh'] + p['bhh'][0]
        r = jax.nn.sigmoid(gi[:, :H] + gh[:, :H])
        z = jax.nn.sigmoid(gi[:, H:2 * H] + gh[:, H:2 * H])
        n = jnp.tanh(gi[:, 2 * H:] + r * gh[:, 2 * H:])
        h_c = (1.0 - z) * n + z * h
        mask = (t < each_seq_len)[:, None]
        return jnp.where(mask, h_c, h), None

    seq = x.shape[0]
    h, _ = lax.scan(step, rnn_h, (e, jnp.arange(seq)))
    out = jax.nn.relu(h @ p['ow'] + p['ob'][0])
    return out, h


# ----------------------------------- main ----------------------------------- #
if __name__ == "__main__":
    # Small shapes implied by the module: seq=num_steps, batch=pretext batch,
    # hidden = rnn_hidden_size, embedding_size = 32, input feat = 2 + 1 (mlp decoder).
    SEQ, BATCH, HIDDEN, EMB = 8, 2, 32, 32

    key = jax.random.PRNGKey(0)
    k_nodes, k_edges, k_h, k_params = jax.random.split(key, 4)

    pretext_nodes = jax.random.normal(k_nodes, (BATCH, SEQ, 2), dtype=jnp.float32)
    pretext_spatial_edges = jax.random.normal(k_edges, (BATCH, SEQ, 2), dtype=jnp.float32)
    rnn_h = jax.random.normal(k_h, (BATCH, HIDDEN), dtype=jnp.float32) * 0.1
    each_seq_len = jnp.array([SEQ, 5], dtype=jnp.int32)   # padded-sequence lengths

    params = init_params(k_params, in_feat=3, emb=EMB, hidden=HIDDEN)

    out, h_new = lstm_pretext_forward(pretext_nodes, pretext_spatial_edges,
                                      rnn_h, each_seq_len, params)
    jax.block_until_ready((out, h_new))

    # sanity check against a pure-JAX reference
    out_ref, h_ref = reference_forward(pretext_nodes, pretext_spatial_edges,
                                       rnn_h, each_seq_len, params)
    assert out.shape == (BATCH, HIDDEN) and h_new.shape == (BATCH, HIDDEN)
    assert jnp.allclose(out, out_ref, atol=2e-2, rtol=2e-2)
    assert jnp.allclose(h_new, h_ref, atol=2e-2, rtol=2e-2)

    # rnn_hxs update, as in the torch forward()
    rnn_hxs = {'rnn': h_new}

    print("KERNEL_OK")
</pallas_src>

<mosaic_0001>
module attributes {stable_mosaic.version = 11 : i64} {
  func.func @gru_pretext_kernel(%arg0: memref<2x8x2xf32, #tpu.memory_space<vmem>>, %arg1: memref<2x8x2xf32, #tpu.memory_space<vmem>>, %arg2: memref<2x32xf32, #tpu.memory_space<vmem>>, %arg3: memref<2x1xi32, #tpu.memory_space<vmem>>, %arg4: memref<2x32xf32, #tpu.memory_space<vmem>>, %arg5: memref<1x32xf32, #tpu.memory_space<vmem>>, %arg6: memref<1x32xf32, #tpu.memory_space<vmem>>, %arg7: memref<32x32xf32, #tpu.memory_space<vmem>>, %arg8: memref<1x32xf32, #tpu.memory_space<vmem>>, %arg9: memref<32x32xf32, #tpu.memory_space<vmem>>, %arg10: memref<32x32xf32, #tpu.memory_space<vmem>>, %arg11: memref<32x32xf32, #tpu.memory_space<vmem>>, %arg12: memref<32x32xf32, #tpu.memory_space<vmem>>, %arg13: memref<32x32xf32, #tpu.memory_space<vmem>>, %arg14: memref<32x32xf32, #tpu.memory_space<vmem>>, %arg15: memref<1x32xf32, #tpu.memory_space<vmem>>, %arg16: memref<1x32xf32, #tpu.memory_space<vmem>>, %arg17: memref<1x32xf32, #tpu.memory_space<vmem>>, %arg18: memref<1x32xf32, #tpu.memory_space<vmem>>, %arg19: memref<32x32xf32, #tpu.memory_space<vmem>>, %arg20: memref<1x32xf32, #tpu.memory_space<vmem>>, %arg21: memref<2x32xf32, #tpu.memory_space<vmem>>, %arg22: memref<2x32xf32, #tpu.memory_space<vmem>>) attributes {dimension_semantics = [], scalar_prefetch = 0 : i64, scratch_operands = 0 : i64, tpu.core_type = #tpu.core_type<tc>} {
    %c0 = arith.constant 0 : index
    %c0_0 = arith.constant 0 : index
    %c0_1 = arith.constant 0 : index
    %0 = vector.load %arg0[%c0, %c0_0, %c0_1] : memref<2x8x2xf32, #tpu.memory_space<vmem>>, vector<2x8x2xf32>
    %c0_2 = arith.constant 0 : index
    %c0_3 = arith.constant 0 : index
    %c0_4 = arith.constant 0 : index
    %1 = vector.load %arg1[%c0_2, %c0_3, %c0_4] : memref<2x8x2xf32, #tpu.memory_space<vmem>>, vector<2x8x2xf32>
    %2 = vector.extract_strided_slice %1 {offsets = [0, 0, 0], sizes = [2, 8, 1], strides = [1, 1, 1]} : vector<2x8x2xf32> to vector<2x8x1xf32>
    %3 = vector.shape_cast %0 : vector<2x8x2xf32> to vector<16x2xf32>
    %4 = vector.shape_cast %2 : vector<2x8x1xf32> to vector<16x1xf32>
    %c0_5 = arith.constant 0 : index
    %c0_6 = arith.constant 0 : index
    %5 = vector.load %arg4[%c0_5, %c0_6] : memref<2x32xf32, #tpu.memory_space<vmem>>, vector<2x32xf32>
    %cst = arith.constant dense<0.000000e+00> : vector<16x32xf32>
    %6 = tpu.matmul %3, %5, %cst {dimension_numbers = #tpu.dot_dimension_numbers<[1], [0], [0], [1], [0, 0, 1, 1], [], []>} : vector<16x2xf32>, vector<2x32xf32>, vector<16x32xf32> -> vector<16x32xf32>
    %c0_7 = arith.constant 0 : index
    %c0_8 = arith.constant 0 : index
    %7 = vector.load %arg5[%c0_7, %c0_8] : memref<1x32xf32, #tpu.memory_space<vmem>>, vector<1x32xf32>
    %8 = vector.broadcast %4 : vector<16x1xf32> to vector<16x32xf32>
    %9 = vector.broadcast %7 : vector<1x32xf32> to vector<16x32xf32>
    %10 = arith.mulf %8, %9 : vector<16x32xf32>
    %11 = arith.addf %6, %10 : vector<16x32xf32>
    %c0_9 = arith.constant 0 : index
    %c0_10 = arith.constant 0 : index
    %12 = vector.load %arg6[%c0_9, %c0_10] : memref<1x32xf32, #tpu.memory_space<vmem>>, vector<1x32xf32>
    %13 = vector.broadcast %12 : vector<1x32xf32> to vector<16x32xf32>
    %14 = arith.addf %11, %13 : vector<16x32xf32>
    %cst_11 = arith.constant 0.000000e+00 : f32
    %15 = vector.broadcast %cst_11 : f32 to vector<16x32xf32>
    %16 = arith.maximumf %14, %15 : vector<16x32xf32>
    %c0_12 = arith.constant 0 : index
    %c0_13 = arith.constant 0 : index
    %17 = vector.load %arg7[%c0_12, %c0_13] : memref<32x32xf32, #tpu.memory_space<vmem>>, vector<32x32xf32>
    %cst_14 = arith.constant dense<0.000000e+00> : vector<16x32xf32>
    %18 = tpu.matmul %16, %17, %cst_14 {dimension_numbers = #tpu.dot_dimension_numbers<[1], [0], [0], [1], [0, 0, 1, 1], [], []>} : vector<16x32xf32>, vector<32x32xf32>, vector<16x32xf32> -> vector<16x32xf32>
    %c0_15 = arith.constant 0 : index
    %c0_16 = arith.constant 0 : index
    %19 = vector.load %arg8[%c0_15, %c0_16] : memref<1x32xf32, #tpu.memory_space<vmem>>, vector<1x32xf32>
    %20 = vector.broadcast %19 : vector<1x32xf32> to vector<16x32xf32>
    %21 = arith.addf %18, %20 : vector<16x32xf32>
    %cst_17 = arith.constant 0.000000e+00 : f32
    %22 = vector.broadcast %cst_17 : f32 to vector<16x32xf32>
    %23 = arith.maximumf %21, %22 : vector<16x32xf32>
    %c0_18 = arith.constant 0 : index
    %c0_19 = arith.constant 0 : index
    %24 = vector.load %arg9[%c0_18, %c0_19] : memref<32x32xf32, #tpu.memory_space<vmem>>, vector<32x32xf32>
    %cst_20 = arith.constant dense<0.000000e+00> : vector<16x32xf32>
    %25 = tpu.matmul %23, %24, %cst_20 {dimension_numbers = #tpu.dot_dimension_numbers<[1], [0], [0], [1], [0, 0, 1, 1], [], []>} : vector<16x32xf32>, vector<32x32xf32>, vector<16x32xf32> -> vector<16x32xf32>
    %c0_21 = arith.constant 0 : index
    %c0_22 = arith.constant 0 : index
    %26 = vector.load %arg15[%c0_21, %c0_22] : memref<1x32xf32, #tpu.memory_space<vmem>>, vector<1x32xf32>
    %27 = vector.broadcast %26 : vector<1x32xf32> to vector<16x32xf32>
    %28 = arith.addf %25, %27 : vector<16x32xf32>
    %29 = vector.shape_cast %28 : vector<16x32xf32> to vector<2x8x32xf32>
    %c0_23 = arith.constant 0 : index
    %c0_24 = arith.constant 0 : index
    %30 = vector.load %arg10[%c0_23, %c0_24] : memref<32x32xf32, #tpu.memory_space<vmem>>, vector<32x32xf32>
    %cst_25 = arith.constant dense<0.000000e+00> : vector<16x32xf32>
    %31 = tpu.matmul %23, %30, %cst_25 {dimension_numbers = #tpu.dot_dimension_numbers<[1], [0], [0], [1], [0, 0, 1, 1], [], []>} : vector<16x32xf32>, vector<32x32xf32>, vector<16x32xf32> -> vector<16x32xf32>
    %c0_26 = arith.constant 0 : index
    %c0_27 = arith.constant 0 : index
    %32 = vector.load %arg16[%c0_26, %c0_27] : memref<1x32xf32, #tpu.memory_space<vmem>>, vector<1x32xf32>
    %33 = vector.broadcast %32 : vector<1x32xf32> to vector<16x32xf32>
    %34 = arith.addf %31, %33 : vector<16x32xf32>
    %35 = vector.shape_cast %34 : vector<16x32xf32> to vector<2x8x32xf32>
    %c0_28 = arith.constant 0 : index
    %c0_29 = arith.constant 0 : index
    %36 = vector.load %arg11[%c0_28, %c0_29] : memref<32x32xf32, #tpu.memory_space<vmem>>, vector<32x32xf32>
    %cst_30 = arith.constant dense<0.000000e+00> : vector<16x32xf32>
    %37 = tpu.matmul %23, %36, %cst_30 {dimension_numbers = #tpu.dot_dimension_numbers<[1], [0], [0], [1], [0, 0, 1, 1], [], []>} : vector<16x32xf32>, vector<32x32xf32>, vector<16x32xf32> -> vector<16x32xf32>
    %c0_31 = arith.constant 0 : index
    %c0_32 = arith.constant 0 : index
    %38 = vector.load %arg17[%c0_31, %c0_32] : memref<1x32xf32, #tpu.memory_space<vmem>>, vector<1x32xf32>
    %39 = vector.broadcast %38 : vector<1x32xf32> to vector<16x32xf32>
    %40 = arith.addf %37, %39 : vector<16x32xf32>
    %41 = vector.shape_cast %40 : vector<16x32xf32> to vector<2x8x32xf32>
    %c0_33 = arith.constant 0 : index
    %c0_34 = arith.constant 0 : index
    %42 = vector.load %arg3[%c0_33, %c0_34] : memref<2x1xi32, #tpu.memory_space<vmem>>, vector<2x1xi32>
    %43 = tpu.iota {dimensions = array<i32: 1>} : vector<2x8xi32>
    %44 = vector.broadcast %42 : vector<2x1xi32> to vector<2x8xi32>
    %45 = arith.cmpi slt, %43, %44 : vector<2x8xi32>
    %c0_35 = arith.constant 0 : index
    %c0_36 = arith.constant 0 : index
    %46 = vector.load %arg12[%c0_35, %c0_36] : memref<32x32xf32, #tpu.memory_space<vmem>>, vector<32x32xf32>
    %c0_37 = arith.constant 0 : index
    %c0_38 = arith.constant 0 : index
    %47 = vector.load %arg13[%c0_37, %c0_38] : memref<32x32xf32, #tpu.memory_space<vmem>>, vector<32x32xf32>
    %c0_39 = arith.constant 0 : index
    %c0_40 = arith.constant 0 : index
    %48 = vector.load %arg14[%c0_39, %c0_40] : memref<32x32xf32, #tpu.memory_space<vmem>>, vector<32x32xf32>
    %c0_41 = arith.constant 0 : index
    %c0_42 = arith.constant 0 : index
    %49 = vector.load %arg18[%c0_41, %c0_42] : memref<1x32xf32, #tpu.memory_space<vmem>>, vector<1x32xf32>
    %c0_43 = arith.constant 0 : index
    %c0_44 = arith.constant 0 : index
    %50 = vector.load %arg2[%c0_43, %c0_44] : memref<2x32xf32, #tpu.memory_space<vmem>>, vector<2x32xf32>
    %cst_45 = arith.constant dense<0.000000e+00> : vector<2x32xf32>
    %51 = tpu.matmul %50, %46, %cst_45 {dimension_numbers = #tpu.dot_dimension_numbers<[1], [0], [0], [1], [0, 0, 1, 1], [], []>} : vector<2x32xf32>, vector<32x32xf32>, vector<2x32xf32> -> vector<2x32xf32>
    %cst_46 = arith.constant dense<0.000000e+00> : vector<2x32xf32>
    %52 = tpu.matmul %50, %47, %cst_46 {dimension_numbers = #tpu.dot_dimension_numbers<[1], [0], [0], [1], [0, 0, 1, 1], [], []>} : vector<2x32xf32>, vector<32x32xf32>, vector<2x32xf32> -> vector<2x32xf32>
    %cst_47 = arith.constant dense<0.000000e+00> : vector<2x32xf32>
    %53 = tpu.matmul %50, %48, %cst_47 {dimension_numbers = #tpu.dot_dimension_numbers<[1], [0], [0], [1], [0, 0, 1, 1], [], []>} : vector<2x32xf32>, vector<32x32xf32>, vector<2x32xf32> -> vector<2x32xf32>
    %54 = vector.broadcast %49 : vector<1x32xf32> to vector<2x32xf32>
    %55 = arith.addf %53, %54 : vector<2x32xf32>
    %56 = vector.extract_strided_slice %29 {offsets = [0, 0, 0], sizes = [2, 1, 32], strides = [1, 1, 1]} : vector<2x8x32xf32> to vector<2x1x32xf32>
    %57 = vector.shape_cast %56 : vector<2x1x32xf32> to vector<2x32xf32>
    %58 = arith.addf %57, %51 : vector<2x32xf32>
    %59 = arith.negf %58 : vector<2x32xf32>
    %60 = math.exp %59 : vector<2x32xf32>
    %cst_48 = arith.constant 1.000000e+00 : f32
    %61 = vector.broadcast %cst_48 : f32 to vector<2x32xf32>
    %62 = arith.addf %61, %60 : vector<2x32xf32>
    %63 = arith.divf %61, %62 : vector<2x32xf32>
    %64 = vector.extract_strided_slice %35 {offsets = [0, 0, 0], sizes = [2, 1, 32], strides = [1, 1, 1]} : vector<2x8x32xf32> to vector<2x1x32xf32>
    %65 = vector.shape_cast %64 : vector<2x1x32xf32> to vector<2x32xf32>
    %66 = arith.addf %65, %52 : vector<2x32xf32>
    %67 = arith.negf %66 : vector<2x32xf32>
    %68 = math.exp %67 : vector<2x32xf32>
    %cst_49 = arith.constant 1.000000e+00 : f32
    %69 = vector.broadcast %cst_49 : f32 to vector<2x32xf32>
    %70 = arith.addf %69, %68 : vector<2x32xf32>
    %71 = arith.divf %69, %70 : vector<2x32xf32>
    %72 = vector.extract_strided_slice %41 {offsets = [0, 0, 0], sizes = [2, 1, 32], strides = [1, 1, 1]} : vector<2x8x32xf32> to vector<2x1x32xf32>
    %73 = vector.shape_cast %72 : vector<2x1x32xf32> to vector<2x32xf32>
    %74 = arith.mulf %63, %55 : vector<2x32xf32>
    %75 = arith.addf %73, %74 : vector<2x32xf32>
    %76 = math.tanh %75 : vector<2x32xf32>
    %cst_50 = arith.constant 1.000000e+00 : f32
    %77 = vector.broadcast %cst_50 : f32 to vector<2x32xf32>
    %78 = arith.subf %77, %71 : vector<2x32xf32>
    %79 = arith.mulf %78, %76 : vector<2x32xf32>
    %80 = arith.mulf %71, %50 : vector<2x32xf32>
    %81 = arith.addf %79, %80 : vector<2x32xf32>
    %82 = vector.extract_strided_slice %45 {offsets = [0, 0], sizes = [2, 1], strides = [1, 1]} : vector<2x8xi1> to vector<2x1xi1>
    %83 = vector.shape_cast %82 : vector<2x1xi1> to vector<2x1xi1>
    %84 = vector.broadcast %83 : vector<2x1xi1> to vector<2x32xi1>
    %85 = arith.select %84, %81, %50 : vector<2x32xi1>, vector<2x32xf32>
    %cst_51 = arith.constant dense<0.000000e+00> : vector<2x32xf32>
    %86 = tpu.matmul %85, %46, %cst_51 {dimension_numbers = #tpu.dot_dimension_numbers<[1], [0], [0], [1], [0, 0, 1, 1], [], []>} : vector<2x32xf32>, vector<32x32xf32>, vector<2x32xf32> -> vector<2x32xf32>
    %cst_52 = arith.constant dense<0.000000e+00> : vector<2x32xf32>
    %87 = tpu.matmul %85, %47, %cst_52 {dimension_numbers = #tpu.dot_dimension_numbers<[1], [0], [0], [1], [0, 0, 1, 1], [], []>} : vector<2x32xf32>, vector<32x32xf32>, vector<2x32xf32> -> vector<2x32xf32>
    %cst_53 = arith.constant dense<0.000000e+00> : vector<2x32xf32>
    %88 = tpu.matmul %85, %48, %cst_53 {dimension_numbers = #tpu.dot_dimension_numbers<[1], [0], [0], [1], [0, 0, 1, 1], [], []>} : vector<2x32xf32>, vector<32x32xf32>, vector<2x32xf32> -> vector<2x32xf32>
    %89 = vector.broadcast %49 : vector<1x32xf32> to vector<2x32xf32>
    %90 = arith.addf %88, %89 : vector<2x32xf32>
    %91 = vector.extract_strided_slice %29 {offsets = [0, 1, 0], sizes = [2, 1, 32], strides = [1, 1, 1]} : vector<2x8x32xf32> to vector<2x1x32xf32>
    %92 = vector.shape_cast %91 : vector<2x1x32xf32> to vector<2x32xf32>
    %93 = arith.addf %92, %86 : vector<2x32xf32>
    %94 = arith.negf %93 : vector<2x32xf32>
    %95 = math.exp %94 : vector<2x32xf32>
    %cst_54 = arith.constant 1.000000e+00 : f32
    %96 = vector.broadcast %cst_54 : f32 to vector<2x32xf32>
    %97 = arith.addf %96, %95 : vector<2x32xf32>
    %98 = arith.divf %96, %97 : vector<2x32xf32>
    %99 = vector.extract_strided_slice %35 {offsets = [0, 1, 0], sizes = [2, 1, 32], strides = [1, 1, 1]} : vector<2x8x32xf32> to vector<2x1x32xf32>
    %100 = vector.shape_cast %99 : vector<2x1x32xf32> to vector<2x32xf32>
    %101 = arith.addf %100, %87 : vector<2x32xf32>
    %102 = arith.negf %101 : vector<2x32xf32>
    %103 = math.exp %102 : vector<2x32xf32>
    %cst_55 = arith.constant 1.000000e+00 : f32
    %104 = vector.broadcast %cst_55 : f32 to vector<2x32xf32>
    %105 = arith.addf %104, %103 : vector<2x32xf32>
    %106 = arith.divf %104, %105 : vector<2x32xf32>
    %107 = vector.extract_strided_slice %41 {offsets = [0, 1, 0], sizes = [2, 1, 32], strides = [1, 1, 1]} : vector<2x8x32xf32> to vector<2x1x32xf32>
    %108 = vector.shape_cast %107 : vector<2x1x32xf32> to vector<2x32xf32>
    %109 = arith.mulf %98, %90 : vector<2x32xf32>
    %110 = arith.addf %108, %109 : vector<2x32xf32>
    %111 = math.tanh %110 : vector<2x32xf32>
    %cst_56 = arith.constant 1.000000e+00 : f32
    %112 = vector.broadcast %cst_56 : f32 to vector<2x32xf32>
    %113 = arith.subf %112, %106 : vector<2x32xf32>
    %114 = arith.mulf %113, %111 : vector<2x32xf32>
    %115 = arith.mulf %106, %85 : vector<2x32xf32>
    %116 = arith.addf %114, %115 : vector<2x32xf32>
    %117 = vector.extract_strided_slice %45 {offsets = [0, 1], sizes = [2, 1], strides = [1, 1]} : vector<2x8xi1> to vector<2x1xi1>
    %118 = vector.shape_cast %117 : vector<2x1xi1> to vector<2x1xi1>
    %119 = vector.broadcast %118 : vector<2x1xi1> to vector<2x32xi1>
    %120 = arith.select %119, %116, %85 : vector<2x32xi1>, vector<2x32xf32>
    %cst_57 = arith.constant dense<0.000000e+00> : vector<2x32xf32>
    %121 = tpu.matmul %120, %46, %cst_57 {dimension_numbers = #tpu.dot_dimension_numbers<[1], [0], [0], [1], [0, 0, 1, 1], [], []>} : vector<2x32xf32>, vector<32x32xf32>, vector<2x32xf32> -> vector<2x32xf32>
    %cst_58 = arith.constant dense<0.000000e+00> : vector<2x32xf32>
    %122 = tpu.matmul %120, %47, %cst_58 {dimension_numbers = #tpu.dot_dimension_numbers<[1], [0], [0], [1], [0, 0, 1, 1], [], []>} : vector<2x32xf32>, vector<32x32xf32>, vector<2x32xf32> -> vector<2x32xf32>
    %cst_59 = arith.constant dense<0.000000e+00> : vector<2x32xf32>
    %123 = tpu.matmul %120, %48, %cst_59 {dimension_numbers = #tpu.dot_dimension_numbers<[1], [0], [0], [1], [0, 0, 1, 1], [], []>} : vector<2x32xf32>, vector<32x32xf32>, vector<2x32xf32> -> vector<2x32xf32>
    %124 = vector.broadcast %49 : vector<1x32xf32> to vector<2x32xf32>
    %125 = arith.addf %123, %124 : vector<2x32xf32>
    %126 = vector.extract_strided_slice %29 {offsets = [0, 2, 0], sizes = [2, 1, 32], strides = [1, 1, 1]} : vector<2x8x32xf32> to vector<2x1x32xf32>
    %127 = vector.shape_cast %126 : vector<2x1x32xf32> to vector<2x32xf32>
    %128 = arith.addf %127, %121 : vector<2x32xf32>
    %129 = arith.negf %128 : vector<2x32xf32>
    %130 = math.exp %129 : vector<2x32xf32>
    %cst_60 = arith.constant 1.000000e+00 : f32
    %131 = vector.broadcast %cst_60 : f32 to vector<2x32xf32>
    %132 = arith.addf %131, %130 : vector<2x32xf32>
    %133 = arith.divf %131, %132 : vector<2x32xf32>
    %134 = vector.extract_strided_slice %35 {offsets = [0, 2, 0], sizes = [2, 1, 32], strides = [1, 1, 1]} : vector<2x8x32xf32> to vector<2x1x32xf32>
    %135 = vector.shape_cast %134 : vector<2x1x32xf32> to vector<2x32xf32>
    %136 = arith.addf %135, %122 : vector<2x32xf32>
    %137 = arith.negf %136 : vector<2x32xf32>
    %138 = math.exp %137 : vector<2x32xf32>
    %cst_61 = arith.constant 1.000000e+00 : f32
    %139 = vector.broadcast %cst_61 : f32 to vector<2x32xf32>
    %140 = arith.addf %139, %138 : vector<2x32xf32>
    %141 = arith.divf %139, %140 : vector<2x32xf32>
    %142 = vector.extract_strided_slice %41 {offsets = [0, 2, 0], sizes = [2, 1, 32], strides = [1, 1, 1]} : vector<2x8x32xf32> to vector<2x1x32xf32>
    %143 = vector.shape_cast %142 : vector<2x1x32xf32> to vector<2x32xf32>
    %144 = arith.mulf %133, %125 : vector<2x32xf32>
    %145 = arith.addf %143, %144 : vector<2x32xf32>
    %146 = math.tanh %145 : vector<2x32xf32>
    %cst_62 = arith.constant 1.000000e+00 : f32
    %147 = vector.broadcast %cst_62 : f32 to vector<2x32xf32>
    %148 = arith.subf %147, %141 : vector<2x32xf32>
    %149 = arith.mulf %148, %146 : vector<2x32xf32>
    %150 = arith.mulf %141, %120 : vector<2x32xf32>
    %151 = arith.addf %149, %150 : vector<2x32xf32>
    %152 = vector.extract_strided_slice %45 {offsets = [0, 2], sizes = [2, 1], strides = [1, 1]} : vector<2x8xi1> to vector<2x1xi1>
    %153 = vector.shape_cast %152 : vector<2x1xi1> to vector<2x1xi1>
    %154 = vector.broadcast %153 : vector<2x1xi1> to vector<2x32xi1>
    %155 = arith.select %154, %151, %120 : vector<2x32xi1>, vector<2x32xf32>
    %cst_63 = arith.constant dense<0.000000e+00> : vector<2x32xf32>
    %156 = tpu.matmul %155, %46, %cst_63 {dimension_numbers = #tpu.dot_dimension_numbers<[1], [0], [0], [1], [0, 0, 1, 1], [], []>} : vector<2x32xf32>, vector<32x32xf32>, vector<2x32xf32> -> vector<2x32xf32>
    %cst_64 = arith.constant dense<0.000000e+00> : vector<2x32xf32>
    %157 = tpu.matmul %155, %47, %cst_64 {dimension_numbers = #tpu.dot_dimension_numbers<[1], [0], [0], [1], [0, 0, 1, 1], [], []>} : vector<2x32xf32>, vector<32x32xf32>, vector<2x32xf32> -> vector<2x32xf32>
    %cst_65 = arith.constant dense<0.000000e+00> : vector<2x32xf32>
    %158 = tpu.matmul %155, %48, %cst_65 {dimension_numbers = #tpu.dot_dimension_numbers<[1], [0], [0], [1], [0, 0, 1, 1], [], []>} : vector<2x32xf32>, vector<32x32xf32>, vector<2x32xf32> -> vector<2x32xf32>
    %159 = vector.broadcast %49 : vector<1x32xf32> to vector<2x32xf32>
    %160 = arith.addf %158, %159 : vector<2x32xf32>
    %161 = vector.extract_strided_slice %29 {offsets = [0, 3, 0], sizes = [2, 1, 32], strides = [1, 1, 1]} : vector<2x8x32xf32> to vector<2x1x32xf32>
    %162 = vector.shape_cast %161 : vector<2x1x32xf32> to vector<2x32xf32>
    %163 = arith.addf %162, %156 : vector<2x32xf32>
    %164 = arith.negf %163 : vector<2x32xf32>
    %165 = math.exp %164 : vector<2x32xf32>
    %cst_66 = arith.constant 1.000000e+00 : f32
    %166 = vector.broadcast %cst_66 : f32 to vector<2x32xf32>
    %167 = arith.addf %166, %165 : vector<2x32xf32>
    %168 = arith.divf %166, %167 : vector<2x32xf32>
    %169 = vector.extract_strided_slice %35 {offsets = [0, 3, 0], sizes = [2, 1, 32], strides = [1, 1, 1]} : vector<2x8x32xf32> to vector<2x1x32xf32>
    %170 = vector.shape_cast %169 : vector<2x1x32xf32> to vector<2x32xf32>
    %171 = arith.addf %170, %157 : vector<2x32xf32>
    %172 = arith.negf %171 : vector<2x32xf32>
    %173 = math.exp %172 : vector<2x32xf32>
    %cst_67 = arith.constant 1.000000e+00 : f32
    %174 = vector.broadcast %cst_67 : f32 to vector<2x32xf32>
    %175 = arith.addf %174, %173 : vector<2x32xf32>
    %176 = arith.divf %174, %175 : vector<2x32xf32>
    %177 = vector.extract_strided_slice %41 {offsets = [0, 3, 0], sizes = [2, 1, 32], strides = [1, 1, 1]} : vector<2x8x32xf32> to vector<2x1x32xf32>
    %178 = vector.shape_cast %177 : vector<2x1x32xf32> to vector<2x32xf32>
    %179 = arith.mulf %168, %160 : vector<2x32xf32>
    %180 = arith.addf %178, %179 : vector<2x32xf32>
    %181 = math.tanh %180 : vector<2x32xf32>
    %cst_68 = arith.constant 1.000000e+00 : f32
    %182 = vector.broadcast %cst_68 : f32 to vector<2x32xf32>
    %183 = arith.subf %182, %176 : vector<2x32xf32>
    %184 = arith.mulf %183, %181 : vector<2x32xf32>
    %185 = arith.mulf %176, %155 : vector<2x32xf32>
    %186 = arith.addf %184, %185 : vector<2x32xf32>
    %187 = vector.extract_strided_slice %45 {offsets = [0, 3], sizes = [2, 1], strides = [1, 1]} : vector<2x8xi1> to vector<2x1xi1>
    %188 = vector.shape_cast %187 : vector<2x1xi1> to vector<2x1xi1>
    %189 = vector.broadcast %188 : vector<2x1xi1> to vector<2x32xi1>
    %190 = arith.select %189, %186, %155 : vector<2x32xi1>, vector<2x32xf32>
    %cst_69 = arith.constant dense<0.000000e+00> : vector<2x32xf32>
    %191 = tpu.matmul %190, %46, %cst_69 {dimension_numbers = #tpu.dot_dimension_numbers<[1], [0], [0], [1], [0, 0, 1, 1], [], []>} : vector<2x32xf32>, vector<32x32xf32>, vector<2x32xf32> -> vector<2x32xf32>
    %cst_70 = arith.constant dense<0.000000e+00> : vector<2x32xf32>
    %192 = tpu.matmul %190, %47, %cst_70 {dimension_numbers = #tpu.dot_dimension_numbers<[1], [0], [0], [1], [0, 0, 1, 1], [], []>} : vector<2x32xf32>, vector<32x32xf32>, vector<2x32xf32> -> vector<2x32xf32>
    %cst_71 = arith.constant dense<0.000000e+00> : vector<2x32xf32>
    %193 = tpu.matmul %190, %48, %cst_71 {dimension_numbers = #tpu.dot_dimension_numbers<[1], [0], [0], [1], [0, 0, 1, 1], [], []>} : vector<2x32xf32>, vector<32x32xf32>, vector<2x32xf32> -> vector<2x32xf32>
    %194 = vector.broadcast %49 : vector<1x32xf32> to vector<2x32xf32>
    %195 = arith.addf %193, %194 : vector<2x32xf32>
    %196 = vector.extract_strided_slice %29 {offsets = [0, 4, 0], sizes = [2, 1, 32], strides = [1, 1, 1]} : vector<2x8x32xf32> to vector<2x1x32xf32>
    %197 = vector.shape_cast %196 : vector<2x1x32xf32> to vector<2x32xf32>
    %198 = arith.addf %197, %191 : vector<2x32xf32>
    %199 = arith.negf %198 : vector<2x32xf32>
    %200 = math.exp %199 : vector<2x32xf32>
    %cst_72 = arith.constant 1.000000e+00 : f32
    %201 = vector.broadcast %cst_72 : f32 to vector<2x32xf32>
    %202 = arith.addf %201, %200 : vector<2x32xf32>
    %203 = arith.divf %201, %202 : vector<2x32xf32>
    %204 = vector.extract_strided_slice %35 {offsets = [0, 4, 0], sizes = [2, 1, 32], strides = [1, 1, 1]} : vector<2x8x32xf32> to vector<2x1x32xf32>
    %205 = vector.shape_cast %204 : vector<2x1x32xf32> to vector<2x32xf32>
    %206 = arith.addf %205, %192 : vector<2x32xf32>
    %207 = arith.negf %206 : vector<2x32xf32>
    %208 = math.exp %207 : vector<2x32xf32>
    %cst_73 = arith.constant 1.000000e+00 : f32
    %209 = vector.broadcast %cst_73 : f32 to vector<2x32xf32>
    %210 = arith.addf %209, %208 : vector<2x32xf32>
    %211 = arith.divf %209, %210 : vector<2x32xf32>
    %212 = vector.extract_strided_slice %41 {offsets = [0, 4, 0], sizes = [2, 1, 32], strides = [1, 1, 1]} : vector<2x8x32xf32> to vector<2x1x32xf32>
    %213 = vector.shape_cast %212 : vector<2x1x32xf32> to vector<2x32xf32>
    %214 = arith.mulf %203, %195 : vector<2x32xf32>
    %215 = arith.addf %213, %214 : vector<2x32xf32>
    %216 = math.tanh %215 : vector<2x32xf32>
    %cst_74 = arith.constant 1.000000e+00 : f32
    %217 = vector.broadcast %cst_74 : f32 to vector<2x32xf32>
    %218 = arith.subf %217, %211 : vector<2x32xf32>
    %219 = arith.mulf %218, %216 : vector<2x32xf32>
    %220 = arith.mulf %211, %190 : vector<2x32xf32>
    %221 = arith.addf %219, %220 : vector<2x32xf32>
    %222 = vector.extract_strided_slice %45 {offsets = [0, 4], sizes = [2, 1], strides = [1, 1]} : vector<2x8xi1> to vector<2x1xi1>
    %223 = vector.shape_cast %222 : vector<2x1xi1> to vector<2x1xi1>
    %224 = vector.broadcast %223 : vector<2x1xi1> to vector<2x32xi1>
    %225 = arith.select %224, %221, %190 : vector<2x32xi1>, vector<2x32xf32>
    %cst_75 = arith.constant dense<0.000000e+00> : vector<2x32xf32>
    %226 = tpu.matmul %225, %46, %cst_75 {dimension_numbers = #tpu.dot_dimension_numbers<[1], [0], [0], [1], [0, 0, 1, 1], [], []>} : vector<2x32xf32>, vector<32x32xf32>, vector<2x32xf32> -> vector<2x32xf32>
    %cst_76 = arith.constant dense<0.000000e+00> : vector<2x32xf32>
    %227 = tpu.matmul %225, %47, %cst_76 {dimension_numbers = #tpu.dot_dimension_numbers<[1], [0], [0], [1], [0, 0, 1, 1], [], []>} : vector<2x32xf32>, vector<32x32xf32>, vector<2x32xf32> -> vector<2x32xf32>
    %cst_77 = arith.constant dense<0.000000e+00> : vector<2x32xf32>
    %228 = tpu.matmul %225, %48, %cst_77 {dimension_numbers = #tpu.dot_dimension_numbers<[1], [0], [0], [1], [0, 0, 1, 1], [], []>} : vector<2x32xf32>, vector<32x32xf32>, vector<2x32xf32> -> vector<2x32xf32>
    %229 = vector.broadcast %49 : vector<1x32xf32> to vector<2x32xf32>
    %230 = arith.addf %228, %229 : vector<2x32xf32>
    %231 = vector.extract_strided_slice %29 {offsets = [0, 5, 0], sizes = [2, 1, 32], strides = [1, 1, 1]} : vector<2x8x32xf32> to vector<2x1x32xf32>
    %232 = vector.shape_cast %231 : vector<2x1x32xf32> to vector<2x32xf32>
    %233 = arith.addf %232, %226 : vector<2x32xf32>
    %234 = arith.negf %233 : vector<2x32xf32>
    %235 = math.exp %234 : vector<2x32xf32>
    %cst_78 = arith.constant 1.000000e+00 : f32
    %236 = vector.broadcast %cst_78 : f32 to vector<2x32xf32>
    %237 = arith.addf %236, %235 : vector<2x32xf32>
    %238 = arith.divf %236, %237 : vector<2x32xf32>
    %239 = vector.extract_strided_slice %35 {offsets = [0, 5, 0], sizes = [2, 1, 32], strides = [1, 1, 1]} : vector<2x8x32xf32> to vector<2x1x32xf32>
    %240 = vector.shape_cast %239 : vector<2x1x32xf32> to vector<2x32xf32>
    %241 = arith.addf %240, %227 : vector<2x32xf32>
    %242 = arith.negf %241 : vector<2x32xf32>
    %243 = math.exp %242 : vector<2x32xf32>
    %cst_79 = arith.constant 1.000000e+00 : f32
    %244 = vector.broadcast %cst_79 : f32 to vector<2x32xf32>
    %245 = arith.addf %244, %243 : vector<2x32xf32>
    %246 = arith.divf %244, %245 : vector<2x32xf32>
    %247 = vector.extract_strided_slice %41 {offsets = [0, 5, 0], sizes = [2, 1, 32], strides = [1, 1, 1]} : vector<2x8x32xf32> to vector<2x1x32xf32>
    %248 = vector.shape_cast %247 : vector<2x1x32xf32> to vector<2x32xf32>
    %249 = arith.mulf %238, %230 : vector<2x32xf32>
    %250 = arith.addf %248, %249 : vector<2x32xf32>
    %251 = math.tanh %250 : vector<2x32xf32>
    %cst_80 = arith.constant 1.000000e+00 : f32
    %252 = vector.broadcast %cst_80 : f32 to vector<2x32xf32>
    %253 = arith.subf %252, %246 : vector<2x32xf32>
    %254 = arith.mulf %253, %251 : vector<2x32xf32>
    %255 = arith.mulf %246, %225 : vector<2x32xf32>
    %256 = arith.addf %254, %255 : vector<2x32xf32>
    %257 = vector.extract_strided_slice %45 {offsets = [0, 5], sizes = [2, 1], strides = [1, 1]} : vector<2x8xi1> to vector<2x1xi1>
    %258 = vector.shape_cast %257 : vector<2x1xi1> to vector<2x1xi1>
    %259 = vector.broadcast %258 : vector<2x1xi1> to vector<2x32xi1>
    %260 = arith.select %259, %256, %225 : vector<2x32xi1>, vector<2x32xf32>
    %cst_81 = arith.constant dense<0.000000e+00> : vector<2x32xf32>
    %261 = tpu.matmul %260, %46, %cst_81 {dimension_numbers = #tpu.dot_dimension_numbers<[1], [0], [0], [1], [0, 0, 1, 1], [], []>} : vector<2x32xf32>, vector<32x32xf32>, vector<2x32xf32> -> vector<2x32xf32>
    %cst_82 = arith.constant dense<0.000000e+00> : vector<2x32xf32>
    %262 = tpu.matmul %260, %47, %cst_82 {dimension_numbers = #tpu.dot_dimension_numbers<[1], [0], [0], [1], [0, 0, 1, 1], [], []>} : vector<2x32xf32>, vector<32x32xf32>, vector<2x32xf32> -> vector<2x32xf32>
    %cst_83 = arith.constant dense<0.000000e+00> : vector<2x32xf32>
    %263 = tpu.matmul %260, %48, %cst_83 {dimension_numbers = #tpu.dot_dimension_numbers<[1], [0], [0], [1], [0, 0, 1, 1], [], []>} : vector<2x32xf32>, vector<32x32xf32>, vector<2x32xf32> -> vector<2x32xf32>
    %264 = vector.broadcast %49 : vector<1x32xf32> to vector<2x32xf32>
    %265 = arith.addf %263, %264 : vector<2x32xf32>
    %266 = vector.extract_strided_slice %29 {offsets = [0, 6, 0], sizes = [2, 1, 32], strides = [1, 1, 1]} : vector<2x8x32xf32> to vector<2x1x32xf32>
    %267 = vector.shape_cast %266 : vector<2x1x32xf32> to vector<2x32xf32>
    %268 = arith.addf %267, %261 : vector<2x32xf32>
    %269 = arith.negf %268 : vector<2x32xf32>
    %270 = math.exp %269 : vector<2x32xf32>
    %cst_84 = arith.constant 1.000000e+00 : f32
    %271 = vector.broadcast %cst_84 : f32 to vector<2x32xf32>
    %272 = arith.addf %271, %270 : vector<2x32xf32>
    %273 = arith.divf %271, %272 : vector<2x32xf32>
    %274 = vector.extract_strided_slice %35 {offsets = [0, 6, 0], sizes = [2, 1, 32], strides = [1, 1, 1]} : vector<2x8x32xf32> to vector<2x1x32xf32>
    %275 = vector.shape_cast %274 : vector<2x1x32xf32> to vector<2x32xf32>
    %276 = arith.addf %275, %262 : vector<2x32xf32>
    %277 = arith.negf %276 : vector<2x32xf32>
    %278 = math.exp %277 : vector<2x32xf32>
    %cst_85 = arith.constant 1.000000e+00 : f32
    %279 = vector.broadcast %cst_85 : f32 to vector<2x32xf32>
    %280 = arith.addf %279, %278 : vector<2x32xf32>
    %281 = arith.divf %279, %280 : vector<2x32xf32>
    %282 = vector.extract_strided_slice %41 {offsets = [0, 6, 0], sizes = [2, 1, 32], strides = [1, 1, 1]} : vector<2x8x32xf32> to vector<2x1x32xf32>
    %283 = vector.shape_cast %282 : vector<2x1x32xf32> to vector<2x32xf32>
    %284 = arith.mulf %273, %265 : vector<2x32xf32>
    %285 = arith.addf %283, %284 : vector<2x32xf32>
    %286 = math.tanh %285 : vector<2x32xf32>
    %cst_86 = arith.constant 1.000000e+00 : f32
    %287 = vector.broadcast %cst_86 : f32 to vector<2x32xf32>
    %288 = arith.subf %287, %281 : vector<2x32xf32>
    %289 = arith.mulf %288, %286 : vector<2x32xf32>
    %290 = arith.mulf %281, %260 : vector<2x32xf32>
    %291 = arith.addf %289, %290 : vector<2x32xf32>
    %292 = vector.extract_strided_slice %45 {offsets = [0, 6], sizes = [2, 1], strides = [1, 1]} : vector<2x8xi1> to vector<2x1xi1>
    %293 = vector.shape_cast %292 : vector<2x1xi1> to vector<2x1xi1>
    %294 = vector.broadcast %293 : vector<2x1xi1> to vector<2x32xi1>
    %295 = arith.select %294, %291, %260 : vector<2x32xi1>, vector<2x32xf32>
    %cst_87 = arith.constant dense<0.000000e+00> : vector<2x32xf32>
    %296 = tpu.matmul %295, %46, %cst_87 {dimension_numbers = #tpu.dot_dimension_numbers<[1], [0], [0], [1], [0, 0, 1, 1], [], []>} : vector<2x32xf32>, vector<32x32xf32>, vector<2x32xf32> -> vector<2x32xf32>
    %cst_88 = arith.constant dense<0.000000e+00> : vector<2x32xf32>
    %297 = tpu.matmul %295, %47, %cst_88 {dimension_numbers = #tpu.dot_dimension_numbers<[1], [0], [0], [1], [0, 0, 1, 1], [], []>} : vector<2x32xf32>, vector<32x32xf32>, vector<2x32xf32> -> vector<2x32xf32>
    %cst_89 = arith.constant dense<0.000000e+00> : vector<2x32xf32>
    %298 = tpu.matmul %295, %48, %cst_89 {dimension_numbers = #tpu.dot_dimension_numbers<[1], [0], [0], [1], [0, 0, 1, 1], [], []>} : vector<2x32xf32>, vector<32x32xf32>, vector<2x32xf32> -> vector<2x32xf32>
    %299 = vector.broadcast %49 : vector<1x32xf32> to vector<2x32xf32>
    %300 = arith.addf %298, %299 : vector<2x32xf32>
    %301 = vector.extract_strided_slice %29 {offsets = [0, 7, 0], sizes = [2, 1, 32], strides = [1, 1, 1]} : vector<2x8x32xf32> to vector<2x1x32xf32>
    %302 = vector.shape_cast %301 : vector<2x1x32xf32> to vector<2x32xf32>
    %303 = arith.addf %302, %296 : vector<2x32xf32>
    %304 = arith.negf %303 : vector<2x32xf32>
    %305 = math.exp %304 : vector<2x32xf32>
    %cst_90 = arith.constant 1.000000e+00 : f32
    %306 = vector.broadcast %cst_90 : f32 to vector<2x32xf32>
    %307 = arith.addf %306, %305 : vector<2x32xf32>
    %308 = arith.divf %306, %307 : vector<2x32xf32>
    %309 = vector.extract_strided_slice %35 {offsets = [0, 7, 0], sizes = [2, 1, 32], strides = [1, 1, 1]} : vector<2x8x32xf32> to vector<2x1x32xf32>
    %310 = vector.shape_cast %309 : vector<2x1x32xf32> to vector<2x32xf32>
    %311 = arith.addf %310, %297 : vector<2x32xf32>
    %312 = arith.negf %311 : vector<2x32xf32>
    %313 = math.exp %312 : vector<2x32xf32>
    %cst_91 = arith.constant 1.000000e+00 : f32
    %314 = vector.broadcast %cst_91 : f32 to vector<2x32xf32>
    %315 = arith.addf %314, %313 : vector<2x32xf32>
    %316 = arith.divf %314, %315 : vector<2x32xf32>
    %317 = vector.extract_strided_slice %41 {offsets = [0, 7, 0], sizes = [2, 1, 32], strides = [1, 1, 1]} : vector<2x8x32xf32> to vector<2x1x32xf32>
    %318 = vector.shape_cast %317 : vector<2x1x32xf32> to vector<2x32xf32>
    %319 = arith.mulf %308, %300 : vector<2x32xf32>
    %320 = arith.addf %318, %319 : vector<2x32xf32>
    %321 = math.tanh %320 : vector<2x32xf32>
    %cst_92 = arith.constant 1.000000e+00 : f32
    %322 = vector.broadcast %cst_92 : f32 to vector<2x32xf32>
    %323 = arith.subf %322, %316 : vector<2x32xf32>
    %324 = arith.mulf %323, %321 : vector<2x32xf32>
    %325 = arith.mulf %316, %295 : vector<2x32xf32>
    %326 = arith.addf %324, %325 : vector<2x32xf32>
    %327 = vector.extract_strided_slice %45 {offsets = [0, 7], sizes = [2, 1], strides = [1, 1]} : vector<2x8xi1> to vector<2x1xi1>
    %328 = vector.shape_cast %327 : vector<2x1xi1> to vector<2x1xi1>
    %329 = vector.broadcast %328 : vector<2x1xi1> to vector<2x32xi1>
    %330 = arith.select %329, %326, %295 : vector<2x32xi1>, vector<2x32xf32>
    %c0_93 = arith.constant 0 : index
    %c0_94 = arith.constant 0 : index
    %331 = vector.load %arg22[%c0_93, %c0_94] : memref<2x32xf32, #tpu.memory_space<vmem>>, vector<2x32xf32>
    tpu.vector_store %arg22[%c0_93, %c0_94], %330 {strides = array<i32>} : memref<2x32xf32, #tpu.memory_space<vmem>>, vector<2x32xf32>,
    %c0_95 = arith.constant 0 : index
    %c0_96 = arith.constant 0 : index
    %332 = vector.load %arg19[%c0_95, %c0_96] : memref<32x32xf32, #tpu.memory_space<vmem>>, vector<32x32xf32>
    %cst_97 = arith.constant dense<0.000000e+00> : vector<2x32xf32>
    %333 = tpu.matmul %330, %332, %cst_97 {dimension_numbers = #tpu.dot_dimension_numbers<[1], [0], [0], [1], [0, 0, 1, 1], [], []>} : vector<2x32xf32>, vector<32x32xf32>, vector<2x32xf32> -> vector<2x32xf32>
    %c0_98 = arith.constant 0 : index
    %c0_99 = arith.constant 0 : index
    %334 = vector.load %arg20[%c0_98, %c0_99] : memref<1x32xf32, #tpu.memory_space<vmem>>, vector<1x32xf32>
    %335 = vector.broadcast %334 : vector<1x32xf32> to vector<2x32xf32>
    %336 = arith.addf %333, %335 : vector<2x32xf32>
    %cst_100 = arith.constant 0.000000e+00 : f32
    %337 = vector.broadcast %cst_100 : f32 to vector<2x32xf32>
    %338 = arith.maximumf %336, %337 : vector<2x32xf32>
    %c0_101 = arith.constant 0 : index
    %c0_102 = arith.constant 0 : index
    %339 = vector.load %arg21[%c0_101, %c0_102] : memref<2x32xf32, #tpu.memory_space<vmem>>, vector<2x32xf32>
    tpu.vector_store %arg21[%c0_101, %c0_102], %338 {strides = array<i32>} : memref<2x32xf32, #tpu.memory_space<vmem>>, vector<2x32xf32>,
    return
  }
}

</mosaic_0001>

<llo_original>
// kernel: lstm_pretext_forward.1
$region0: #{lstm_pretext_forward.1}
  #allocation0 [shape = 'u32[]', space=smem, size = 0x4, offset = 0x4, fixed_abs, tag = 'smem constant byte address 0x4 - core index']
  #allocation1 [shape = 'u32[144,128]{1,0:T(1,128)}', space=vmem, size = 0x12000, scoped, tag = 'internal scratch']
  %s0 = inlined_call_operand.vmem [shape: f32[2,8,2], index: 0, kind: input, shape index: {}]
  %s1 = inlined_call_operand.vmem [shape: f32[2,8,2], index: 1, kind: input, shape index: {}]
  %s2 = inlined_call_operand.vmem [shape: f32[2,32], index: 2, kind: input, shape index: {}]
  %s3 = inlined_call_operand.vmem [shape: s32[2,1], index: 3, kind: input, shape index: {}]
  %s4 = inlined_call_operand.vmem [shape: f32[2,32], index: 4, kind: input, shape index: {}]
  %s5 = inlined_call_operand.vmem [shape: f32[1,32], index: 5, kind: input, shape index: {}]
  %s6 = inlined_call_operand.vmem [shape: f32[1,32], index: 6, kind: input, shape index: {}]
  %s7 = inlined_call_operand.vmem [shape: f32[32,32], index: 7, kind: input, shape index: {}]
  %s8 = inlined_call_operand.vmem [shape: f32[1,32], index: 8, kind: input, shape index: {}]
  %s9 = inlined_call_operand.vmem [shape: f32[32,32], index: 9, kind: input, shape index: {}]
  %s10 = inlined_call_operand.vmem [shape: f32[32,32], index: 10, kind: input, shape index: {}]
  %s11 = inlined_call_operand.vmem [shape: f32[32,32], index: 11, kind: input, shape index: {}]
  %s12 = inlined_call_operand.vmem [shape: f32[32,32], index: 12, kind: input, shape index: {}]
  %s13 = inlined_call_operand.vmem [shape: f32[32,32], index: 13, kind: input, shape index: {}]
  %s14 = inlined_call_operand.vmem [shape: f32[32,32], index: 14, kind: input, shape index: {}]
  %s15 = inlined_call_operand.vmem [shape: f32[1,32], index: 15, kind: input, shape index: {}]
  %s16 = inlined_call_operand.vmem [shape: f32[1,32], index: 16, kind: input, shape index: {}]
  %s17 = inlined_call_operand.vmem [shape: f32[1,32], index: 17, kind: input, shape index: {}]
  %s18 = inlined_call_operand.vmem [shape: f32[1,32], index: 18, kind: input, shape index: {}]
  %s19 = inlined_call_operand.vmem [shape: f32[32,32], index: 19, kind: input, shape index: {}]
  %s20 = inlined_call_operand.vmem [shape: f32[1,32], index: 20, kind: input, shape index: {}]
  %s21 = inlined_call_operand.hbm [shape: f32[2,32], index: 21, kind: output, shape index: {0}]
  %s22 = inlined_call_operand.hbm [shape: f32[2,32], index: 22, kind: output, shape index: {1}]
  %23 = xla_tuple %s21, %s22
  %s24 = sld [smem:[#allocation0]]
  $region102: #{lstm_pretext_forward.1} parent=0
    _
  %s26 = ssub.s32 1, %s24
  %s27 = scalar_select 0, %s26, %s24
  $region1: #{lstm_pretext_forward.1} parent=0
    #allocation2 [shape = 'u8[1024]{0}', space=vmem, size = 0x400, scoped, tag = 'output window, operand 0, single buffered']
    #allocation3 [shape = 's32[1]{0}', space=sflag, size = 0x4, scoped, tag = 'scoped memory for lstm_pretext_forward.1']
    #allocation4 [shape = 'u8[1024]{0}', space=vmem, size = 0x400, scoped, tag = 'output window, operand 1, single buffered']
    #allocation5 [shape = 's32[1]{0}', space=sflag, size = 0x4, scoped, tag = 'scoped memory for lstm_pretext_forward.1']
    %28 = vsyncpa [#allocation3], 0
    %29 = vsyncpa [#allocation5], 0
    // Predicated region
    $region2: #{lstm_pretext_forward.1} parent=1 // pred_check
      _
    $region3: #{lstm_pretext_forward.1} parent=1 // pred_check_branch
      %31 = sbr.rel (0) target = $region5
    $region4: #{lstm_pretext_forward.1} parent=1 // pred_region
      _
    $region5: #{lstm_pretext_forward.1} parent=1 // pred_fallthru
      _
    // Predicated region
    $region6: #{lstm_pretext_forward.1} parent=1 // pred_check
      _
    $region7: #{lstm_pretext_forward.1} parent=1 // pred_check_branch
      %33 = sbr.rel (0) target = $region9
    $region8: #{lstm_pretext_forward.1} parent=1 // pred_region
      _
    $region9: #{lstm_pretext_forward.1} parent=1 // pred_fallthru
      _
    // Predicated region
    $region10: #{lstm_pretext_forward.1} parent=1 // pred_check
      _
    $region11: #{lstm_pretext_forward.1} parent=1 // pred_check_branch
      %35 = sbr.rel (0) target = $region13
    $region12: #{lstm_pretext_forward.1} parent=1 // pred_region
      _
    $region13: #{lstm_pretext_forward.1} parent=1 // pred_fallthru
      _
    // Predicated region
    $region14: #{lstm_pretext_forward.1} parent=1 // pred_check
      _
    $region15: #{lstm_pretext_forward.1} parent=1 // pred_check_branch
      %37 = sbr.rel (0) target = $region17
    $region16: #{lstm_pretext_forward.1} parent=1 // pred_region
      _
    $region17: #{lstm_pretext_forward.1} parent=1 // pred_fallthru
      _
    // Predicated region
    $region18: #{lstm_pretext_forward.1} parent=1 // pred_check
      _
    $region19: #{lstm_pretext_forward.1} parent=1 // pred_check_branch
      %39 = sbr.rel (0) target = $region21
    $region20: #{lstm_pretext_forward.1} parent=1 // pred_region
      _
    $region21: #{lstm_pretext_forward.1} parent=1 // pred_fallthru
      _
    // Predicated region
    $region22: #{lstm_pretext_forward.1} parent=1 // pred_check
      _
    $region23: #{lstm_pretext_forward.1} parent=1 // pred_check_branch
      %41 = sbr.rel (0) target = $region25
    $region24: #{lstm_pretext_forward.1} parent=1 // pred_region
      _
    $region25: #{lstm_pretext_forward.1} parent=1 // pred_fallthru
      _
    // Predicated region
    $region26: #{lstm_pretext_forward.1} parent=1 // pred_check
      _
    $region27: #{lstm_pretext_forward.1} parent=1 // pred_check_branch
      %43 = sbr.rel (0) target = $region29
    $region28: #{lstm_pretext_forward.1} parent=1 // pred_region
      _
    $region29: #{lstm_pretext_forward.1} parent=1 // pred_fallthru
      _
    // Predicated region
    $region30: #{lstm_pretext_forward.1} parent=1 // pred_check
      _
    $region31: #{lstm_pretext_forward.1} parent=1 // pred_check_branch
      %45 = sbr.rel (0) target = $region33
    $region32: #{lstm_pretext_forward.1} parent=1 // pred_region
      _
    $region33: #{lstm_pretext_forward.1} parent=1 // pred_fallthru
      _
    // Predicated region
    $region34: #{lstm_pretext_forward.1} parent=1 // pred_check
      _
    $region35: #{lstm_pretext_forward.1} parent=1 // pred_check_branch
      %47 = sbr.rel (0) target = $region37
    $region36: #{lstm_pretext_forward.1} parent=1 // pred_region
      _
    $region37: #{lstm_pretext_forward.1} parent=1 // pred_fallthru
      _
    // Predicated region
    $region38: #{lstm_pretext_forward.1} parent=1 // pred_check
      _
    $region39: #{lstm_pretext_forward.1} parent=1 // pred_check_branch
      %49 = sbr.rel (0) target = $region41
    $region40: #{lstm_pretext_forward.1} parent=1 // pred_region
      _
    $region41: #{lstm_pretext_forward.1} parent=1 // pred_fallthru
      _
    // Predicated region
    $region42: #{lstm_pretext_forward.1} parent=1 // pred_check
      _
    $region43: #{lstm_pretext_forward.1} parent=1 // pred_check_branch
      %51 = sbr.rel (0) target = $region45
    $region44: #{lstm_pretext_forward.1} parent=1 // pred_region
      _
    $region45: #{lstm_pretext_forward.1} parent=1 // pred_fallthru
      _
    // Predicated region
    $region46: #{lstm_pretext_forward.1} parent=1 // pred_check
      _
    $region47: #{lstm_pretext_forward.1} parent=1 // pred_check_branch
      %53 = sbr.rel (0) target = $region49
    $region48: #{lstm_pretext_forward.1} parent=1 // pred_region
      _
    $region49: #{lstm_pretext_forward.1} parent=1 // pred_fallthru
      _
    // Predicated region
    $region50: #{lstm_pretext_forward.1} parent=1 // pred_check
      _
    $region51: #{lstm_pretext_forward.1} parent=1 // pred_check_branch
      %55 = sbr.rel (0) target = $region53
    $region52: #{lstm_pretext_forward.1} parent=1 // pred_region
      _
    $region53: #{lstm_pretext_forward.1} parent=1 // pred_fallthru
      _
    // Predicated region
    $region54: #{lstm_pretext_forward.1} parent=1 // pred_check
      _
    $region55: #{lstm_pretext_forward.1} parent=1 // pred_check_branch
      %57 = sbr.rel (0) target = $region57
    $region56: #{lstm_pretext_forward.1} parent=1 // pred_region
      _
    $region57: #{lstm_pretext_forward.1} parent=1 // pred_fallthru
      _
    // Predicated region
    $region58: #{lstm_pretext_forward.1} parent=1 // pred_check
      _
    $region59: #{lstm_pretext_forward.1} parent=1 // pred_check_branch
      %59 = sbr.rel (0) target = $region61
    $region60: #{lstm_pretext_forward.1} parent=1 // pred_region
      _
    $region61: #{lstm_pretext_forward.1} parent=1 // pred_fallthru
      _
    // Predicated region
    $region62: #{lstm_pretext_forward.1} parent=1 // pred_check
      _
    $region63: #{lstm_pretext_forward.1} parent=1 // pred_check_branch
      %61 = sbr.rel (0) target = $region65
    $region64: #{lstm_pretext_forward.1} parent=1 // pred_region
      _
    $region65: #{lstm_pretext_forward.1} parent=1 // pred_fallthru
      _
    // Predicated region
    $region66: #{lstm_pretext_forward.1} parent=1 // pred_check
      _
    $region67: #{lstm_pretext_forward.1} parent=1 // pred_check_branch
      %63 = sbr.rel (0) target = $region69
    $region68: #{lstm_pretext_forward.1} parent=1 // pred_region
      _
    $region69: #{lstm_pretext_forward.1} parent=1 // pred_fallthru
      _
    // Predicated region
    $region70: #{lstm_pretext_forward.1} parent=1 // pred_check
      _
    $region71: #{lstm_pretext_forward.1} parent=1 // pred_check_branch
      %65 = sbr.rel (0) target = $region73
    $region72: #{lstm_pretext_forward.1} parent=1 // pred_region
      _
    $region73: #{lstm_pretext_forward.1} parent=1 // pred_fallthru
      _
    // Predicated region
    $region74: #{lstm_pretext_forward.1} parent=1 // pred_check
      _
    $region75: #{lstm_pretext_forward.1} parent=1 // pred_check_branch
      %67 = sbr.rel (0) target = $region77
    $region76: #{lstm_pretext_forward.1} parent=1 // pred_region
      _
    $region77: #{lstm_pretext_forward.1} parent=1 // pred_fallthru
      _
    // Predicated region
    $region78: #{lstm_pretext_forward.1} parent=1 // pred_check
      _
    $region79: #{lstm_pretext_forward.1} parent=1 // pred_check_branch
      %69 = sbr.rel (0) target = $region81
    $region80: #{lstm_pretext_forward.1} parent=1 // pred_region
      _
    $region81: #{lstm_pretext_forward.1} parent=1 // pred_fallthru
      _
    // Predicated region
    $region82: #{lstm_pretext_forward.1} parent=1 // pred_check
      _
    $region83: #{lstm_pretext_forward.1} parent=1 // pred_check_branch
      %71 = sbr.rel (0) target = $region85
    $region84: #{lstm_pretext_forward.1} parent=1 // pred_region
      _
    $region85: #{lstm_pretext_forward.1} parent=1 // pred_fallthru
      _
    %v72 = vld [vmem:[%s0] sm:$0xff]
    %v73 = vld [vmem:[%s0 + $0x8] sm:$0xff]
    %v74 = vld [vmem:[%s1] sm:$0xff]
    %v75 = vld [vmem:[%s1 + $0x8] sm:$0xff]
    %v76 = vld [vmem:[%s4] sm:$0x3]
    %v77 = vld [vmem:[%s5] sm:$0x1]
    %79 = vset.pattern.permute.xlu0 0
    %80 = vperm.xlu0 %79, %v74
    %v81 = vpop.permute.xlu0 %80
    %84 = vset.pattern.permute.xlu0 0
    %85 = vperm.xlu0 %84, %v75
    %v86 = vpop.permute.xlu0 %85
    %v89 = vlaneseq
    %v90 = vshrl.u32 %v89, 7
    %v91 = vsub.s32 0, %v90
    %v92 = vrot.slane %v77, %v91
    %v94 = vmul.f32 %v81, %v92
    %v95 = vmul.f32 %v86, %v92
    %vm96 = vcmask 15360
    %v98 = vsel %vm96, %v72, 0
    %v101 = vsel %vm96, %v73, 0
    %vm103 = vcmask 1041408
    %v105 = vsel %vm103, %v76, 0
    %107 = vmatprep.subr.mxu0 0.0
    %108 = vmatpush1.msra.mxu0 %v105
    %109 = vmatprep.subr.mxu0 0.0
    %110 = vmatpush1.msra.mxu0 0.0
    %111 = vmatprep.subr.mxu0 0.0
    %112 = vmatpush1.msra.mxu0 0.0
    %113 = vmatprep.subr.mxu0 0.0
    %114 = vmatpush1.msra.mxu0 0.0
    %115 = vmatprep.subr.mxu0 0.0
    %116 = vmatpush1.msra.mxu0 0.0
    %117 = vmatprep.subr.mxu0 0.0
    %118 = vmatpush1.msra.mxu0 0.0
    %119 = vmatprep.subr.mxu0 0.0
    %120 = vmatpush1.msra.mxu0 0.0
    %121 = vmatprep.subr.mxu0 0.0
    %122 = vmatpush1.msra.mxu0 0.0
    %123 = vmatprep.subr.mxu0 0.0
    %124 = vmatpush1.msra.mxu0 0.0
    %125 = vmatprep.subr.mxu0 0.0
    %126 = vmatpush1.msra.mxu0 0.0
    %127 = vmatprep.subr.mxu0 0.0
    %128 = vmatpush1.msra.mxu0 0.0
    %129 = vmatprep.subr.mxu0 0.0
    %130 = vmatpush1.msra.mxu0 0.0
    %131 = vmatprep.subr.mxu0 0.0
    %132 = vmatpush1.msra.mxu0 0.0
    %133 = vmatprep.subr.mxu0 0.0
    %134 = vmatpush1.msra.mxu0 0.0
    %135 = vmatprep.subr.mxu0 0.0
    %136 = vmatpush1.msra.mxu0 0.0
    %137 = vmatprep.subr.mxu0 0.0
    %138 = vmatpush1.msra.mxu0 0.0
    %139 = vmatprep.subr.mxu0 0.0
    %140 = vmatpush1.msra.mxu0 0.0
    %141 = vmatprep.subr.mxu0 0.0
    %142 = vmatpush1.msra.mxu0 0.0
    %143 = vmatprep.subr.mxu0 0.0
    %144 = vmatpush1.msra.mxu0 0.0
    %145 = vmatprep.subr.mxu0 0.0
    %146 = vmatpush1.msra.mxu0 0.0
    %147 = vmatprep.subr.mxu0 0.0
    %148 = vmatpush1.msra.mxu0 0.0
    %149 = vmatprep.subr.mxu0 0.0
    %150 = vmatpush1.msra.mxu0 0.0
    %151 = vmatprep.subr.mxu0 0.0
    %152 = vmatpush1.msra.mxu0 0.0
    %153 = vmatprep.subr.mxu0 0.0
    %154 = vmatpush1.msra.mxu0 0.0
    %155 = vmatprep.subr.mxu0 0.0
    %156 = vmatpush1.msra.mxu0 0.0
    %157 = vmatprep.subr.mxu0 0.0
    %158 = vmatpush1.msra.mxu0 0.0
    %159 = vmatprep.subr.mxu0 0.0
    %160 = vmatpush1.msra.mxu0 0.0
    %161 = vmatprep.subr.mxu0 0.0
    %162 = vmatpush1.msra.mxu0 0.0
    %163 = vmatprep.subr.mxu0 0.0
    %164 = vmatpush1.msra.mxu0 0.0
    %165 = vmatprep.subr.mxu0 0.0
    %166 = vmatpush1.msra.mxu0 0.0
    %167 = vmatprep.subr.mxu0 0.0
    %168 = vmatpush1.msra.mxu0 0.0
    %169 = vmatprep.subr.mxu0 0.0
    %170 = vmatpush1.msra.mxu0 0.0
    %171 = vmatprep.mubr.f32.mxu0 0.0
    %172 = vmatmul.mubr.f32.gmra.mrb[0].mxu0 %v98
    %v173 = vpop.f32.mrb[0].mxu0
    %v174 = vadd.f32 %v94, %v173
    %v175 = vpop.f32.mrb[0].mxu0
    %176 = vmatprep.mubr.f32.mxu0 0.0
    %177 = vmatmul.mubr.f32.gmra.mrb[0].mxu0 %v101
    %v178 = vpop.f32.mrb[0].mxu0
    %v179 = vadd.f32 %v95, %v178
    %v180 = vpop.f32.mrb[0].mxu0
    %181 = vdwg.mxu0
    %v182 = vld [vmem:[%s6] sm:$0x1]
    %v184 = vlaneseq
    %v185 = vshrl.u32 %v184, 7
    %v186 = vsub.s32 0, %v185
    %v187 = vrot.slane %v182, %v186
    %v189 = vadd.f32 %v174, %v187
    %v190 = vadd.f32 %v179, %v187
    %v191 = vmax.f32 %v189, 0.0
    %v192 = vmax.f32 %v190, 0.0
    %v193 = vld [vmem:[%s7] sm:$0xff]
    %v194 = vld [vmem:[%s7 + $0x8] sm:$0xff]
    %v195 = vld [vmem:[%s7 + $0x10] sm:$0xff]
    %v196 = vld [vmem:[%s7 + $0x18] sm:$0xff]
    %v197 = vld [vmem:[%s8] sm:$0x1]
    %v199 = vlaneseq
    %v200 = vshrl.u32 %v199, 7
    %v201 = vsub.s32 0, %v200
    %v202 = vrot.slane %v197, %v201
    %vm204 = vcmask 261120
    %v206 = vsel %vm204, %v191, 0
    %v209 = vsel %vm204, %v192, 0
    %211 = vmatprep.subr.mxu0 0.0
    %212 = vmatpush1.msra.mxu0 %v193
    %213 = vmatprep.subr.mxu0 0.0
    %214 = vmatpush1.msra.mxu0 %v194
    %215 = vmatprep.subr.mxu0 0.0
    %216 = vmatpush1.msra.mxu0 %v195
    %217 = vmatprep.subr.mxu0 0.0
    %218 = vmatpush1.msra.mxu0 %v196
    %219 = vmatprep.subr.mxu0 0.0
    %220 = vmatpush1.msra.mxu0 0.0
    %221 = vmatprep.subr.mxu0 0.0
    %222 = vmatpush1.msra.mxu0 0.0
    %223 = vmatprep.subr.mxu0 0.0
    %224 = vmatpush1.msra.mxu0 0.0
    %225 = vmatprep.subr.mxu0 0.0
    %226 = vmatpush1.msra.mxu0 0.0
    %227 = vmatprep.subr.mxu0 0.0
    %228 = vmatpush1.msra.mxu0 0.0
    %229 = vmatprep.subr.mxu0 0.0
    %230 = vmatpush1.msra.mxu0 0.0
    %231 = vmatprep.subr.mxu0 0.0
    %232 = vmatpush1.msra.mxu0 0.0
    %233 = vmatprep.subr.mxu0 0.0
    %234 = vmatpush1.msra.mxu0 0.0
    %235 = vmatprep.subr.mxu0 0.0
    %236 = vmatpush1.msra.mxu0 0.0
    %237 = vmatprep.subr.mxu0 0.0
    %238 = vmatpush1.msra.mxu0 0.0
    %239 = vmatprep.subr.mxu0 0.0
    %240 = vmatpush1.msra.mxu0 0.0
    %241 = vmatprep.subr.mxu0 0.0
    %242 = vmatpush1.msra.mxu0 0.0
    %243 = vmatprep.subr.mxu0 0.0
    %244 = vmatpush1.msra.mxu0 0.0
    %245 = vmatprep.subr.mxu0 0.0
    %246 = vmatpush1.msra.mxu0 0.0
    %247 = vmatprep.subr.mxu0 0.0
    %248 = vmatpush1.msra.mxu0 0.0
    %249 = vmatprep.subr.mxu0 0.0
    %250 = vmatpush1.msra.mxu0 0.0
    %251 = vmatprep.subr.mxu0 0.0
    %252 = vmatpush1.msra.mxu0 0.0
    %253 = vmatprep.subr.mxu0 0.0
    %254 = vmatpush1.msra.mxu0 0.0
    %255 = vmatprep.subr.mxu0 0.0
    %256 = vmatpush1.msra.mxu0 0.0
    %257 = vmatprep.subr.mxu0 0.0
    %258 = vmatpush1.msra.mxu0 0.0
    %259 = vmatprep.subr.mxu0 0.0
    %260 = vmatpush1.msra.mxu0 0.0
    %261 = vmatprep.subr.mxu0 0.0
    %262 = vmatpush1.msra.mxu0 0.0
    %263 = vmatprep.subr.mxu0 0.0
    %264 = vmatpush1.msra.mxu0 0.0
    %265 = vmatprep.subr.mxu0 0.0
    %266 = vmatpush1.msra.mxu0 0.0
    %267 = vmatprep.subr.mxu0 0.0
    %268 = vmatpush1.msra.mxu0 0.0
    %269 = vmatprep.subr.mxu0 0.0
    %270 = vmatpush1.msra.mxu0 0.0
    %271 = vmatprep.subr.mxu0 0.0
    %272 = vmatpush1.msra.mxu0 0.0
    %273 = vmatprep.subr.mxu0 0.0
    %274 = vmatpush1.msra.mxu0 0.0
    %275 = vmatprep.mubr.f32.mxu0 0.0
    %276 = vmatmul.mubr.f32.gmra.mrb[0].mxu0 %v206
    %v277 = vpop.f32.mrb[0].mxu0
    %v278 = vadd.f32 %v202, %v277
    %v279 = vpop.f32.mrb[0].mxu0
    %280 = vmatprep.mubr.f32.mxu0 0.0
    %281 = vmatmul.mubr.f32.gmra.mrb[0].mxu0 %v209
    %v282 = vpop.f32.mrb[0].mxu0
    %v283 = vadd.f32 %v202, %v282
    %v284 = vpop.f32.mrb[0].mxu0
    %285 = vdwg.mxu0
    %v286 = vmax.f32 %v278, 0.0
    %v287 = vmax.f32 %v283, 0.0
    %v288 = vld [vmem:[%s9] sm:$0xff]
    %v289 = vld [vmem:[%s9 + $0x8] sm:$0xff]
    %v290 = vld [vmem:[%s9 + $0x10] sm:$0xff]
    %v291 = vld [vmem:[%s9 + $0x18] sm:$0xff]
    %v292 = vld [vmem:[%s15] sm:$0x1]
    %v294 = vlaneseq
    %v295 = vshrl.u32 %v294, 7
    %v296 = vsub.s32 0, %v295
    %v297 = vrot.slane %v292, %v296
    %v300 = vsel %vm204, %v286, 0
    %v303 = vsel %vm204, %v287, 0
    %305 = vmatprep.subr.mxu0 0.0
    %306 = vmatpush1.msra.mxu0 %v288
    %307 = vmatprep.subr.mxu0 0.0
    %308 = vmatpush1.msra.mxu0 %v289
    %309 = vmatprep.subr.mxu0 0.0
    %310 = vmatpush1.msra.mxu0 %v290
    %311 = vmatprep.subr.mxu0 0.0
    %312 = vmatpush1.msra.mxu0 %v291
    %313 = vmatprep.subr.mxu0 0.0
    %314 = vmatpush1.msra.mxu0 0.0
    %315 = vmatprep.subr.mxu0 0.0
    %316 = vmatpush1.msra.mxu0 0.0
    %317 = vmatprep.subr.mxu0 0.0
    %318 = vmatpush1.msra.mxu0 0.0
    %319 = vmatprep.subr.mxu0 0.0
    %320 = vmatpush1.msra.mxu0 0.0
    %321 = vmatprep.subr.mxu0 0.0
    %322 = vmatpush1.msra.mxu0 0.0
    %323 = vmatprep.subr.mxu0 0.0
    %324 = vmatpush1.msra.mxu0 0.0
    %325 = vmatprep.subr.mxu0 0.0
    %326 = vmatpush1.msra.mxu0 0.0
    %327 = vmatprep.subr.mxu0 0.0
    %328 = vmatpush1.msra.mxu0 0.0
    %329 = vmatprep.subr.mxu0 0.0
    %330 = vmatpush1.msra.mxu0 0.0
    %331 = vmatprep.subr.mxu0 0.0
    %332 = vmatpush1.msra.mxu0 0.0
    %333 = vmatprep.subr.mxu0 0.0
    %334 = vmatpush1.msra.mxu0 0.0
    %335 = vmatprep.subr.mxu0 0.0
    %336 = vmatpush1.msra.mxu0 0.0
    %337 = vmatprep.subr.mxu0 0.0
    %338 = vmatpush1.msra.mxu0 0.0
    %339 = vmatprep.subr.mxu0 0.0
    %340 = vmatpush1.msra.mxu0 0.0
    %341 = vmatprep.subr.mxu0 0.0
    %342 = vmatpush1.msra.mxu0 0.0
    %343 = vmatprep.subr.mxu0 0.0
    %344 = vmatpush1.msra.mxu0 0.0
    %345 = vmatprep.subr.mxu0 0.0
    %346 = vmatpush1.msra.mxu0 0.0
    %347 = vmatprep.subr.mxu0 0.0
    %348 = vmatpush1.msra.mxu0 0.0
    %349 = vmatprep.subr.mxu0 0.0
    %350 = vmatpush1.msra.mxu0 0.0
    %351 = vmatprep.subr.mxu0 0.0
    %352 = vmatpush1.msra.mxu0 0.0
    %353 = vmatprep.subr.mxu0 0.0
    %354 = vmatpush1.msra.mxu0 0.0
    %355 = vmatprep.subr.mxu0 0.0
    %356 = vmatpush1.msra.mxu0 0.0
    %357 = vmatprep.subr.mxu0 0.0
    %358 = vmatpush1.msra.mxu0 0.0
    %359 = vmatprep.subr.mxu0 0.0
    %360 = vmatpush1.msra.mxu0 0.0
    %361 = vmatprep.subr.mxu0 0.0
    %362 = vmatpush1.msra.mxu0 0.0
    %363 = vmatprep.subr.mxu0 0.0
    %364 = vmatpush1.msra.mxu0 0.0
    %365 = vmatprep.subr.mxu0 0.0
    %366 = vmatpush1.msra.mxu0 0.0
    %367 = vmatprep.subr.mxu0 0.0
    %368 = vmatpush1.msra.mxu0 0.0
    %369 = vmatprep.mubr.f32.mxu0 0.0
    %370 = vmatmul.mubr.f32.gmra.mrb[0].mxu0 %v300
    %v371 = vpop.f32.mrb[0].mxu0
    %v372 = vadd.f32 %v297, %v371
    %v373 = vpop.f32.mrb[0].mxu0
    %374 = vmatprep.mubr.f32.mxu0 0.0
    %375 = vmatmul.mubr.f32.gmra.mrb[0].mxu0 %v303
    %v376 = vpop.f32.mrb[0].mxu0
    %v377 = vadd.f32 %v297, %v376
    %v378 = vpop.f32.mrb[0].mxu0
    %379 = vdwg.mxu0
    %v380 = vld [vmem:[%s10] sm:$0xff]
    %v381 = vld [vmem:[%s10 + $0x8] sm:$0xff]
    %v382 = vld [vmem:[%s10 + $0x10] sm:$0xff]
    %v383 = vld [vmem:[%s10 + $0x18] sm:$0xff]
    %v384 = vld [vmem:[%s16] sm:$0x1]
    %v386 = vlaneseq
    %v387 = vshrl.u32 %v386, 7
    %v388 = vsub.s32 0, %v387
    %v389 = vrot.slane %v384, %v388
    %391 = vmatprep.subr.mxu0 0.0
    %392 = vmatpush1.msra.mxu0 %v380
    %393 = vmatprep.subr.mxu0 0.0
    %394 = vmatpush1.msra.mxu0 %v381
    %395 = vmatprep.subr.mxu0 0.0
    %396 = vmatpush1.msra.mxu0 %v382
    %397 = vmatprep.subr.mxu0 0.0
    %398 = vmatpush1.msra.mxu0 %v383
    %399 = vmatprep.subr.mxu0 0.0
    %400 = vmatpush1.msra.mxu0 0.0
    %401 = vmatprep.subr.mxu0 0.0
    %402 = vmatpush1.msra.mxu0 0.0
    %403 = vmatprep.subr.mxu0 0.0
    %404 = vmatpush1.msra.mxu0 0.0
    %405 = vmatprep.subr.mxu0 0.0
    %406 = vmatpush1.msra.mxu0 0.0
    %407 = vmatprep.subr.mxu0 0.0
    %408 = vmatpush1.msra.mxu0 0.0
    %409 = vmatprep.subr.mxu0 0.0
    %410 = vmatpush1.msra.mxu0 0.0
    %411 = vmatprep.subr.mxu0 0.0
    %412 = vmatpush1.msra.mxu0 0.0
    %413 = vmatprep.subr.mxu0 0.0
    %414 = vmatpush1.msra.mxu0 0.0
    %415 = vmatprep.subr.mxu0 0.0
    %416 = vmatpush1.msra.mxu0 0.0
    %417 = vmatprep.subr.mxu0 0.0
    %418 = vmatpush1.msra.mxu0 0.0
    %419 = vmatprep.subr.mxu0 0.0
    %420 = vmatpush1.msra.mxu0 0.0
    %421 = vmatprep.subr.mxu0 0.0
    %422 = vmatpush1.msra.mxu0 0.0
    %423 = vmatprep.subr.mxu0 0.0
    %424 = vmatpush1.msra.mxu0 0.0
    %425 = vmatprep.subr.mxu0 0.0
    %426 = vmatpush1.msra.mxu0 0.0
    %427 = vmatprep.subr.mxu0 0.0
    %428 = vmatpush1.msra.mxu0 0.0
    %429 = vmatprep.subr.mxu0 0.0
    %430 = vmatpush1.msra.mxu0 0.0
    %431 = vmatprep.subr.mxu0 0.0
    %432 = vmatpush1.msra.mxu0 0.0
    %433 = vmatprep.subr.mxu0 0.0
    %434 = vmatpush1.msra.mxu0 0.0
    %435 = vmatprep.subr.mxu0 0.0
    %436 = vmatpush1.msra.mxu0 0.0
    %437 = vmatprep.subr.mxu0 0.0
    %438 = vmatpush1.msra.mxu0 0.0
    %439 = vmatprep.subr.mxu0 0.0
    %440 = vmatpush1.msra.mxu0 0.0
    %441 = vmatprep.subr.mxu0 0.0
    %442 = vmatpush1.msra.mxu0 0.0
    %443 = vmatprep.subr.mxu0 0.0
    %444 = vmatpush1.msra.mxu0 0.0
    %445 = vmatprep.subr.mxu0 0.0
    %446 = vmatpush1.msra.mxu0 0.0
    %447 = vmatprep.subr.mxu0 0.0
    %448 = vmatpush1.msra.mxu0 0.0
    %449 = vmatprep.subr.mxu0 0.0
    %450 = vmatpush1.msra.mxu0 0.0
    %451 = vmatprep.subr.mxu0 0.0
    %452 = vmatpush1.msra.mxu0 0.0
    %453 = vmatprep.subr.mxu0 0.0
    %454 = vmatpush1.msra.mxu0 0.0
    %455 = vmatprep.mubr.f32.mxu0 0.0
    %456 = vmatmul.mubr.f32.gmra.mrb[0].mxu0 %v300
    %v457 = vpop.f32.mrb[0].mxu0
    %v458 = vadd.f32 %v389, %v457
    %v459 = vpop.f32.mrb[0].mxu0
    %460 = vmatprep.mubr.f32.mxu0 0.0
    %461 = vmatmul.mubr.f32.gmra.mrb[0].mxu0 %v303
    %v462 = vpop.f32.mrb[0].mxu0
    %v463 = vadd.f32 %v389, %v462
    %v464 = vpop.f32.mrb[0].mxu0
    %465 = vdwg.mxu0
    %v466 = vld [vmem:[%s11] sm:$0xff]
    %v467 = vld [vmem:[%s11 + $0x8] sm:$0xff]
    %v468 = vld [vmem:[%s11 + $0x10] sm:$0xff]
    %v469 = vld [vmem:[%s11 + $0x18] sm:$0xff]
    %v470 = vld [vmem:[%s17] sm:$0x1]
    %v472 = vlaneseq
    %v473 = vshrl.u32 %v472, 7
    %v474 = vsub.s32 0, %v473
    %v475 = vrot.slane %v470, %v474
    %477 = vmatprep.subr.mxu0 0.0
    %478 = vmatpush1.msra.mxu0 %v466
    %479 = vmatprep.subr.mxu0 0.0
    %480 = vmatpush1.msra.mxu0 %v467
    %481 = vmatprep.subr.mxu0 0.0
    %482 = vmatpush1.msra.mxu0 %v468
    %483 = vmatprep.subr.mxu0 0.0
    %484 = vmatpush1.msra.mxu0 %v469
    %485 = vmatprep.subr.mxu0 0.0
    %486 = vmatpush1.msra.mxu0 0.0
    %487 = vmatprep.subr.mxu0 0.0
    %488 = vmatpush1.msra.mxu0 0.0
    %489 = vmatprep.subr.mxu0 0.0
    %490 = vmatpush1.msra.mxu0 0.0
    %491 = vmatprep.subr.mxu0 0.0
    %492 = vmatpush1.msra.mxu0 0.0
    %493 = vmatprep.subr.mxu0 0.0
    %494 = vmatpush1.msra.mxu0 0.0
    %495 = vmatprep.subr.mxu0 0.0
    %496 = vmatpush1.msra.mxu0 0.0
    %497 = vmatprep.subr.mxu0 0.0
    %498 = vmatpush1.msra.mxu0 0.0
    %499 = vmatprep.subr.mxu0 0.0
    %500 = vmatpush1.msra.mxu0 0.0
    %501 = vmatprep.subr.mxu0 0.0
    %502 = vmatpush1.msra.mxu0 0.0
    %503 = vmatprep.subr.mxu0 0.0
    %504 = vmatpush1.msra.mxu0 0.0
    %505 = vmatprep.subr.mxu0 0.0
    %506 = vmatpush1.msra.mxu0 0.0
    %507 = vmatprep.subr.mxu0 0.0
    %508 = vmatpush1.msra.mxu0 0.0
    %509 = vmatprep.subr.mxu0 0.0
    %510 = vmatpush1.msra.mxu0 0.0
    %511 = vmatprep.subr.mxu0 0.0
    %512 = vmatpush1.msra.mxu0 0.0
    %513 = vmatprep.subr.mxu0 0.0
    %514 = vmatpush1.msra.mxu0 0.0
    %515 = vmatprep.subr.mxu0 0.0
    %516 = vmatpush1.msra.mxu0 0.0
    %517 = vmatprep.subr.mxu0 0.0
    %518 = vmatpush1.msra.mxu0 0.0
    %519 = vmatprep.subr.mxu0 0.0
    %520 = vmatpush1.msra.mxu0 0.0
    %521 = vmatprep.subr.mxu0 0.0
    %522 = vmatpush1.msra.mxu0 0.0
    %523 = vmatprep.subr.mxu0 0.0
    %524 = vmatpush1.msra.mxu0 0.0
    %525 = vmatprep.subr.mxu0 0.0
    %526 = vmatpush1.msra.mxu0 0.0
    %527 = vmatprep.subr.mxu0 0.0
    %528 = vmatpush1.msra.mxu0 0.0
    %529 = vmatprep.subr.mxu0 0.0
    %530 = vmatpush1.msra.mxu0 0.0
    %531 = vmatprep.subr.mxu0 0.0
    %532 = vmatpush1.msra.mxu0 0.0
    %533 = vmatprep.subr.mxu0 0.0
    %534 = vmatpush1.msra.mxu0 0.0
    %535 = vmatprep.subr.mxu0 0.0
    %536 = vmatpush1.msra.mxu0 0.0
    %537 = vmatprep.subr.mxu0 0.0
    %538 = vmatpush1.msra.mxu0 0.0
    %539 = vmatprep.subr.mxu0 0.0
    %540 = vmatpush1.msra.mxu0 0.0
    %541 = vmatprep.mubr.f32.mxu0 0.0
    %542 = vmatmul.mubr.f32.gmra.mrb[0].mxu0 %v300
    %v543 = vpop.f32.mrb[0].mxu0
    %v544 = vadd.f32 %v475, %v543
    %v545 = vpop.f32.mrb[0].mxu0
    %546 = vmatprep.mubr.f32.mxu0 0.0
    %547 = vmatmul.mubr.f32.gmra.mrb[0].mxu0 %v303
    %v548 = vpop.f32.mrb[0].mxu0
    %v549 = vadd.f32 %v475, %v548
    %v550 = vpop.f32.mrb[0].mxu0
    %551 = vdwg.mxu0
    %v552 = vld [vmem:[%s3] sm:$0x3]
    %v553 = vlaneseq
    %v554 = vand.u32 %v553, 127
    %555 = vset.pattern.permute.xlu0 0
    %556 = vperm.xlu0 %555, %v552
    %v557 = vpop.permute.xlu0 %556
    %vm558 = vcmp.lt.s32.totalorder %v554, %v557
    %v559 = vld [vmem:[%s12] sm:$0xff]
    %v560 = vld [vmem:[%s12 + $0x8] sm:$0xff]
    %v561 = vld [vmem:[%s12 + $0x10] sm:$0xff]
    %v562 = vld [vmem:[%s12 + $0x18] sm:$0xff]
    %v563 = vld [vmem:[%s13] sm:$0xff]
    %v564 = vld [vmem:[%s13 + $0x8] sm:$0xff]
    %v565 = vld [vmem:[%s13 + $0x10] sm:$0xff]
    %v566 = vld [vmem:[%s13 + $0x18] sm:$0xff]
    %v567 = vld [vmem:[%s14] sm:$0xff]
    %v568 = vld [vmem:[%s14 + $0x8] sm:$0xff]
    %v569 = vld [vmem:[%s14 + $0x10] sm:$0xff]
    %v570 = vld [vmem:[%s14 + $0x18] sm:$0xff]
    %v571 = vld [vmem:[%s18] sm:$0x1]
    %v572 = vld [vmem:[%s2] sm:$0x3]
    %v574 = vsel %vm204, %v572, 0
    %576 = vmatprep.subr.mxu0 0.0
    %577 = vmatpush1.msra.mxu0 %v559
    %578 = vmatprep.subr.mxu0 0.0
    %579 = vmatpush1.msra.mxu0 %v560
    %580 = vmatprep.subr.mxu0 0.0
    %581 = vmatpush1.msra.mxu0 %v561
    %582 = vmatprep.subr.mxu0 0.0
    %583 = vmatpush1.msra.mxu0 %v562
    %584 = vmatprep.subr.mxu0 0.0
    %585 = vmatpush1.msra.mxu0 0.0
    %586 = vmatprep.subr.mxu0 0.0
    %587 = vmatpush1.msra.mxu0 0.0
    %588 = vmatprep.subr.mxu0 0.0
    %589 = vmatpush1.msra.mxu0 0.0
    %590 = vmatprep.subr.mxu0 0.0
    %591 = vmatpush1.msra.mxu0 0.0
    %592 = vmatprep.subr.mxu0 0.0
    %593 = vmatpush1.msra.mxu0 0.0
    %594 = vmatprep.subr.mxu0 0.0
    %595 = vmatpush1.msra.mxu0 0.0
    %596 = vmatprep.subr.mxu0 0.0
    %597 = vmatpush1.msra.mxu0 0.0
    %598 = vmatprep.subr.mxu0 0.0
    %599 = vmatpush1.msra.mxu0 0.0
    %600 = vmatprep.subr.mxu0 0.0
    %601 = vmatpush1.msra.mxu0 0.0
    %602 = vmatprep.subr.mxu0 0.0
    %603 = vmatpush1.msra.mxu0 0.0
    %604 = vmatprep.subr.mxu0 0.0
    %605 = vmatpush1.msra.mxu0 0.0
    %606 = vmatprep.subr.mxu0 0.0
    %607 = vmatpush1.msra.mxu0 0.0
    %608 = vmatprep.subr.mxu0 0.0
    %609 = vmatpush1.msra.mxu0 0.0
    %610 = vmatprep.subr.mxu0 0.0
    %611 = vmatpush1.msra.mxu0 0.0
    %612 = vmatprep.subr.mxu0 0.0
    %613 = vmatpush1.msra.mxu0 0.0
    %614 = vmatprep.subr.mxu0 0.0
    %615 = vmatpush1.msra.mxu0 0.0
    %616 = vmatprep.subr.mxu0 0.0
    %617 = vmatpush1.msra.mxu0 0.0
    %618 = vmatprep.subr.mxu0 0.0
    %619 = vmatpush1.msra.mxu0 0.0
    %620 = vmatprep.subr.mxu0 0.0
    %621 = vmatpush1.msra.mxu0 0.0
    %622 = vmatprep.subr.mxu0 0.0
    %623 = vmatpush1.msra.mxu0 0.0
    %624 = vmatprep.subr.mxu0 0.0
    %625 = vmatpush1.msra.mxu0 0.0
    %626 = vmatprep.subr.mxu0 0.0
    %627 = vmatpush1.msra.mxu0 0.0
    %628 = vmatprep.subr.mxu0 0.0
    %629 = vmatpush1.msra.mxu0 0.0
    %630 = vmatprep.subr.mxu0 0.0
    %631 = vmatpush1.msra.mxu0 0.0
    %632 = vmatprep.subr.mxu0 0.0
    %633 = vmatpush1.msra.mxu0 0.0
    %634 = vmatprep.subr.mxu0 0.0
    %635 = vmatpush1.msra.mxu0 0.0
    %636 = vmatprep.subr.mxu0 0.0
    %637 = vmatpush1.msra.mxu0 0.0
    %638 = vmatprep.subr.mxu0 0.0
    %639 = vmatpush1.msra.mxu0 0.0
    %640 = vmatprep.mubr.f32.mxu0 0.0
    %641 = vmatmul.mubr.f32.gmra.mrb[0].mxu0 %v574
    %v642 = vpop.f32.mrb[0].mxu0
    %v643 = vadd.f32 0.0, %v642
    %v644 = vpop.f32.mrb[0].mxu0
    %645 = vdwg.mxu0
    %646 = vmatprep.subr.mxu0 0.0
    %647 = vmatpush1.msra.mxu0 %v563
    %648 = vmatprep.subr.mxu0 0.0
    %649 = vmatpush1.msra.mxu0 %v564
    %650 = vmatprep.subr.mxu0 0.0
    %651 = vmatpush1.msra.mxu0 %v565
    %652 = vmatprep.subr.mxu0 0.0
    %653 = vmatpush1.msra.mxu0 %v566
    %654 = vmatprep.subr.mxu0 0.0
    %655 = vmatpush1.msra.mxu0 0.0
    %656 = vmatprep.subr.mxu0 0.0
    %657 = vmatpush1.msra.mxu0 0.0
    %658 = vmatprep.subr.mxu0 0.0
    %659 = vmatpush1.msra.mxu0 0.0
    %660 = vmatprep.subr.mxu0 0.0
    %661 = vmatpush1.msra.mxu0 0.0
    %662 = vmatprep.subr.mxu0 0.0
    %663 = vmatpush1.msra.mxu0 0.0
    %664 = vmatprep.subr.mxu0 0.0
    %665 = vmatpush1.msra.mxu0 0.0
    %666 = vmatprep.subr.mxu0 0.0
    %667 = vmatpush1.msra.mxu0 0.0
    %668 = vmatprep.subr.mxu0 0.0
    %669 = vmatpush1.msra.mxu0 0.0
    %670 = vmatprep.subr.mxu0 0.0
    %671 = vmatpush1.msra.mxu0 0.0
    %672 = vmatprep.subr.mxu0 0.0
    %673 = vmatpush1.msra.mxu0 0.0
    %674 = vmatprep.subr.mxu0 0.0
    %675 = vmatpush1.msra.mxu0 0.0
    %676 = vmatprep.subr.mxu0 0.0
    %677 = vmatpush1.msra.mxu0 0.0
    %678 = vmatprep.subr.mxu0 0.0
    %679 = vmatpush1.msra.mxu0 0.0
    %680 = vmatprep.subr.mxu0 0.0
    %681 = vmatpush1.msra.mxu0 0.0
    %682 = vmatprep.subr.mxu0 0.0
    %683 = vmatpush1.msra.mxu0 0.0
    %684 = vmatprep.subr.mxu0 0.0
    %685 = vmatpush1.msra.mxu0 0.0
    %686 = vmatprep.subr.mxu0 0.0
    %687 = vmatpush1.msra.mxu0 0.0
    %688 = vmatprep.subr.mxu0 0.0
    %689 = vmatpush1.msra.mxu0 0.0
    %690 = vmatprep.subr.mxu0 0.0
    %691 = vmatpush1.msra.mxu0 0.0
    %692 = vmatprep.subr.mxu0 0.0
    %693 = vmatpush1.msra.mxu0 0.0
    %694 = vmatprep.subr.mxu0 0.0
    %695 = vmatpush1.msra.mxu0 0.0
    %696 = vmatprep.subr.mxu0 0.0
    %697 = vmatpush1.msra.mxu0 0.0
    %698 = vmatprep.subr.mxu0 0.0
    %699 = vmatpush1.msra.mxu0 0.0
    %700 = vmatprep.subr.mxu0 0.0
    %701 = vmatpush1.msra.mxu0 0.0
    %702 = vmatprep.subr.mxu0 0.0
    %703 = vmatpush1.msra.mxu0 0.0
    %704 = vmatprep.subr.mxu0 0.0
    %705 = vmatpush1.msra.mxu0 0.0
    %706 = vmatprep.subr.mxu0 0.0
    %707 = vmatpush1.msra.mxu0 0.0
    %708 = vmatprep.subr.mxu0 0.0
    %709 = vmatpush1.msra.mxu0 0.0
    %710 = vmatprep.mubr.f32.mxu0 0.0
    %711 = vmatmul.mubr.f32.gmra.mrb[0].mxu0 %v574
    %v712 = vpop.f32.mrb[0].mxu0
    %v713 = vadd.f32 0.0, %v712
    %v714 = vpop.f32.mrb[0].mxu0
    %715 = vdwg.mxu0
    %v717 = vlaneseq
    %v718 = vshrl.u32 %v717, 7
    %v719 = vsub.s32 0, %v718
    %v720 = vrot.slane %v571, %v719
    %722 = vmatprep.subr.mxu0 0.0
    %723 = vmatpush1.msra.mxu0 %v567
    %724 = vmatprep.subr.mxu0 0.0
    %725 = vmatpush1.msra.mxu0 %v568
    %726 = vmatprep.subr.mxu0 0.0
    %727 = vmatpush1.msra.mxu0 %v569
    %728 = vmatprep.subr.mxu0 0.0
    %729 = vmatpush1.msra.mxu0 %v570
    %730 = vmatprep.subr.mxu0 0.0
    %731 = vmatpush1.msra.mxu0 0.0
    %732 = vmatprep.subr.mxu0 0.0
    %733 = vmatpush1.msra.mxu0 0.0
    %734 = vmatprep.subr.mxu0 0.0
    %735 = vmatpush1.msra.mxu0 0.0
    %736 = vmatprep.subr.mxu0 0.0
    %737 = vmatpush1.msra.mxu0 0.0
    %738 = vmatprep.subr.mxu0 0.0
    %739 = vmatpush1.msra.mxu0 0.0
    %740 = vmatprep.subr.mxu0 0.0
    %741 = vmatpush1.msra.mxu0 0.0
    %742 = vmatprep.subr.mxu0 0.0
    %743 = vmatpush1.msra.mxu0 0.0
    %744 = vmatprep.subr.mxu0 0.0
    %745 = vmatpush1.msra.mxu0 0.0
    %746 = vmatprep.subr.mxu0 0.0
    %747 = vmatpush1.msra.mxu0 0.0
    %748 = vmatprep.subr.mxu0 0.0
    %749 = vmatpush1.msra.mxu0 0.0
    %750 = vmatprep.subr.mxu0 0.0
    %751 = vmatpush1.msra.mxu0 0.0
    %752 = vmatprep.subr.mxu0 0.0
    %753 = vmatpush1.msra.mxu0 0.0
    %754 = vmatprep.subr.mxu0 0.0
    %755 = vmatpush1.msra.mxu0 0.0
    %756 = vmatprep.subr.mxu0 0.0
    %757 = vmatpush1.msra.mxu0 0.0
    %758 = vmatprep.subr.mxu0 0.0
    %759 = vmatpush1.msra.mxu0 0.0
    %760 = vmatprep.subr.mxu0 0.0
    %761 = vmatpush1.msra.mxu0 0.0
    %762 = vmatprep.subr.mxu0 0.0
    %763 = vmatpush1.msra.mxu0 0.0
    %764 = vmatprep.subr.mxu0 0.0
    %765 = vmatpush1.msra.mxu0 0.0
    %766 = vmatprep.subr.mxu0 0.0
    %767 = vmatpush1.msra.mxu0 0.0
    %768 = vmatprep.subr.mxu0 0.0
    %769 = vmatpush1.msra.mxu0 0.0
    %770 = vmatprep.subr.mxu0 0.0
    %771 = vmatpush1.msra.mxu0 0.0
    %772 = vmatprep.subr.mxu0 0.0
    %773 = vmatpush1.msra.mxu0 0.0
    %774 = vmatprep.subr.mxu0 0.0
    %775 = vmatpush1.msra.mxu0 0.0
    %776 = vmatprep.subr.mxu0 0.0
    %777 = vmatpush1.msra.mxu0 0.0
    %778 = vmatprep.subr.mxu0 0.0
    %779 = vmatpush1.msra.mxu0 0.0
    %780 = vmatprep.subr.mxu0 0.0
    %781 = vmatpush1.msra.mxu0 0.0
    %782 = vmatprep.subr.mxu0 0.0
    %783 = vmatpush1.msra.mxu0 0.0
    %784 = vmatprep.subr.mxu0 0.0
    %785 = vmatpush1.msra.mxu0 0.0
    %786 = vmatprep.mubr.f32.mxu0 0.0
    %787 = vmatmul.mubr.f32.gmra.mrb[0].mxu0 %v574
    %v788 = vpop.f32.mrb[0].mxu0
    %v789 = vadd.f32 %v720, %v788
    %v790 = vpop.f32.mrb[0].mxu0
    %791 = vdwg.mxu0
    %v793 = vrot.slane %v643, 1
    %v796 = vadd.f32 %v372, %v643
    %v797 = vadd.f32 %v377, %v793
    %v798 = vxor.u32 %v796, 2147483648
    %v799 = vxor.u32 %v797, 2147483648
    %v800 = vmul.f32 %v798, 1.442695
    %v801 = vpow.pop %v800
    %v802 = vmul.f32 %v799, 1.442695
    %v803 = vpow.pop %v802
    %v804 = vadd.f32 %v801, 1.0
    %v805 = vadd.f32 %v803, 1.0
    %v806 = vrcp.pop %v804
    %v807 = vmul.f32 1.0, %v806
    %v808 = vrcp.pop %v805
    %v809 = vmul.f32 1.0, %v808
    %v811 = vrot.slane %v713, 1
    %v814 = vadd.f32 %v458, %v713
    %v815 = vadd.f32 %v463, %v811
    %v816 = vxor.u32 %v814, 2147483648
    %v817 = vxor.u32 %v815, 2147483648
    %v818 = vmul.f32 %v816, 1.442695
    %v819 = vpow.pop %v818
    %v820 = vmul.f32 %v817, 1.442695
    %v821 = vpow.pop %v820
    %v822 = vadd.f32 %v819, 1.0
    %v823 = vadd.f32 %v821, 1.0
    %v824 = vrcp.pop %v822
    %v825 = vmul.f32 1.0, %v824
    %v826 = vrcp.pop %v823
    %v827 = vmul.f32 1.0, %v826
    %v829 = vrot.slane %v789, 1
    %v832 = vmul.f32 %v807, %v789
    %v833 = vmul.f32 %v809, %v829
    %v834 = vadd.f32 %v544, %v832
    %v835 = vadd.f32 %v549, %v833
    %v836 = vtanh.pop %v834
    %v837 = vtanh.pop %v835
    %v838 = vsub.f32 1.0, %v825
    %v839 = vsub.f32 1.0, %v827
    %v840 = vmul.f32 %v838, %v836
    %v841 = vmul.f32 %v839, %v837
    %v842 = vrot.slane %v572, 1
    %v845 = vmul.f32 %v825, %v572
    %v846 = vmul.f32 %v827, %v842
    %v847 = vadd.f32 %v840, %v845
    %v848 = vadd.f32 %v841, %v846
    %v849 = vsel %vm558, 1, 0
    %850 = vset.pattern.permute.xlu0 0
    %851 = vperm.xlu0 %850, %v849
    %v852 = vpop.permute.xlu0 %851
    %vm853 = vcmp.eq.s32.totalorder %v852, 1
    %v856 = vrot.slane %v848, 7
    %vm857 = vcmask 1041409
    %v858 = vsel %vm857, %v856, %v847
    %v860 = vsel %vm853, %v858, %v572
    %v862 = vsel %vm204, %v860, 0
    %864 = vmatprep.subr.mxu0 0.0
    %865 = vmatpush1.msra.mxu0 %v559
    %866 = vmatprep.subr.mxu0 0.0
    %867 = vmatpush1.msra.mxu0 %v560
    %868 = vmatprep.subr.mxu0 0.0
    %869 = vmatpush1.msra.mxu0 %v561
    %870 = vmatprep.subr.mxu0 0.0
    %871 = vmatpush1.msra.mxu0 %v562
    %872 = vmatprep.subr.mxu0 0.0
    %873 = vmatpush1.msra.mxu0 0.0
    %874 = vmatprep.subr.mxu0 0.0
    %875 = vmatpush1.msra.mxu0 0.0
    %876 = vmatprep.subr.mxu0 0.0
    %877 = vmatpush1.msra.mxu0 0.0
    %878 = vmatprep.subr.mxu0 0.0
    %879 = vmatpush1.msra.mxu0 0.0
    %880 = vmatprep.subr.mxu0 0.0
    %881 = vmatpush1.msra.mxu0 0.0
    %882 = vmatprep.subr.mxu0 0.0
    %883 = vmatpush1.msra.mxu0 0.0
    %884 = vmatprep.subr.mxu0 0.0
    %885 = vmatpush1.msra.mxu0 0.0
    %886 = vmatprep.subr.mxu0 0.0
    %887 = vmatpush1.msra.mxu0 0.0
    %888 = vmatprep.subr.mxu0 0.0
    %889 = vmatpush1.msra.mxu0 0.0
    %890 = vmatprep.subr.mxu0 0.0
    %891 = vmatpush1.msra.mxu0 0.0
    %892 = vmatprep.subr.mxu0 0.0
    %893 = vmatpush1.msra.mxu0 0.0
    %894 = vmatprep.subr.mxu0 0.0
    %895 = vmatpush1.msra.mxu0 0.0
    %896 = vmatprep.subr.mxu0 0.0
    %897 = vmatpush1.msra.mxu0 0.0
    %898 = vmatprep.subr.mxu0 0.0
    %899 = vmatpush1.msra.mxu0 0.0
    %900 = vmatprep.subr.mxu0 0.0
    %901 = vmatpush1.msra.mxu0 0.0
    %902 = vmatprep.subr.mxu0 0.0
    %903 = vmatpush1.msra.mxu0 0.0
    %904 = vmatprep.subr.mxu0 0.0
    %905 = vmatpush1.msra.mxu0 0.0
    %906 = vmatprep.subr.mxu0 0.0
    %907 = vmatpush1.msra.mxu0 0.0
    %908 = vmatprep.subr.mxu0 0.0
    %909 = vmatpush1.msra.mxu0 0.0
    %910 = vmatprep.subr.mxu0 0.0
    %911 = vmatpush1.msra.mxu0 0.0
    %912 = vmatprep.subr.mxu0 0.0
    %913 = vmatpush1.msra.mxu0 0.0
    %914 = vmatprep.subr.mxu0 0.0
    %915 = vmatpush1.msra.mxu0 0.0
    %916 = vmatprep.subr.mxu0 0.0
    %917 = vmatpush1.msra.mxu0 0.0
    %918 = vmatprep.subr.mxu0 0.0
    %919 = vmatpush1.msra.mxu0 0.0
    %920 = vmatprep.subr.mxu0 0.0
    %921 = vmatpush1.msra.mxu0 0.0
    %922 = vmatprep.subr.mxu0 0.0
    %923 = vmatpush1.msra.mxu0 0.0
    %924 = vmatprep.subr.mxu0 0.0
    %925 = vmatpush1.msra.mxu0 0.0
    %926 = vmatprep.subr.mxu0 0.0
    %927 = vmatpush1.msra.mxu0 0.0
    %928 = vmatprep.mubr.f32.mxu0 0.0
    %929 = vmatmul.mubr.f32.gmra.mrb[0].mxu0 %v862
    %v930 = vpop.f32.mrb[0].mxu0
    %v931 = vadd.f32 0.0, %v930
    %v932 = vpop.f32.mrb[0].mxu0
    %933 = vdwg.mxu0
    %934 = vmatprep.subr.mxu0 0.0
    %935 = vmatpush1.msra.mxu0 %v563
    %936 = vmatprep.subr.mxu0 0.0
    %937 = vmatpush1.msra.mxu0 %v564
    %938 = vmatprep.subr.mxu0 0.0
    %939 = vmatpush1.msra.mxu0 %v565
    %940 = vmatprep.subr.mxu0 0.0
    %941 = vmatpush1.msra.mxu0 %v566
    %942 = vmatprep.subr.mxu0 0.0
    %943 = vmatpush1.msra.mxu0 0.0
    %944 = vmatprep.subr.mxu0 0.0
    %945 = vmatpush1.msra.mxu0 0.0
    %946 = vmatprep.subr.mxu0 0.0
    %947 = vmatpush1.msra.mxu0 0.0
    %948 = vmatprep.subr.mxu0 0.0
    %949 = vmatpush1.msra.mxu0 0.0
    %950 = vmatprep.subr.mxu0 0.0
    %951 = vmatpush1.msra.mxu0 0.0
    %952 = vmatprep.subr.mxu0 0.0
    %953 = vmatpush1.msra.mxu0 0.0
    %954 = vmatprep.subr.mxu0 0.0
    %955 = vmatpush1.msra.mxu0 0.0
    %956 = vmatprep.subr.mxu0 0.0
    %957 = vmatpush1.msra.mxu0 0.0
    %958 = vmatprep.subr.mxu0 0.0
    %959 = vmatpush1.msra.mxu0 0.0
    %960 = vmatprep.subr.mxu0 0.0
    %961 = vmatpush1.msra.mxu0 0.0
    %962 = vmatprep.subr.mxu0 0.0
    %963 = vmatpush1.msra.mxu0 0.0
    %964 = vmatprep.subr.mxu0 0.0
    %965 = vmatpush1.msra.mxu0 0.0
    %966 = vmatprep.subr.mxu0 0.0
    %967 = vmatpush1.msra.mxu0 0.0
    %968 = vmatprep.subr.mxu0 0.0
    %969 = vmatpush1.msra.mxu0 0.0
    %970 = vmatprep.subr.mxu0 0.0
    %971 = vmatpush1.msra.mxu0 0.0
    %972 = vmatprep.subr.mxu0 0.0
    %973 = vmatpush1.msra.mxu0 0.0
    %974 = vmatprep.subr.mxu0 0.0
    %975 = vmatpush1.msra.mxu0 0.0
    %976 = vmatprep.subr.mxu0 0.0
    %977 = vmatpush1.msra.mxu0 0.0
    %978 = vmatprep.subr.mxu0 0.0
    %979 = vmatpush1.msra.mxu0 0.0
    %980 = vmatprep.subr.mxu0 0.0
    %981 = vmatpush1.msra.mxu0 0.0
    %982 = vmatprep.subr.mxu0 0.0
    %983 = vmatpush1.msra.mxu0 0.0
    %984 = vmatprep.subr.mxu0 0.0
    %985 = vmatpush1.msra.mxu0 0.0
    %986 = vmatprep.subr.mxu0 0.0
    %987 = vmatpush1.msra.mxu0 0.0
    %988 = vmatprep.subr.mxu0 0.0
    %989 = vmatpush1.msra.mxu0 0.0
    %990 = vmatprep.subr.mxu0 0.0
    %991 = vmatpush1.msra.mxu0 0.0
    %992 = vmatprep.subr.mxu0 0.0
    %993 = vmatpush1.msra.mxu0 0.0
    %994 = vmatprep.subr.mxu0 0.0
    %995 = vmatpush1.msra.mxu0 0.0
    %996 = vmatprep.subr.mxu0 0.0
    %997 = vmatpush1.msra.mxu0 0.0
    %998 = vmatprep.mubr.f32.mxu0 0.0
    %999 = vmatmul.mubr.f32.gmra.mrb[0].mxu0 %v862
    %v1000 = vpop.f32.mrb[0].mxu0
    %v1001 = vadd.f32 0.0, %v1000
    %v1002 = vpop.f32.mrb[0].mxu0
    %1003 = vdwg.mxu0
    %1004 = vmatprep.subr.mxu0 0.0
    %1005 = vmatpush1.msra.mxu0 %v567
    %1006 = vmatprep.subr.mxu0 0.0
    %1007 = vmatpush1.msra.mxu0 %v568
    %1008 = vmatprep.subr.mxu0 0.0
    %1009 = vmatpush1.msra.mxu0 %v569
    %1010 = vmatprep.subr.mxu0 0.0
    %1011 = vmatpush1.msra.mxu0 %v570
    %1012 = vmatprep.subr.mxu0 0.0
    %1013 = vmatpush1.msra.mxu0 0.0
    %1014 = vmatprep.subr.mxu0 0.0
    %1015 = vmatpush1.msra.mxu0 0.0
    %1016 = vmatprep.subr.mxu0 0.0
    %1017 = vmatpush1.msra.mxu0 0.0
    %1018 = vmatprep.subr.mxu0 0.0
    %1019 = vmatpush1.msra.mxu0 0.0
    %1020 = vmatprep.subr.mxu0 0.0
    %1021 = vmatpush1.msra.mxu0 0.0
    %1022 = vmatprep.subr.mxu0 0.0
    %1023 = vmatpush1.msra.mxu0 0.0
    %1024 = vmatprep.subr.mxu0 0.0
    %1025 = vmatpush1.msra.mxu0 0.0
    %1026 = vmatprep.subr.mxu0 0.0
    %1027 = vmatpush1.msra.mxu0 0.0
    %1028 = vmatprep.subr.mxu0 0.0
    %1029 = vmatpush1.msra.mxu0 0.0
    %1030 = vmatprep.subr.mxu0 0.0
    %1031 = vmatpush1.msra.mxu0 0.0
    %1032 = vmatprep.subr.mxu0 0.0
    %1033 = vmatpush1.msra.mxu0 0.0
    %1034 = vmatprep.subr.mxu0 0.0
    %1035 = vmatpush1.msra.mxu0 0.0
    %1036 = vmatprep.subr.mxu0 0.0
    %1037 = vmatpush1.msra.mxu0 0.0
    %1038 = vmatprep.subr.mxu0 0.0
    %1039 = vmatpush1.msra.mxu0 0.0
    %1040 = vmatprep.subr.mxu0 0.0
    %1041 = vmatpush1.msra.mxu0 0.0
    %1042 = vmatprep.subr.mxu0 0.0
    %1043 = vmatpush1.msra.mxu0 0.0
    %1044 = vmatprep.subr.mxu0 0.0
    %1045 = vmatpush1.msra.mxu0 0.0
    %1046 = vmatprep.subr.mxu0 0.0
    %1047 = vmatpush1.msra.mxu0 0.0
    %1048 = vmatprep.subr.mxu0 0.0
    %1049 = vmatpush1.msra.mxu0 0.0
    %1050 = vmatprep.subr.mxu0 0.0
    %1051 = vmatpush1.msra.mxu0 0.0
    %1052 = vmatprep.subr.mxu0 0.0
    %1053 = vmatpush1.msra.mxu0 0.0
    %1054 = vmatprep.subr.mxu0 0.0
    %1055 = vmatpush1.msra.mxu0 0.0
    %1056 = vmatprep.subr.mxu0 0.0
    %1057 = vmatpush1.msra.mxu0 0.0
    %1058 = vmatprep.subr.mxu0 0.0
    %1059 = vmatpush1.msra.mxu0 0.0
    %1060 = vmatprep.subr.mxu0 0.0
    %1061 = vmatpush1.msra.mxu0 0.0
    %1062 = vmatprep.subr.mxu0 0.0
    %1063 = vmatpush1.msra.mxu0 0.0
    %1064 = vmatprep.subr.mxu0 0.0
    %1065 = vmatpush1.msra.mxu0 0.0
    %1066 = vmatprep.subr.mxu0 0.0
    %1067 = vmatpush1.msra.mxu0 0.0
    %1068 = vmatprep.mubr.f32.mxu0 0.0
    %1069 = vmatmul.mubr.f32.gmra.mrb[0].mxu0 %v862
    %v1070 = vpop.f32.mrb[0].mxu0
    %v1071 = vadd.f32 %v720, %v1070
    %v1072 = vpop.f32.mrb[0].mxu0
    %1073 = vdwg.mxu0
    %v1075 = vrot.slane %v931, 7
    %v1078 = vadd.f32 %v372, %v1075
    %v1079 = vadd.f32 %v377, %v931
    %v1080 = vxor.u32 %v1078, 2147483648
    %v1081 = vxor.u32 %v1079, 2147483648
    %v1082 = vmul.f32 %v1080, 1.442695
    %v1083 = vpow.pop %v1082
    %v1084 = vmul.f32 %v1081, 1.442695
    %v1085 = vpow.pop %v1084
    %v1086 = vadd.f32 %v1083, 1.0
    %v1087 = vadd.f32 %v1085, 1.0
    %v1088 = vrcp.pop %v1086
    %v1089 = vmul.f32 1.0, %v1088
    %v1090 = vrcp.pop %v1087
    %v1091 = vmul.f32 1.0, %v1090
    %v1093 = vrot.slane %v1001, 7
    %v1096 = vadd.f32 %v458, %v1093
    %v1097 = vadd.f32 %v463, %v1001
    %v1098 = vxor.u32 %v1096, 2147483648
    %v1099 = vxor.u32 %v1097, 2147483648
    %v1100 = vmul.f32 %v1098, 1.442695
    %v1101 = vpow.pop %v1100
    %v1102 = vmul.f32 %v1099, 1.442695
    %v1103 = vpow.pop %v1102
    %v1104 = vadd.f32 %v1101, 1.0
    %v1105 = vadd.f32 %v1103, 1.0
    %v1106 = vrcp.pop %v1104
    %v1107 = vmul.f32 1.0, %v1106
    %v1108 = vrcp.pop %v1105
    %v1109 = vmul.f32 1.0, %v1108
    %v1111 = vrot.slane %v1071, 7
    %v1114 = vmul.f32 %v1089, %v1111
    %v1115 = vmul.f32 %v1091, %v1071
    %v1116 = vadd.f32 %v544, %v1114
    %v1117 = vadd.f32 %v549, %v1115
    %v1118 = vtanh.pop %v1116
    %v1119 = vtanh.pop %v1117
    %v1120 = vsub.f32 1.0, %v1107
    %v1121 = vsub.f32 1.0, %v1109
    %v1122 = vmul.f32 %v1120, %v1118
    %v1123 = vmul.f32 %v1121, %v1119
    %v1124 = vrot.slane %v860, 7
    %v1127 = vmul.f32 %v1107, %v1124
    %v1128 = vmul.f32 %v1109, %v860
    %v1129 = vadd.f32 %v1122, %v1127
    %v1130 = vadd.f32 %v1123, %v1128
    %1131 = vset.pattern.permute.xlu0 1
    %1132 = vperm.xlu0 %1131, %v849
    %v1133 = vpop.permute.xlu0 %1132
    %vm1134 = vcmp.eq.s32.totalorder %v1133, 1
    %v1137 = vrot.slane %v1129, 1
    %v1138 = vsel %vm857, %v1130, %v1137
    %v1140 = vsel %vm1134, %v1138, %v860
    %v1142 = vsel %vm204, %v1140, 0
    %1144 = vmatprep.subr.mxu0 0.0
    %1145 = vmatpush1.msra.mxu0 %v559
    %1146 = vmatprep.subr.mxu0 0.0
    %1147 = vmatpush1.msra.mxu0 %v560
    %1148 = vmatprep.subr.mxu0 0.0
    %1149 = vmatpush1.msra.mxu0 %v561
    %1150 = vmatprep.subr.mxu0 0.0
    %1151 = vmatpush1.msra.mxu0 %v562
    %1152 = vmatprep.subr.mxu0 0.0
    %1153 = vmatpush1.msra.mxu0 0.0
    %1154 = vmatprep.subr.mxu0 0.0
    %1155 = vmatpush1.msra.mxu0 0.0
    %1156 = vmatprep.subr.mxu0 0.0
    %1157 = vmatpush1.msra.mxu0 0.0
    %1158 = vmatprep.subr.mxu0 0.0
    %1159 = vmatpush1.msra.mxu0 0.0
    %1160 = vmatprep.subr.mxu0 0.0
    %1161 = vmatpush1.msra.mxu0 0.0
    %1162 = vmatprep.subr.mxu0 0.0
    %1163 = vmatpush1.msra.mxu0 0.0
    %1164 = vmatprep.subr.mxu0 0.0
    %1165 = vmatpush1.msra.mxu0 0.0
    %1166 = vmatprep.subr.mxu0 0.0
    %1167 = vmatpush1.msra.mxu0 0.0
    %1168 = vmatprep.subr.mxu0 0.0
    %1169 = vmatpush1.msra.mxu0 0.0
    %1170 = vmatprep.subr.mxu0 0.0
    %1171 = vmatpush1.msra.mxu0 0.0
    %1172 = vmatprep.subr.mxu0 0.0
    %1173 = vmatpush1.msra.mxu0 0.0
    %1174 = vmatprep.subr.mxu0 0.0
    %1175 = vmatpush1.msra.mxu0 0.0
    %1176 = vmatprep.subr.mxu0 0.0
    %1177 = vmatpush1.msra.mxu0 0.0
    %1178 = vmatprep.subr.mxu0 0.0
    %1179 = vmatpush1.msra.mxu0 0.0
    %1180 = vmatprep.subr.mxu0 0.0
    %1181 = vmatpush1.msra.mxu0 0.0
    %1182 = vmatprep.subr.mxu0 0.0
    %1183 = vmatpush1.msra.mxu0 0.0
    %1184 = vmatprep.subr.mxu0 0.0
    %1185 = vmatpush1.msra.mxu0 0.0
    %1186 = vmatprep.subr.mxu0 0.0
    %1187 = vmatpush1.msra.mxu0 0.0
    %1188 = vmatprep.subr.mxu0 0.0
    %1189 = vmatpush1.msra.mxu0 0.0
    %1190 = vmatprep.subr.mxu0 0.0
    %1191 = vmatpush1.msra.mxu0 0.0
    %1192 = vmatprep.subr.mxu0 0.0
    %1193 = vmatpush1.msra.mxu0 0.0
    %1194 = vmatprep.subr.mxu0 0.0
    %1195 = vmatpush1.msra.mxu0 0.0
    %1196 = vmatprep.subr.mxu0 0.0
    %1197 = vmatpush1.msra.mxu0 0.0
    %1198 = vmatprep.subr.mxu0 0.0
    %1199 = vmatpush1.msra.mxu0 0.0
    %1200 = vmatprep.subr.mxu0 0.0
    %1201 = vmatpush1.msra.mxu0 0.0
    %1202 = vmatprep.subr.mxu0 0.0
    %1203 = vmatpush1.msra.mxu0 0.0
    %1204 = vmatprep.subr.mxu0 0.0
    %1205 = vmatpush1.msra.mxu0 0.0
    %1206 = vmatprep.subr.mxu0 0.0
    %1207 = vmatpush1.msra.mxu0 0.0
    %1208 = vmatprep.mubr.f32.mxu0 0.0
    %1209 = vmatmul.mubr.f32.gmra.mrb[0].mxu0 %v1142
    %v1210 = vpop.f32.mrb[0].mxu0
    %v1211 = vadd.f32 0.0, %v1210
    %v1212 = vpop.f32.mrb[0].mxu0
    %1213 = vdwg.mxu0
    %1214 = vmatprep.subr.mxu0 0.0
    %1215 = vmatpush1.msra.mxu0 %v563
    %1216 = vmatprep.subr.mxu0 0.0
    %1217 = vmatpush1.msra.mxu0 %v564
    %1218 = vmatprep.subr.mxu0 0.0
    %1219 = vmatpush1.msra.mxu0 %v565
    %1220 = vmatprep.subr.mxu0 0.0
    %1221 = vmatpush1.msra.mxu0 %v566
    %1222 = vmatprep.subr.mxu0 0.0
    %1223 = vmatpush1.msra.mxu0 0.0
    %1224 = vmatprep.subr.mxu0 0.0
    %1225 = vmatpush1.msra.mxu0 0.0
    %1226 = vmatprep.subr.mxu0 0.0
    %1227 = vmatpush1.msra.mxu0 0.0
    %1228 = vmatprep.subr.mxu0 0.0
    %1229 = vmatpush1.msra.mxu0 0.0
    %1230 = vmatprep.subr.mxu0 0.0
    %1231 = vmatpush1.msra.mxu0 0.0
    %1232 = vmatprep.subr.mxu0 0.0
    %1233 = vmatpush1.msra.mxu0 0.0
    %1234 = vmatprep.subr.mxu0 0.0
    %1235 = vmatpush1.msra.mxu0 0.0
    %1236 = vmatprep.subr.mxu0 0.0
    %1237 = vmatpush1.msra.mxu0 0.0
    %1238 = vmatprep.subr.mxu0 0.0
    %1239 = vmatpush1.msra.mxu0 0.0
    %1240 = vmatprep.subr.mxu0 0.0
    %1241 = vmatpush1.msra.mxu0 0.0
    %1242 = vmatprep.subr.mxu0 0.0
    %1243 = vmatpush1.msra.mxu0 0.0
    %1244 = vmatprep.subr.mxu0 0.0
    %1245 = vmatpush1.msra.mxu0 0.0
    %1246 = vmatprep.subr.mxu0 0.0
    %1247 = vmatpush1.msra.mxu0 0.0
    %1248 = vmatprep.subr.mxu0 0.0
    %1249 = vmatpush1.msra.mxu0 0.0
    %1250 = vmatprep.subr.mxu0 0.0
    %1251 = vmatpush1.msra.mxu0 0.0
    %1252 = vmatprep.subr.mxu0 0.0
    %1253 = vmatpush1.msra.mxu0 0.0
    %1254 = vmatprep.subr.mxu0 0.0
    %1255 = vmatpush1.msra.mxu0 0.0
    %1256 = vmatprep.subr.mxu0 0.0
    %1257 = vmatpush1.msra.mxu0 0.0
    %1258 = vmatprep.subr.mxu0 0.0
    %1259 = vmatpush1.msra.mxu0 0.0
    %1260 = vmatprep.subr.mxu0 0.0
    %1261 = vmatpush1.msra.mxu0 0.0
    %1262 = vmatprep.subr.mxu0 0.0
    %1263 = vmatpush1.msra.mxu0 0.0
    %1264 = vmatprep.subr.mxu0 0.0
    %1265 = vmatpush1.msra.mxu0 0.0
    %1266 = vmatprep.subr.mxu0 0.0
    %1267 = vmatpush1.msra.mxu0 0.0
    %1268 = vmatprep.subr.mxu0 0.0
    %1269 = vmatpush1.msra.mxu0 0.0
    %1270 = vmatprep.subr.mxu0 0.0
    %1271 = vmatpush1.msra.mxu0 0.0
    %1272 = vmatprep.subr.mxu0 0.0
    %1273 = vmatpush1.msra.mxu0 0.0
    %1274 = vmatprep.subr.mxu0 0.0
    %1275 = vmatpush1.msra.mxu0 0.0
    %1276 = vmatprep.subr.mxu0 0.0
    %1277 = vmatpush1.msra.mxu0 0.0
    %1278 = vmatprep.mubr.f32.mxu0 0.0
    %1279 = vmatmul.mubr.f32.gmra.mrb[0].mxu0 %v1142
    %v1280 = vpop.f32.mrb[0].mxu0
    %v1281 = vadd.f32 0.0, %v1280
    %v1282 = vpop.f32.mrb[0].mxu0
    %1283 = vdwg.mxu0
    %1284 = vmatprep.subr.mxu0 0.0
    %1285 = vmatpush1.msra.mxu0 %v567
    %1286 = vmatprep.subr.mxu0 0.0
    %1287 = vmatpush1.msra.mxu0 %v568
    %1288 = vmatprep.subr.mxu0 0.0
    %1289 = vmatpush1.msra.mxu0 %v569
    %1290 = vmatprep.subr.mxu0 0.0
    %1291 = vmatpush1.msra.mxu0 %v570
    %1292 = vmatprep.subr.mxu0 0.0
    %1293 = vmatpush1.msra.mxu0 0.0
    %1294 = vmatprep.subr.mxu0 0.0
    %1295 = vmatpush1.msra.mxu0 0.0
    %1296 = vmatprep.subr.mxu0 0.0
    %1297 = vmatpush1.msra.mxu0 0.0
    %1298 = vmatprep.subr.mxu0 0.0
    %1299 = vmatpush1.msra.mxu0 0.0
    %1300 = vmatprep.subr.mxu0 0.0
    %1301 = vmatpush1.msra.mxu0 0.0
    %1302 = vmatprep.subr.mxu0 0.0
    %1303 = vmatpush1.msra.mxu0 0.0
    %1304 = vmatprep.subr.mxu0 0.0
    %1305 = vmatpush1.msra.mxu0 0.0
    %1306 = vmatprep.subr.mxu0 0.0
    %1307 = vmatpush1.msra.mxu0 0.0
    %1308 = vmatprep.subr.mxu0 0.0
    %1309 = vmatpush1.msra.mxu0 0.0
    %1310 = vmatprep.subr.mxu0 0.0
    %1311 = vmatpush1.msra.mxu0 0.0
    %1312 = vmatprep.subr.mxu0 0.0
    %1313 = vmatpush1.msra.mxu0 0.0
    %1314 = vmatprep.subr.mxu0 0.0
    %1315 = vmatpush1.msra.mxu0 0.0
    %1316 = vmatprep.subr.mxu0 0.0
    %1317 = vmatpush1.msra.mxu0 0.0
    %1318 = vmatprep.subr.mxu0 0.0
    %1319 = vmatpush1.msra.mxu0 0.0
    %1320 = vmatprep.subr.mxu0 0.0
    %1321 = vmatpush1.msra.mxu0 0.0
    %1322 = vmatprep.subr.mxu0 0.0
    %1323 = vmatpush1.msra.mxu0 0.0
    %1324 = vmatprep.subr.mxu0 0.0
    %1325 = vmatpush1.msra.mxu0 0.0
    %1326 = vmatprep.subr.mxu0 0.0
    %1327 = vmatpush1.msra.mxu0 0.0
    %1328 = vmatprep.subr.mxu0 0.0
    %1329 = vmatpush1.msra.mxu0 0.0
    %1330 = vmatprep.subr.mxu0 0.0
    %1331 = vmatpush1.msra.mxu0 0.0
    %1332 = vmatprep.subr.mxu0 0.0
    %1333 = vmatpush1.msra.mxu0 0.0
    %1334 = vmatprep.subr.mxu0 0.0
    %1335 = vmatpush1.msra.mxu0 0.0
    %1336 = vmatprep.subr.mxu0 0.0
    %1337 = vmatpush1.msra.mxu0 0.0
    %1338 = vmatprep.subr.mxu0 0.0
    %1339 = vmatpush1.msra.mxu0 0.0
    %1340 = vmatprep.subr.mxu0 0.0
    %1341 = vmatpush1.msra.mxu0 0.0
    %1342 = vmatprep.subr.mxu0 0.0
    %1343 = vmatpush1.msra.mxu0 0.0
    %1344 = vmatprep.subr.mxu0 0.0
    %1345 = vmatpush1.msra.mxu0 0.0
    %1346 = vmatprep.subr.mxu0 0.0
    %1347 = vmatpush1.msra.mxu0 0.0
    %1348 = vmatprep.mubr.f32.mxu0 0.0
    %1349 = vmatmul.mubr.f32.gmra.mrb[0].mxu0 %v1142
    %v1350 = vpop.f32.mrb[0].mxu0
    %v1351 = vadd.f32 %v720, %v1350
    %v1352 = vpop.f32.mrb[0].mxu0
    %1353 = vdwg.mxu0
    %v1355 = vrot.slane %v1211, 6
    %v1356 = vrot.slane %v1211, 7
    %v1359 = vadd.f32 %v372, %v1355
    %v1360 = vadd.f32 %v377, %v1356
    %v1361 = vxor.u32 %v1359, 2147483648
    %v1362 = vxor.u32 %v1360, 2147483648
    %v1363 = vmul.f32 %v1361, 1.442695
    %v1364 = vpow.pop %v1363
    %v1365 = vmul.f32 %v1362, 1.442695
    %v1366 = vpow.pop %v1365
    %v1367 = vadd.f32 %v1364, 1.0
    %v1368 = vadd.f32 %v1366, 1.0
    %v1369 = vrcp.pop %v1367
    %v1370 = vmul.f32 1.0, %v1369
    %v1371 = vrcp.pop %v1368
    %v1372 = vmul.f32 1.0, %v1371
    %v1374 = vrot.slane %v1281, 6
    %v1375 = vrot.slane %v1281, 7
    %v1378 = vadd.f32 %v458, %v1374
    %v1379 = vadd.f32 %v463, %v1375
    %v1380 = vxor.u32 %v1378, 2147483648
    %v1381 = vxor.u32 %v1379, 2147483648
    %v1382 = vmul.f32 %v1380, 1.442695
    %v1383 = vpow.pop %v1382
    %v1384 = vmul.f32 %v1381, 1.442695
    %v1385 = vpow.pop %v1384
    %v1386 = vadd.f32 %v1383, 1.0
    %v1387 = vadd.f32 %v1385, 1.0
    %v1388 = vrcp.pop %v1386
    %v1389 = vmul.f32 1.0, %v1388
    %v1390 = vrcp.pop %v1387
    %v1391 = vmul.f32 1.0, %v1390
    %v1393 = vrot.slane %v1351, 6
    %v1394 = vrot.slane %v1351, 7
    %v1397 = vmul.f32 %v1370, %v1393
    %v1398 = vmul.f32 %v1372, %v1394
    %v1399 = vadd.f32 %v544, %v1397
    %v1400 = vadd.f32 %v549, %v1398
    %v1401 = vtanh.pop %v1399
    %v1402 = vtanh.pop %v1400
    %v1403 = vsub.f32 1.0, %v1389
    %v1404 = vsub.f32 1.0, %v1391
    %v1405 = vmul.f32 %v1403, %v1401
    %v1406 = vmul.f32 %v1404, %v1402
    %v1407 = vrot.slane %v1140, 6
    %v1408 = vrot.slane %v1140, 7
    %v1411 = vmul.f32 %v1389, %v1407
    %v1412 = vmul.f32 %v1391, %v1408
    %v1413 = vadd.f32 %v1405, %v1411
    %v1414 = vadd.f32 %v1406, %v1412
    %1415 = vset.pattern.permute.xlu0 2
    %1416 = vperm.xlu0 %1415, %v849
    %v1417 = vpop.permute.xlu0 %1416
    %vm1418 = vcmp.eq.s32.totalorder %v1417, 1
    %v1421 = vrot.slane %v1413, 2
    %v1422 = vrot.slane %v1414, 1
    %v1423 = vsel %vm857, %v1422, %v1421
    %v1425 = vsel %vm1418, %v1423, %v1140
    %v1427 = vsel %vm204, %v1425, 0
    %1429 = vmatprep.subr.mxu0 0.0
    %1430 = vmatpush1.msra.mxu0 %v559
    %1431 = vmatprep.subr.mxu0 0.0
    %1432 = vmatpush1.msra.mxu0 %v560
    %1433 = vmatprep.subr.mxu0 0.0
    %1434 = vmatpush1.msra.mxu0 %v561
    %1435 = vmatprep.subr.mxu0 0.0
    %1436 = vmatpush1.msra.mxu0 %v562
    %1437 = vmatprep.subr.mxu0 0.0
    %1438 = vmatpush1.msra.mxu0 0.0
    %1439 = vmatprep.subr.mxu0 0.0
    %1440 = vmatpush1.msra.mxu0 0.0
    %1441 = vmatprep.subr.mxu0 0.0
    %1442 = vmatpush1.msra.mxu0 0.0
    %1443 = vmatprep.subr.mxu0 0.0
    %1444 = vmatpush1.msra.mxu0 0.0
    %1445 = vmatprep.subr.mxu0 0.0
    %1446 = vmatpush1.msra.mxu0 0.0
    %1447 = vmatprep.subr.mxu0 0.0
    %1448 = vmatpush1.msra.mxu0 0.0
    %1449 = vmatprep.subr.mxu0 0.0
    %1450 = vmatpush1.msra.mxu0 0.0
    %1451 = vmatprep.subr.mxu0 0.0
    %1452 = vmatpush1.msra.mxu0 0.0
    %1453 = vmatprep.subr.mxu0 0.0
    %1454 = vmatpush1.msra.mxu0 0.0
    %1455 = vmatprep.subr.mxu0 0.0
    %1456 = vmatpush1.msra.mxu0 0.0
    %1457 = vmatprep.subr.mxu0 0.0
    %1458 = vmatpush1.msra.mxu0 0.0
    %1459 = vmatprep.subr.mxu0 0.0
    %1460 = vmatpush1.msra.mxu0 0.0
    %1461 = vmatprep.subr.mxu0 0.0
    %1462 = vmatpush1.msra.mxu0 0.0
    %1463 = vmatprep.subr.mxu0 0.0
    %1464 = vmatpush1.msra.mxu0 0.0
    %1465 = vmatprep.subr.mxu0 0.0
    %1466 = vmatpush1.msra.mxu0 0.0
    %1467 = vmatprep.subr.mxu0 0.0
    %1468 = vmatpush1.msra.mxu0 0.0
    %1469 = vmatprep.subr.mxu0 0.0
    %1470 = vmatpush1.msra.mxu0 0.0
    %1471 = vmatprep.subr.mxu0 0.0
    %1472 = vmatpush1.msra.mxu0 0.0
    %1473 = vmatprep.subr.mxu0 0.0
    %1474 = vmatpush1.msra.mxu0 0.0
    %1475 = vmatprep.subr.mxu0 0.0
    %1476 = vmatpush1.msra.mxu0 0.0
    %1477 = vmatprep.subr.mxu0 0.0
    %1478 = vmatpush1.msra.mxu0 0.0
    %1479 = vmatprep.subr.mxu0 0.0
    %1480 = vmatpush1.msra.mxu0 0.0
    %1481 = vmatprep.subr.mxu0 0.0
    %1482 = vmatpush1.msra.mxu0 0.0
    %1483 = vmatprep.subr.mxu0 0.0
    %1484 = vmatpush1.msra.mxu0 0.0
    %1485 = vmatprep.subr.mxu0 0.0
    %1486 = vmatpush1.msra.mxu0 0.0
    %1487 = vmatprep.subr.mxu0 0.0
    %1488 = vmatpush1.msra.mxu0 0.0
    %1489 = vmatprep.subr.mxu0 0.0
    %1490 = vmatpush1.msra.mxu0 0.0
    %1491 = vmatprep.subr.mxu0 0.0
    %1492 = vmatpush1.msra.mxu0 0.0
    %1493 = vmatprep.mubr.f32.mxu0 0.0
    %1494 = vmatmul.mubr.f32.gmra.mrb[0].mxu0 %v1427
    %v1495 = vpop.f32.mrb[0].mxu0
    %v1496 = vadd.f32 0.0, %v1495
    %v1497 = vpop.f32.mrb[0].mxu0
    %1498 = vdwg.mxu0
    %1499 = vmatprep.subr.mxu0 0.0
    %1500 = vmatpush1.msra.mxu0 %v563
    %1501 = vmatprep.subr.mxu0 0.0
    %1502 = vmatpush1.msra.mxu0 %v564
    %1503 = vmatprep.subr.mxu0 0.0
    %1504 = vmatpush1.msra.mxu0 %v565
    %1505 = vmatprep.subr.mxu0 0.0
    %1506 = vmatpush1.msra.mxu0 %v566
    %1507 = vmatprep.subr.mxu0 0.0
    %1508 = vmatpush1.msra.mxu0 0.0
    %1509 = vmatprep.subr.mxu0 0.0
    %1510 = vmatpush1.msra.mxu0 0.0
    %1511 = vmatprep.subr.mxu0 0.0
    %1512 = vmatpush1.msra.mxu0 0.0
    %1513 = vmatprep.subr.mxu0 0.0
    %1514 = vmatpush1.msra.mxu0 0.0
    %1515 = vmatprep.subr.mxu0 0.0
    %1516 = vmatpush1.msra.mxu0 0.0
    %1517 = vmatprep.subr.mxu0 0.0
    %1518 = vmatpush1.msra.mxu0 0.0
    %1519 = vmatprep.subr.mxu0 0.0
    %1520 = vmatpush1.msra.mxu0 0.0
    %1521 = vmatprep.subr.mxu0 0.0
    %1522 = vmatpush1.msra.mxu0 0.0
    %1523 = vmatprep.subr.mxu0 0.0
    %1524 = vmatpush1.msra.mxu0 0.0
    %1525 = vmatprep.subr.mxu0 0.0
    %1526 = vmatpush1.msra.mxu0 0.0
    %1527 = vmatprep.subr.mxu0 0.0
    %1528 = vmatpush1.msra.mxu0 0.0
    %1529 = vmatprep.subr.mxu0 0.0
    %1530 = vmatpush1.msra.mxu0 0.0
    %1531 = vmatprep.subr.mxu0 0.0
    %1532 = vmatpush1.msra.mxu0 0.0
    %1533 = vmatprep.subr.mxu0 0.0
    %1534 = vmatpush1.msra.mxu0 0.0
    %1535 = vmatprep.subr.mxu0 0.0
    %1536 = vmatpush1.msra.mxu0 0.0
    %1537 = vmatprep.subr.mxu0 0.0
    %1538 = vmatpush1.msra.mxu0 0.0
    %1539 = vmatprep.subr.mxu0 0.0
    %1540 = vmatpush1.msra.mxu0 0.0
    %1541 = vmatprep.subr.mxu0 0.0
    %1542 = vmatpush1.msra.mxu0 0.0
    %1543 = vmatprep.subr.mxu0 0.0
    %1544 = vmatpush1.msra.mxu0 0.0
    %1545 = vmatprep.subr.mxu0 0.0
    %1546 = vmatpush1.msra.mxu0 0.0
    %1547 = vmatprep.subr.mxu0 0.0
    %1548 = vmatpush1.msra.mxu0 0.0
    %1549 = vmatprep.subr.mxu0 0.0
    %1550 = vmatpush1.msra.mxu0 0.0
    %1551 = vmatprep.subr.mxu0 0.0
    %1552 = vmatpush1.msra.mxu0 0.0
    %1553 = vmatprep.subr.mxu0 0.0
    %1554 = vmatpush1.msra.mxu0 0.0
    %1555 = vmatprep.subr.mxu0 0.0
    %1556 = vmatpush1.msra.mxu0 0.0
    %1557 = vmatprep.subr.mxu0 0.0
    %1558 = vmatpush1.msra.mxu0 0.0
    %1559 = vmatprep.subr.mxu0 0.0
    %1560 = vmatpush1.msra.mxu0 0.0
    %1561 = vmatprep.subr.mxu0 0.0
    %1562 = vmatpush1.msra.mxu0 0.0
    %1563 = vmatprep.mubr.f32.mxu0 0.0
    %1564 = vmatmul.mubr.f32.gmra.mrb[0].mxu0 %v1427
    %v1565 = vpop.f32.mrb[0].mxu0
    %v1566 = vadd.f32 0.0, %v1565
    %v1567 = vpop.f32.mrb[0].mxu0
    %1568 = vdwg.mxu0
    %1569 = vmatprep.subr.mxu0 0.0
    %1570 = vmatpush1.msra.mxu0 %v567
    %1571 = vmatprep.subr.mxu0 0.0
    %1572 = vmatpush1.msra.mxu0 %v568
    %1573 = vmatprep.subr.mxu0 0.0
    %1574 = vmatpush1.msra.mxu0 %v569
    %1575 = vmatprep.subr.mxu0 0.0
    %1576 = vmatpush1.msra.mxu0 %v570
    %1577 = vmatprep.subr.mxu0 0.0
    %1578 = vmatpush1.msra.mxu0 0.0
    %1579 = vmatprep.subr.mxu0 0.0
    %1580 = vmatpush1.msra.mxu0 0.0
    %1581 = vmatprep.subr.mxu0 0.0
    %1582 = vmatpush1.msra.mxu0 0.0
    %1583 = vmatprep.subr.mxu0 0.0
    %1584 = vmatpush1.msra.mxu0 0.0
    %1585 = vmatprep.subr.mxu0 0.0
    %1586 = vmatpush1.msra.mxu0 0.0
    %1587 = vmatprep.subr.mxu0 0.0
    %1588 = vmatpush1.msra.mxu0 0.0
    %1589 = vmatprep.subr.mxu0 0.0
    %1590 = vmatpush1.msra.mxu0 0.0
    %1591 = vmatprep.subr.mxu0 0.0
    %1592 = vmatpush1.msra.mxu0 0.0
    %1593 = vmatprep.subr.mxu0 0.0
    %1594 = vmatpush1.msra.mxu0 0.0
    %1595 = vmatprep.subr.mxu0 0.0
    %1596 = vmatpush1.msra.mxu0 0.0
    %1597 = vmatprep.subr.mxu0 0.0
    %1598 = vmatpush1.msra.mxu0 0.0
    %1599 = vmatprep.subr.mxu0 0.0
    %1600 = vmatpush1.msra.mxu0 0.0
    %1601 = vmatprep.subr.mxu0 0.0
    %1602 = vmatpush1.msra.mxu0 0.0
    %1603 = vmatprep.subr.mxu0 0.0
    %1604 = vmatpush1.msra.mxu0 0.0
    %1605 = vmatprep.subr.mxu0 0.0
    %1606 = vmatpush1.msra.mxu0 0.0
    %1607 = vmatprep.subr.mxu0 0.0
    %1608 = vmatpush1.msra.mxu0 0.0
    %1609 = vmatprep.subr.mxu0 0.0
    %1610 = vmatpush1.msra.mxu0 0.0
    %1611 = vmatprep.subr.mxu0 0.0
    %1612 = vmatpush1.msra.mxu0 0.0
    %1613 = vmatprep.subr.mxu0 0.0
    %1614 = vmatpush1.msra.mxu0 0.0
    %1615 = vmatprep.subr.mxu0 0.0
    %1616 = vmatpush1.msra.mxu0 0.0
    %1617 = vmatprep.subr.mxu0 0.0
    %1618 = vmatpush1.msra.mxu0 0.0
    %1619 = vmatprep.subr.mxu0 0.0
    %1620 = vmatpush1.msra.mxu0 0.0
    %1621 = vmatprep.subr.mxu0 0.0
    %1622 = vmatpush1.msra.mxu0 0.0
    %1623 = vmatprep.subr.mxu0 0.0
    %1624 = vmatpush1.msra.mxu0 0.0
    %1625 = vmatprep.subr.mxu0 0.0
    %1626 = vmatpush1.msra.mxu0 0.0
    %1627 = vmatprep.subr.mxu0 0.0
    %1628 = vmatpush1.msra.mxu0 0.0
    %1629 = vmatprep.subr.mxu0 0.0
    %1630 = vmatpush1.msra.mxu0 0.0
    %1631 = vmatprep.subr.mxu0 0.0
    %1632 = vmatpush1.msra.mxu0 0.0
    %1633 = vmatprep.mubr.f32.mxu0 0.0
    %1634 = vmatmul.mubr.f32.gmra.mrb[0].mxu0 %v1427
    %v1635 = vpop.f32.mrb[0].mxu0
    %v1636 = vadd.f32 %v720, %v1635
    %v1637 = vpop.f32.mrb[0].mxu0
    %1638 = vdwg.mxu0
    %v1640 = vrot.slane %v1496, 5
    %v1641 = vrot.slane %v1496, 6
    %v1644 = vadd.f32 %v372, %v1640
    %v1645 = vadd.f32 %v377, %v1641
    %v1646 = vxor.u32 %v1644, 2147483648
    %v1647 = vxor.u32 %v1645, 2147483648
    %v1648 = vmul.f32 %v1646, 1.442695
    %v1649 = vpow.pop %v1648
    %v1650 = vmul.f32 %v1647, 1.442695
    %v1651 = vpow.pop %v1650
    %v1652 = vadd.f32 %v1649, 1.0
    %v1653 = vadd.f32 %v1651, 1.0
    %v1654 = vrcp.pop %v1652
    %v1655 = vmul.f32 1.0, %v1654
    %v1656 = vrcp.pop %v1653
    %v1657 = vmul.f32 1.0, %v1656
    %v1659 = vrot.slane %v1566, 5
    %v1660 = vrot.slane %v1566, 6
    %v1663 = vadd.f32 %v458, %v1659
    %v1664 = vadd.f32 %v463, %v1660
    %v1665 = vxor.u32 %v1663, 2147483648
    %v1666 = vxor.u32 %v1664, 2147483648
    %v1667 = vmul.f32 %v1665, 1.442695
    %v1668 = vpow.pop %v1667
    %v1669 = vmul.f32 %v1666, 1.442695
    %v1670 = vpow.pop %v1669
    %v1671 = vadd.f32 %v1668, 1.0
    %v1672 = vadd.f32 %v1670, 1.0
    %v1673 = vrcp.pop %v1671
    %v1674 = vmul.f32 1.0, %v1673
    %v1675 = vrcp.pop %v1672
    %v1676 = vmul.f32 1.0, %v1675
    %v1678 = vrot.slane %v1636, 5
    %v1679 = vrot.slane %v1636, 6
    %v1682 = vmul.f32 %v1655, %v1678
    %v1683 = vmul.f32 %v1657, %v1679
    %v1684 = vadd.f32 %v544, %v1682
    %v1685 = vadd.f32 %v549, %v1683
    %v1686 = vtanh.pop %v1684
    %v1687 = vtanh.pop %v1685
    %v1688 = vsub.f32 1.0, %v1674
    %v1689 = vsub.f32 1.0, %v1676
    %v1690 = vmul.f32 %v1688, %v1686
    %v1691 = vmul.f32 %v1689, %v1687
    %v1692 = vrot.slane %v1425, 5
    %v1693 = vrot.slane %v1425, 6
    %v1696 = vmul.f32 %v1674, %v1692
    %v1697 = vmul.f32 %v1676, %v1693
    %v1698 = vadd.f32 %v1690, %v1696
    %v1699 = vadd.f32 %v1691, %v1697
    %1700 = vset.pattern.permute.xlu0 3
    %1701 = vperm.xlu0 %1700, %v849
    %v1702 = vpop.permute.xlu0 %1701
    %vm1703 = vcmp.eq.s32.totalorder %v1702, 1
    %v1706 = vrot.slane %v1698, 3
    %v1707 = vrot.slane %v1699, 2
    %v1708 = vsel %vm857, %v1707, %v1706
    %v1710 = vsel %vm1703, %v1708, %v1425
    %v1712 = vsel %vm204, %v1710, 0
    %1714 = vmatprep.subr.mxu0 0.0
    %1715 = vmatpush1.msra.mxu0 %v559
    %1716 = vmatprep.subr.mxu0 0.0
    %1717 = vmatpush1.msra.mxu0 %v560
    %1718 = vmatprep.subr.mxu0 0.0
    %1719 = vmatpush1.msra.mxu0 %v561
    %1720 = vmatprep.subr.mxu0 0.0
    %1721 = vmatpush1.msra.mxu0 %v562
    %1722 = vmatprep.subr.mxu0 0.0
    %1723 = vmatpush1.msra.mxu0 0.0
    %1724 = vmatprep.subr.mxu0 0.0
    %1725 = vmatpush1.msra.mxu0 0.0
    %1726 = vmatprep.subr.mxu0 0.0
    %1727 = vmatpush1.msra.mxu0 0.0
    %1728 = vmatprep.subr.mxu0 0.0
    %1729 = vmatpush1.msra.mxu0 0.0
    %1730 = vmatprep.subr.mxu0 0.0
    %1731 = vmatpush1.msra.mxu0 0.0
    %1732 = vmatprep.subr.mxu0 0.0
    %1733 = vmatpush1.msra.mxu0 0.0
    %1734 = vmatprep.subr.mxu0 0.0
    %1735 = vmatpush1.msra.mxu0 0.0
    %1736 = vmatprep.subr.mxu0 0.0
    %1737 = vmatpush1.msra.mxu0 0.0
    %1738 = vmatprep.subr.mxu0 0.0
    %1739 = vmatpush1.msra.mxu0 0.0
    %1740 = vmatprep.subr.mxu0 0.0
    %1741 = vmatpush1.msra.mxu0 0.0
    %1742 = vmatprep.subr.mxu0 0.0
    %1743 = vmatpush1.msra.mxu0 0.0
    %1744 = vmatprep.subr.mxu0 0.0
    %1745 = vmatpush1.msra.mxu0 0.0
    %1746 = vmatprep.subr.mxu0 0.0
    %1747 = vmatpush1.msra.mxu0 0.0
    %1748 = vmatprep.subr.mxu0 0.0
    %1749 = vmatpush1.msra.mxu0 0.0
    %1750 = vmatprep.subr.mxu0 0.0
    %1751 = vmatpush1.msra.mxu0 0.0
    %1752 = vmatprep.subr.mxu0 0.0
    %1753 = vmatpush1.msra.mxu0 0.0
    %1754 = vmatprep.subr.mxu0 0.0
    %1755 = vmatpush1.msra.mxu0 0.0
    %1756 = vmatprep.subr.mxu0 0.0
    %1757 = vmatpush1.msra.mxu0 0.0
    %1758 = vmatprep.subr.mxu0 0.0
    %1759 = vmatpush1.msra.mxu0 0.0
    %1760 = vmatprep.subr.mxu0 0.0
    %1761 = vmatpush1.msra.mxu0 0.0
    %1762 = vmatprep.subr.mxu0 0.0
    %1763 = vmatpush1.msra.mxu0 0.0
    %1764 = vmatprep.subr.mxu0 0.0
    %1765 = vmatpush1.msra.mxu0 0.0
    %1766 = vmatprep.subr.mxu0 0.0
    %1767 = vmatpush1.msra.mxu0 0.0
    %1768 = vmatprep.subr.mxu0 0.0
    %1769 = vmatpush1.msra.mxu0 0.0
    %1770 = vmatprep.subr.mxu0 0.0
    %1771 = vmatpush1.msra.mxu0 0.0
    %1772 = vmatprep.subr.mxu0 0.0
    %1773 = vmatpush1.msra.mxu0 0.0
    %1774 = vmatprep.subr.mxu0 0.0
    %1775 = vmatpush1.msra.mxu0 0.0
    %1776 = vmatprep.subr.mxu0 0.0
    %1777 = vmatpush1.msra.mxu0 0.0
    %1778 = vmatprep.mubr.f32.mxu0 0.0
    %1779 = vmatmul.mubr.f32.gmra.mrb[0].mxu0 %v1712
    %v1780 = vpop.f32.mrb[0].mxu0
    %v1781 = vadd.f32 0.0, %v1780
    %v1782 = vpop.f32.mrb[0].mxu0
    %1783 = vdwg.mxu0
    %1784 = vmatprep.subr.mxu0 0.0
    %1785 = vmatpush1.msra.mxu0 %v563
    %1786 = vmatprep.subr.mxu0 0.0
    %1787 = vmatpush1.msra.mxu0 %v564
    %1788 = vmatprep.subr.mxu0 0.0
    %1789 = vmatpush1.msra.mxu0 %v565
    %1790 = vmatprep.subr.mxu0 0.0
    %1791 = vmatpush1.msra.mxu0 %v566
    %1792 = vmatprep.subr.mxu0 0.0
    %1793 = vmatpush1.msra.mxu0 0.0
    %1794 = vmatprep.subr.mxu0 0.0
    %1795 = vmatpush1.msra.mxu0 0.0
    %1796 = vmatprep.subr.mxu0 0.0
    %1797 = vmatpush1.msra.mxu0 0.0
    %1798 = vmatprep.subr.mxu0 0.0
    %1799 = vmatpush1.msra.mxu0 0.0
    %1800 = vmatprep.subr.mxu0 0.0
    %1801 = vmatpush1.msra.mxu0 0.0
    %1802 = vmatprep.subr.mxu0 0.0
    %1803 = vmatpush1.msra.mxu0 0.0
    %1804 = vmatprep.subr.mxu0 0.0
    %1805 = vmatpush1.msra.mxu0 0.0
    %1806 = vmatprep.subr.mxu0 0.0
    %1807 = vmatpush1.msra.mxu0 0.0
    %1808 = vmatprep.subr.mxu0 0.0
    %1809 = vmatpush1.msra.mxu0 0.0
    %1810 = vmatprep.subr.mxu0 0.0
    %1811 = vmatpush1.msra.mxu0 0.0
    %1812 = vmatprep.subr.mxu0 0.0
    %1813 = vmatpush1.msra.mxu0 0.0
    %1814 = vmatprep.subr.mxu0 0.0
    %1815 = vmatpush1.msra.mxu0 0.0
    %1816 = vmatprep.subr.mxu0 0.0
    %1817 = vmatpush1.msra.mxu0 0.0
    %1818 = vmatprep.subr.mxu0 0.0
    %1819 = vmatpush1.msra.mxu0 0.0
    %1820 = vmatprep.subr.mxu0 0.0
    %1821 = vmatpush1.msra.mxu0 0.0
    %1822 = vmatprep.subr.mxu0 0.0
    %1823 = vmatpush1.msra.mxu0 0.0
    %1824 = vmatprep.subr.mxu0 0.0
    %1825 = vmatpush1.msra.mxu0 0.0
    %1826 = vmatprep.subr.mxu0 0.0
    %1827 = vmatpush1.msra.mxu0 0.0
    %1828 = vmatprep.subr.mxu0 0.0
    %1829 = vmatpush1.msra.mxu0 0.0
    %1830 = vmatprep.subr.mxu0 0.0
    %1831 = vmatpush1.msra.mxu0 0.0
    %1832 = vmatprep.subr.mxu0 0.0
    %1833 = vmatpush1.msra.mxu0 0.0
    %1834 = vmatprep.subr.mxu0 0.0
    %1835 = vmatpush1.msra.mxu0 0.0
    %1836 = vmatprep.subr.mxu0 0.0
    %1837 = vmatpush1.msra.mxu0 0.0
    %1838 = vmatprep.subr.mxu0 0.0
    %1839 = vmatpush1.msra.mxu0 0.0
    %1840 = vmatprep.subr.mxu0 0.0
    %1841 = vmatpush1.msra.mxu0 0.0
    %1842 = vmatprep.subr.mxu0 0.0
    %1843 = vmatpush1.msra.mxu0 0.0
    %1844 = vmatprep.subr.mxu0 0.0
    %1845 = vmatpush1.msra.mxu0 0.0
    %1846 = vmatprep.subr.mxu0 0.0
    %1847 = vmatpush1.msra.mxu0 0.0
    %1848 = vmatprep.mubr.f32.mxu0 0.0
    %1849 = vmatmul.mubr.f32.gmra.mrb[0].mxu0 %v1712
    %v1850 = vpop.f32.mrb[0].mxu0
    %v1851 = vadd.f32 0.0, %v1850
    %v1852 = vpop.f32.mrb[0].mxu0
    %1853 = vdwg.mxu0
    %1854 = vmatprep.subr.mxu0 0.0
    %1855 = vmatpush1.msra.mxu0 %v567
    %1856 = vmatprep.subr.mxu0 0.0
    %1857 = vmatpush1.msra.mxu0 %v568
    %1858 = vmatprep.subr.mxu0 0.0
    %1859 = vmatpush1.msra.mxu0 %v569
    %1860 = vmatprep.subr.mxu0 0.0
    %1861 = vmatpush1.msra.mxu0 %v570
    %1862 = vmatprep.subr.mxu0 0.0
    %1863 = vmatpush1.msra.mxu0 0.0
    %1864 = vmatprep.subr.mxu0 0.0
    %1865 = vmatpush1.msra.mxu0 0.0
    %1866 = vmatprep.subr.mxu0 0.0
    %1867 = vmatpush1.msra.mxu0 0.0
    %1868 = vmatprep.subr.mxu0 0.0
    %1869 = vmatpush1.msra.mxu0 0.0
    %1870 = vmatprep.subr.mxu0 0.0
    %1871 = vmatpush1.msra.mxu0 0.0
    %1872 = vmatprep.subr.mxu0 0.0
    %1873 = vmatpush1.msra.mxu0 0.0
    %1874 = vmatprep.subr.mxu0 0.0
    %1875 = vmatpush1.msra.mxu0 0.0
    %1876 = vmatprep.subr.mxu0 0.0
    %1877 = vmatpush1.msra.mxu0 0.0
    %1878 = vmatprep.subr.mxu0 0.0
    %1879 = vmatpush1.msra.mxu0 0.0
    %1880 = vmatprep.subr.mxu0 0.0
    %1881 = vmatpush1.msra.mxu0 0.0
    %1882 = vmatprep.subr.mxu0 0.0
    %1883 = vmatpush1.msra.mxu0 0.0
    %1884 = vmatprep.subr.mxu0 0.0
    %1885 = vmatpush1.msra.mxu0 0.0
    %1886 = vmatprep.subr.mxu0 0.0
    %1887 = vmatpush1.msra.mxu0 0.0
    %1888 = vmatprep.subr.mxu0 0.0
    %1889 = vmatpush1.msra.mxu0 0.0
    %1890 = vmatprep.subr.mxu0 0.0
    %1891 = vmatpush1.msra.mxu0 0.0
    %1892 = vmatprep.subr.mxu0 0.0
    %1893 = vmatpush1.msra.mxu0 0.0
    %1894 = vmatprep.subr.mxu0 0.0
    %1895 = vmatpush1.msra.mxu0 0.0
    %1896 = vmatprep.subr.mxu0 0.0
    %1897 = vmatpush1.msra.mxu0 0.0
    %1898 = vmatprep.subr.mxu0 0.0
    %1899 = vmatpush1.msra.mxu0 0.0
    %1900 = vmatprep.subr.mxu0 0.0
    %1901 = vmatpush1.msra.mxu0 0.0
    %1902 = vmatprep.subr.mxu0 0.0
    %1903 = vmatpush1.msra.mxu0 0.0
    %1904 = vmatprep.subr.mxu0 0.0
    %1905 = vmatpush1.msra.mxu0 0.0
    %1906 = vmatprep.subr.mxu0 0.0
    %1907 = vmatpush1.msra.mxu0 0.0
    %1908 = vmatprep.subr.mxu0 0.0
    %1909 = vmatpush1.msra.mxu0 0.0
    %1910 = vmatprep.subr.mxu0 0.0
    %1911 = vmatpush1.msra.mxu0 0.0
    %1912 = vmatprep.subr.mxu0 0.0
    %1913 = vmatpush1.msra.mxu0 0.0
    %1914 = vmatprep.subr.mxu0 0.0
    %1915 = vmatpush1.msra.mxu0 0.0
    %1916 = vmatprep.subr.mxu0 0.0
    %1917 = vmatpush1.msra.mxu0 0.0
    %1918 = vmatprep.mubr.f32.mxu0 0.0
    %1919 = vmatmul.mubr.f32.gmra.mrb[0].mxu0 %v1712
    %v1920 = vpop.f32.mrb[0].mxu0
    %v1921 = vadd.f32 %v720, %v1920
    %v1922 = vpop.f32.mrb[0].mxu0
    %1923 = vdwg.mxu0
    %v1925 = vrot.slane %v1781, 4
    %v1926 = vrot.slane %v1781, 5
    %v1929 = vadd.f32 %v372, %v1925
    %v1930 = vadd.f32 %v377, %v1926
    %v1931 = vxor.u32 %v1929, 2147483648
    %v1932 = vxor.u32 %v1930, 2147483648
    %v1933 = vmul.f32 %v1931, 1.442695
    %v1934 = vpow.pop %v1933
    %v1935 = vmul.f32 %v1932, 1.442695
    %v1936 = vpow.pop %v1935
    %v1937 = vadd.f32 %v1934, 1.0
    %v1938 = vadd.f32 %v1936, 1.0
    %v1939 = vrcp.pop %v1937
    %v1940 = vmul.f32 1.0, %v1939
    %v1941 = vrcp.pop %v1938
    %v1942 = vmul.f32 1.0, %v1941
    %v1944 = vrot.slane %v1851, 4
    %v1945 = vrot.slane %v1851, 5
    %v1948 = vadd.f32 %v458, %v1944
    %v1949 = vadd.f32 %v463, %v1945
    %v1950 = vxor.u32 %v1948, 2147483648
    %v1951 = vxor.u32 %v1949, 2147483648
    %v1952 = vmul.f32 %v1950, 1.442695
    %v1953 = vpow.pop %v1952
    %v1954 = vmul.f32 %v1951, 1.442695
    %v1955 = vpow.pop %v1954
    %v1956 = vadd.f32 %v1953, 1.0
    %v1957 = vadd.f32 %v1955, 1.0
    %v1958 = vrcp.pop %v1956
    %v1959 = vmul.f32 1.0, %v1958
    %v1960 = vrcp.pop %v1957
    %v1961 = vmul.f32 1.0, %v1960
    %v1963 = vrot.slane %v1921, 4
    %v1964 = vrot.slane %v1921, 5
    %v1967 = vmul.f32 %v1940, %v1963
    %v1968 = vmul.f32 %v1942, %v1964
    %v1969 = vadd.f32 %v544, %v1967
    %v1970 = vadd.f32 %v549, %v1968
    %v1971 = vtanh.pop %v1969
    %v1972 = vtanh.pop %v1970
    %v1973 = vsub.f32 1.0, %v1959
    %v1974 = vsub.f32 1.0, %v1961
    %v1975 = vmul.f32 %v1973, %v1971
    %v1976 = vmul.f32 %v1974, %v1972
    %v1977 = vrot.slane %v1710, 4
    %v1978 = vrot.slane %v1710, 5
    %v1981 = vmul.f32 %v1959, %v1977
    %v1982 = vmul.f32 %v1961, %v1978
    %v1983 = vadd.f32 %v1975, %v1981
    %v1984 = vadd.f32 %v1976, %v1982
    %1985 = vset.pattern.permute.xlu0 4
    %1986 = vperm.xlu0 %1985, %v849
    %v1987 = vpop.permute.xlu0 %1986
    %vm1988 = vcmp.eq.s32.totalorder %v1987, 1
    %v1991 = vrot.slane %v1983, 4
    %v1992 = vrot.slane %v1984, 3
    %v1993 = vsel %vm857, %v1992, %v1991
    %v1995 = vsel %vm1988, %v1993, %v1710
    %v1997 = vsel %vm204, %v1995, 0
    %1999 = vmatprep.subr.mxu0 0.0
    %2000 = vmatpush1.msra.mxu0 %v559
    %2001 = vmatprep.subr.mxu0 0.0
    %2002 = vmatpush1.msra.mxu0 %v560
    %2003 = vmatprep.subr.mxu0 0.0
    %2004 = vmatpush1.msra.mxu0 %v561
    %2005 = vmatprep.subr.mxu0 0.0
    %2006 = vmatpush1.msra.mxu0 %v562
    %2007 = vmatprep.subr.mxu0 0.0
    %2008 = vmatpush1.msra.mxu0 0.0
    %2009 = vmatprep.subr.mxu0 0.0
    %2010 = vmatpush1.msra.mxu0 0.0
    %2011 = vmatprep.subr.mxu0 0.0
    %2012 = vmatpush1.msra.mxu0 0.0
    %2013 = vmatprep.subr.mxu0 0.0
    %2014 = vmatpush1.msra.mxu0 0.0
    %2015 = vmatprep.subr.mxu0 0.0
    %2016 = vmatpush1.msra.mxu0 0.0
    %2017 = vmatprep.subr.mxu0 0.0
    %2018 = vmatpush1.msra.mxu0 0.0
    %2019 = vmatprep.subr.mxu0 0.0
    %2020 = vmatpush1.msra.mxu0 0.0
    %2021 = vmatprep.subr.mxu0 0.0
    %2022 = vmatpush1.msra.mxu0 0.0
    %2023 = vmatprep.subr.mxu0 0.0
    %2024 = vmatpush1.msra.mxu0 0.0
    %2025 = vmatprep.subr.mxu0 0.0
    %2026 = vmatpush1.msra.mxu0 0.0
    %2027 = vmatprep.subr.mxu0 0.0
    %2028 = vmatpush1.msra.mxu0 0.0
    %2029 = vmatprep.subr.mxu0 0.0
    %2030 = vmatpush1.msra.mxu0 0.0
    %2031 = vmatprep.subr.mxu0 0.0
    %2032 = vmatpush1.msra.mxu0 0.0
    %2033 = vmatprep.subr.mxu0 0.0
    %2034 = vmatpush1.msra.mxu0 0.0
    %2035 = vmatprep.subr.mxu0 0.0
    %2036 = vmatpush1.msra.mxu0 0.0
    %2037 = vmatprep.subr.mxu0 0.0
    %2038 = vmatpush1.msra.mxu0 0.0
    %2039 = vmatprep.subr.mxu0 0.0
    %2040 = vmatpush1.msra.mxu0 0.0
    %2041 = vmatprep.subr.mxu0 0.0
    %2042 = vmatpush1.msra.mxu0 0.0
    %2043 = vmatprep.subr.mxu0 0.0
    %2044 = vmatpush1.msra.mxu0 0.0
    %2045 = vmatprep.subr.mxu0 0.0
    %2046 = vmatpush1.msra.mxu0 0.0
    %2047 = vmatprep.subr.mxu0 0.0
    %2048 = vmatpush1.msra.mxu0 0.0
    %2049 = vmatprep.subr.mxu0 0.0
    %2050 = vmatpush1.msra.mxu0 0.0
    %2051 = vmatprep.subr.mxu0 0.0
    %2052 = vmatpush1.msra.mxu0 0.0
    %2053 = vmatprep.subr.mxu0 0.0
    %2054 = vmatpush1.msra.mxu0 0.0
    %2055 = vmatprep.subr.mxu0 0.0
    %2056 = vmatpush1.msra.mxu0 0.0
    %2057 = vmatprep.subr.mxu0 0.0
    %2058 = vmatpush1.msra.mxu0 0.0
    %2059 = vmatprep.subr.mxu0 0.0
    %2060 = vmatpush1.msra.mxu0 0.0
    %2061 = vmatprep.subr.mxu0 0.0
    %2062 = vmatpush1.msra.mxu0 0.0
    %2063 = vmatprep.mubr.f32.mxu0 0.0
    %2064 = vmatmul.mubr.f32.gmra.mrb[0].mxu0 %v1997
    %v2065 = vpop.f32.mrb[0].mxu0
    %v2066 = vadd.f32 0.0, %v2065
    %v2067 = vpop.f32.mrb[0].mxu0
    %2068 = vdwg.mxu0
    %2069 = vmatprep.subr.mxu0 0.0
    %2070 = vmatpush1.msra.mxu0 %v563
    %2071 = vmatprep.subr.mxu0 0.0
    %2072 = vmatpush1.msra.mxu0 %v564
    %2073 = vmatprep.subr.mxu0 0.0
    %2074 = vmatpush1.msra.mxu0 %v565
    %2075 = vmatprep.subr.mxu0 0.0
    %2076 = vmatpush1.msra.mxu0 %v566
    %2077 = vmatprep.subr.mxu0 0.0
    %2078 = vmatpush1.msra.mxu0 0.0
    %2079 = vmatprep.subr.mxu0 0.0
    %2080 = vmatpush1.msra.mxu0 0.0
    %2081 = vmatprep.subr.mxu0 0.0
    %2082 = vmatpush1.msra.mxu0 0.0
    %2083 = vmatprep.subr.mxu0 0.0
    %2084 = vmatpush1.msra.mxu0 0.0
    %2085 = vmatprep.subr.mxu0 0.0
    %2086 = vmatpush1.msra.mxu0 0.0
    %2087 = vmatprep.subr.mxu0 0.0
    %2088 = vmatpush1.msra.mxu0 0.0
    %2089 = vmatprep.subr.mxu0 0.0
    %2090 = vmatpush1.msra.mxu0 0.0
    %2091 = vmatprep.subr.mxu0 0.0
    %2092 = vmatpush1.msra.mxu0 0.0
    %2093 = vmatprep.subr.mxu0 0.0
    %2094 = vmatpush1.msra.mxu0 0.0
    %2095 = vmatprep.subr.mxu0 0.0
    %2096 = vmatpush1.msra.mxu0 0.0
    %2097 = vmatprep.subr.mxu0 0.0
    %2098 = vmatpush1.msra.mxu0 0.0
    %2099 = vmatprep.subr.mxu0 0.0
    %2100 = vmatpush1.msra.mxu0 0.0
    %2101 = vmatprep.subr.mxu0 0.0
    %2102 = vmatpush1.msra.mxu0 0.0
    %2103 = vmatprep.subr.mxu0 0.0
    %2104 = vmatpush1.msra.mxu0 0.0
    %2105 = vmatprep.subr.mxu0 0.0
    %2106 = vmatpush1.msra.mxu0 0.0
    %2107 = vmatprep.subr.mxu0 0.0
    %2108 = vmatpush1.msra.mxu0 0.0
    %2109 = vmatprep.subr.mxu0 0.0
    %2110 = vmatpush1.msra.mxu0 0.0
    %2111 = vmatprep.subr.mxu0 0.0
    %2112 = vmatpush1.msra.mxu0 0.0
    %2113 = vmatprep.subr.mxu0 0.0
    %2114 = vmatpush1.msra.mxu0 0.0
    %2115 = vmatprep.subr.mxu0 0.0
    %2116 = vmatpush1.msra.mxu0 0.0
    %2117 = vmatprep.subr.mxu0 0.0
    %2118 = vmatpush1.msra.mxu0 0.0
    %2119 = vmatprep.subr.mxu0 0.0
    %2120 = vmatpush1.msra.mxu0 0.0
    %2121 = vmatprep.subr.mxu0 0.0
    %2122 = vmatpush1.msra.mxu0 0.0
    %2123 = vmatprep.subr.mxu0 0.0
    %2124 = vmatpush1.msra.mxu0 0.0
    %2125 = vmatprep.subr.mxu0 0.0
    %2126 = vmatpush1.msra.mxu0 0.0
    %2127 = vmatprep.subr.mxu0 0.0
    %2128 = vmatpush1.msra.mxu0 0.0
    %2129 = vmatprep.subr.mxu0 0.0
    %2130 = vmatpush1.msra.mxu0 0.0
    %2131 = vmatprep.subr.mxu0 0.0
    %2132 = vmatpush1.msra.mxu0 0.0
    %2133 = vmatprep.mubr.f32.mxu0 0.0
    %2134 = vmatmul.mubr.f32.gmra.mrb[0].mxu0 %v1997
    %v2135 = vpop.f32.mrb[0].mxu0
    %v2136 = vadd.f32 0.0, %v2135
    %v2137 = vpop.f32.mrb[0].mxu0
    %2138 = vdwg.mxu0
    %2139 = vmatprep.subr.mxu0 0.0
    %2140 = vmatpush1.msra.mxu0 %v567
    %2141 = vmatprep.subr.mxu0 0.0
    %2142 = vmatpush1.msra.mxu0 %v568
    %2143 = vmatprep.subr.mxu0 0.0
    %2144 = vmatpush1.msra.mxu0 %v569
    %2145 = vmatprep.subr.mxu0 0.0
    %2146 = vmatpush1.msra.mxu0 %v570
    %2147 = vmatprep.subr.mxu0 0.0
    %2148 = vmatpush1.msra.mxu0 0.0
    %2149 = vmatprep.subr.mxu0 0.0
    %2150 = vmatpush1.msra.mxu0 0.0
    %2151 = vmatprep.subr.mxu0 0.0
    %2152 = vmatpush1.msra.mxu0 0.0
    %2153 = vmatprep.subr.mxu0 0.0
    %2154 = vmatpush1.msra.mxu0 0.0
    %2155 = vmatprep.subr.mxu0 0.0
    %2156 = vmatpush1.msra.mxu0 0.0
    %2157 = vmatprep.subr.mxu0 0.0
    %2158 = vmatpush1.msra.mxu0 0.0
    %2159 = vmatprep.subr.mxu0 0.0
    %2160 = vmatpush1.msra.mxu0 0.0
    %2161 = vmatprep.subr.mxu0 0.0
    %2162 = vmatpush1.msra.mxu0 0.0
    %2163 = vmatprep.subr.mxu0 0.0
    %2164 = vmatpush1.msra.mxu0 0.0
    %2165 = vmatprep.subr.mxu0 0.0
    %2166 = vmatpush1.msra.mxu0 0.0
    %2167 = vmatprep.subr.mxu0 0.0
    %2168 = vmatpush1.msra.mxu0 0.0
    %2169 = vmatprep.subr.mxu0 0.0
    %2170 = vmatpush1.msra.mxu0 0.0
    %2171 = vmatprep.subr.mxu0 0.0
    %2172 = vmatpush1.msra.mxu0 0.0
    %2173 = vmatprep.subr.mxu0 0.0
    %2174 = vmatpush1.msra.mxu0 0.0
    %2175 = vmatprep.subr.mxu0 0.0
    %2176 = vmatpush1.msra.mxu0 0.0
    %2177 = vmatprep.subr.mxu0 0.0
    %2178 = vmatpush1.msra.mxu0 0.0
    %2179 = vmatprep.subr.mxu0 0.0
    %2180 = vmatpush1.msra.mxu0 0.0
    %2181 = vmatprep.subr.mxu0 0.0
    %2182 = vmatpush1.msra.mxu0 0.0
    %2183 = vmatprep.subr.mxu0 0.0
    %2184 = vmatpush1.msra.mxu0 0.0
    %2185 = vmatprep.subr.mxu0 0.0
    %2186 = vmatpush1.msra.mxu0 0.0
    %2187 = vmatprep.subr.mxu0 0.0
    %2188 = vmatpush1.msra.mxu0 0.0
    %2189 = vmatprep.subr.mxu0 0.0
    %2190 = vmatpush1.msra.mxu0 0.0
    %2191 = vmatprep.subr.mxu0 0.0
    %2192 = vmatpush1.msra.mxu0 0.0
    %2193 = vmatprep.subr.mxu0 0.0
    %2194 = vmatpush1.msra.mxu0 0.0
    %2195 = vmatprep.subr.mxu0 0.0
    %2196 = vmatpush1.msra.mxu0 0.0
    %2197 = vmatprep.subr.mxu0 0.0
    %2198 = vmatpush1.msra.mxu0 0.0
    %2199 = vmatprep.subr.mxu0 0.0
    %2200 = vmatpush1.msra.mxu0 0.0
    %2201 = vmatprep.subr.mxu0 0.0
    %2202 = vmatpush1.msra.mxu0 0.0
    %2203 = vmatprep.mubr.f32.mxu0 0.0
    %2204 = vmatmul.mubr.f32.gmra.mrb[0].mxu0 %v1997
    %v2205 = vpop.f32.mrb[0].mxu0
    %v2206 = vadd.f32 %v720, %v2205
    %v2207 = vpop.f32.mrb[0].mxu0
    %2208 = vdwg.mxu0
    %v2210 = vrot.slane %v2066, 3
    %v2211 = vrot.slane %v2066, 4
    %v2214 = vadd.f32 %v372, %v2210
    %v2215 = vadd.f32 %v377, %v2211
    %v2216 = vxor.u32 %v2214, 2147483648
    %v2217 = vxor.u32 %v2215, 2147483648
    %v2218 = vmul.f32 %v2216, 1.442695
    %v2219 = vpow.pop %v2218
    %v2220 = vmul.f32 %v2217, 1.442695
    %v2221 = vpow.pop %v2220
    %v2222 = vadd.f32 %v2219, 1.0
    %v2223 = vadd.f32 %v2221, 1.0
    %v2224 = vrcp.pop %v2222
    %v2225 = vmul.f32 1.0, %v2224
    %v2226 = vrcp.pop %v2223
    %v2227 = vmul.f32 1.0, %v2226
    %v2229 = vrot.slane %v2136, 3
    %v2230 = vrot.slane %v2136, 4
    %v2233 = vadd.f32 %v458, %v2229
    %v2234 = vadd.f32 %v463, %v2230
    %v2235 = vxor.u32 %v2233, 2147483648
    %v2236 = vxor.u32 %v2234, 2147483648
    %v2237 = vmul.f32 %v2235, 1.442695
    %v2238 = vpow.pop %v2237
    %v2239 = vmul.f32 %v2236, 1.442695
    %v2240 = vpow.pop %v2239
    %v2241 = vadd.f32 %v2238, 1.0
    %v2242 = vadd.f32 %v2240, 1.0
    %v2243 = vrcp.pop %v2241
    %v2244 = vmul.f32 1.0, %v2243
    %v2245 = vrcp.pop %v2242
    %v2246 = vmul.f32 1.0, %v2245
    %v2248 = vrot.slane %v2206, 3
    %v2249 = vrot.slane %v2206, 4
    %v2252 = vmul.f32 %v2225, %v2248
    %v2253 = vmul.f32 %v2227, %v2249
    %v2254 = vadd.f32 %v544, %v2252
    %v2255 = vadd.f32 %v549, %v2253
    %v2256 = vtanh.pop %v2254
    %v2257 = vtanh.pop %v2255
    %v2258 = vsub.f32 1.0, %v2244
    %v2259 = vsub.f32 1.0, %v2246
    %v2260 = vmul.f32 %v2258, %v2256
    %v2261 = vmul.f32 %v2259, %v2257
    %v2262 = vrot.slane %v1995, 3
    %v2263 = vrot.slane %v1995, 4
    %v2266 = vmul.f32 %v2244, %v2262
    %v2267 = vmul.f32 %v2246, %v2263
    %v2268 = vadd.f32 %v2260, %v2266
    %v2269 = vadd.f32 %v2261, %v2267
    %2270 = vset.pattern.permute.xlu0 5
    %2271 = vperm.xlu0 %2270, %v849
    %v2272 = vpop.permute.xlu0 %2271
    %vm2273 = vcmp.eq.s32.totalorder %v2272, 1
    %v2276 = vrot.slane %v2268, 5
    %v2277 = vrot.slane %v2269, 4
    %v2278 = vsel %vm857, %v2277, %v2276
    %v2280 = vsel %vm2273, %v2278, %v1995
    %v2282 = vsel %vm204, %v2280, 0
    %2284 = vmatprep.subr.mxu0 0.0
    %2285 = vmatpush1.msra.mxu0 %v559
    %2286 = vmatprep.subr.mxu0 0.0
    %2287 = vmatpush1.msra.mxu0 %v560
    %2288 = vmatprep.subr.mxu0 0.0
    %2289 = vmatpush1.msra.mxu0 %v561
    %2290 = vmatprep.subr.mxu0 0.0
    %2291 = vmatpush1.msra.mxu0 %v562
    %2292 = vmatprep.subr.mxu0 0.0
    %2293 = vmatpush1.msra.mxu0 0.0
    %2294 = vmatprep.subr.mxu0 0.0
    %2295 = vmatpush1.msra.mxu0 0.0
    %2296 = vmatprep.subr.mxu0 0.0
    %2297 = vmatpush1.msra.mxu0 0.0
    %2298 = vmatprep.subr.mxu0 0.0
    %2299 = vmatpush1.msra.mxu0 0.0
    %2300 = vmatprep.subr.mxu0 0.0
    %2301 = vmatpush1.msra.mxu0 0.0
    %2302 = vmatprep.subr.mxu0 0.0
    %2303 = vmatpush1.msra.mxu0 0.0
    %2304 = vmatprep.subr.mxu0 0.0
    %2305 = vmatpush1.msra.mxu0 0.0
    %2306 = vmatprep.subr.mxu0 0.0
    %2307 = vmatpush1.msra.mxu0 0.0
    %2308 = vmatprep.subr.mxu0 0.0
    %2309 = vmatpush1.msra.mxu0 0.0
    %2310 = vmatprep.subr.mxu0 0.0
    %2311 = vmatpush1.msra.mxu0 0.0
    %2312 = vmatprep.subr.mxu0 0.0
    %2313 = vmatpush1.msra.mxu0 0.0
    %2314 = vmatprep.subr.mxu0 0.0
    %2315 = vmatpush1.msra.mxu0 0.0
    %2316 = vmatprep.subr.mxu0 0.0
    %2317 = vmatpush1.msra.mxu0 0.0
    %2318 = vmatprep.subr.mxu0 0.0
    %2319 = vmatpush1.msra.mxu0 0.0
    %2320 = vmatprep.subr.mxu0 0.0
    %2321 = vmatpush1.msra.mxu0 0.0
    %2322 = vmatprep.subr.mxu0 0.0
    %2323 = vmatpush1.msra.mxu0 0.0
    %2324 = vmatprep.subr.mxu0 0.0
    %2325 = vmatpush1.msra.mxu0 0.0
    %2326 = vmatprep.subr.mxu0 0.0
    %2327 = vmatpush1.msra.mxu0 0.0
    %2328 = vmatprep.subr.mxu0 0.0
    %2329 = vmatpush1.msra.mxu0 0.0
    %2330 = vmatprep.subr.mxu0 0.0
    %2331 = vmatpush1.msra.mxu0 0.0
    %2332 = vmatprep.subr.mxu0 0.0
    %2333 = vmatpush1.msra.mxu0 0.0
    %2334 = vmatprep.subr.mxu0 0.0
    %2335 = vmatpush1.msra.mxu0 0.0
    %2336 = vmatprep.subr.mxu0 0.0
    %2337 = vmatpush1.msra.mxu0 0.0
    %2338 = vmatprep.subr.mxu0 0.0
    %2339 = vmatpush1.msra.mxu0 0.0
    %2340 = vmatprep.subr.mxu0 0.0
    %2341 = vmatpush1.msra.mxu0 0.0
    %2342 = vmatprep.subr.mxu0 0.0
    %2343 = vmatpush1.msra.mxu0 0.0
    %2344 = vmatprep.subr.mxu0 0.0
    %2345 = vmatpush1.msra.mxu0 0.0
    %2346 = vmatprep.subr.mxu0 0.0
    %2347 = vmatpush1.msra.mxu0 0.0
    %2348 = vmatprep.mubr.f32.mxu0 0.0
    %2349 = vmatmul.mubr.f32.gmra.mrb[0].mxu0 %v2282
    %v2350 = vpop.f32.mrb[0].mxu0
    %v2351 = vadd.f32 0.0, %v2350
    %v2352 = vpop.f32.mrb[0].mxu0
    %2353 = vdwg.mxu0
    %2354 = vmatprep.subr.mxu0 0.0
    %2355 = vmatpush1.msra.mxu0 %v563
    %2356 = vmatprep.subr.mxu0 0.0
    %2357 = vmatpush1.msra.mxu0 %v564
    %2358 = vmatprep.subr.mxu0 0.0
    %2359 = vmatpush1.msra.mxu0 %v565
    %2360 = vmatprep.subr.mxu0 0.0
    %2361 = vmatpush1.msra.mxu0 %v566
    %2362 = vmatprep.subr.mxu0 0.0
    %2363 = vmatpush1.msra.mxu0 0.0
    %2364 = vmatprep.subr.mxu0 0.0
    %2365 = vmatpush1.msra.mxu0 0.0
    %2366 = vmatprep.subr.mxu0 0.0
    %2367 = vmatpush1.msra.mxu0 0.0
    %2368 = vmatprep.subr.mxu0 0.0
    %2369 = vmatpush1.msra.mxu0 0.0
    %2370 = vmatprep.subr.mxu0 0.0
    %2371 = vmatpush1.msra.mxu0 0.0
    %2372 = vmatprep.subr.mxu0 0.0
    %2373 = vmatpush1.msra.mxu0 0.0
    %2374 = vmatprep.subr.mxu0 0.0
    %2375 = vmatpush1.msra.mxu0 0.0
    %2376 = vmatprep.subr.mxu0 0.0
    %2377 = vmatpush1.msra.mxu0 0.0
    %2378 = vmatprep.subr.mxu0 0.0
    %2379 = vmatpush1.msra.mxu0 0.0
    %2380 = vmatprep.subr.mxu0 0.0
    %2381 = vmatpush1.msra.mxu0 0.0
    %2382 = vmatprep.subr.mxu0 0.0
    %2383 = vmatpush1.msra.mxu0 0.0
    %2384 = vmatprep.subr.mxu0 0.0
    %2385 = vmatpush1.msra.mxu0 0.0
    %2386 = vmatprep.subr.mxu0 0.0
    %2387 = vmatpush1.msra.mxu0 0.0
    %2388 = vmatprep.subr.mxu0 0.0
    %2389 = vmatpush1.msra.mxu0 0.0
    %2390 = vmatprep.subr.mxu0 0.0
    %2391 = vmatpush1.msra.mxu0 0.0
    %2392 = vmatprep.subr.mxu0 0.0
    %2393 = vmatpush1.msra.mxu0 0.0
    %2394 = vmatprep.subr.mxu0 0.0
    %2395 = vmatpush1.msra.mxu0 0.0
    %2396 = vmatprep.subr.mxu0 0.0
    %2397 = vmatpush1.msra.mxu0 0.0
    %2398 = vmatprep.subr.mxu0 0.0
    %2399 = vmatpush1.msra.mxu0 0.0
    %2400 = vmatprep.subr.mxu0 0.0
    %2401 = vmatpush1.msra.mxu0 0.0
    %2402 = vmatprep.subr.mxu0 0.0
    %2403 = vmatpush1.msra.mxu0 0.0
    %2404 = vmatprep.subr.mxu0 0.0
    %2405 = vmatpush1.msra.mxu0 0.0
    %2406 = vmatprep.subr.mxu0 0.0
    %2407 = vmatpush1.msra.mxu0 0.0
    %2408 = vmatprep.subr.mxu0 0.0
    %2409 = vmatpush1.msra.mxu0 0.0
    %2410 = vmatprep.subr.mxu0 0.0
    %2411 = vmatpush1.msra.mxu0 0.0
    %2412 = vmatprep.subr.mxu0 0.0
    %2413 = vmatpush1.msra.mxu0 0.0
    %2414 = vmatprep.subr.mxu0 0.0
    %2415 = vmatpush1.msra.mxu0 0.0
    %2416 = vmatprep.subr.mxu0 0.0
    %2417 = vmatpush1.msra.mxu0 0.0
    %2418 = vmatprep.mubr.f32.mxu0 0.0
    %2419 = vmatmul.mubr.f32.gmra.mrb[0].mxu0 %v2282
    %v2420 = vpop.f32.mrb[0].mxu0
    %v2421 = vadd.f32 0.0, %v2420
    %v2422 = vpop.f32.mrb[0].mxu0
    %2423 = vdwg.mxu0
    %2424 = vmatprep.subr.mxu0 0.0
    %2425 = vmatpush1.msra.mxu0 %v567
    %2426 = vmatprep.subr.mxu0 0.0
    %2427 = vmatpush1.msra.mxu0 %v568
    %2428 = vmatprep.subr.mxu0 0.0
    %2429 = vmatpush1.msra.mxu0 %v569
    %2430 = vmatprep.subr.mxu0 0.0
    %2431 = vmatpush1.msra.mxu0 %v570
    %2432 = vmatprep.subr.mxu0 0.0
    %2433 = vmatpush1.msra.mxu0 0.0
    %2434 = vmatprep.subr.mxu0 0.0
    %2435 = vmatpush1.msra.mxu0 0.0
    %2436 = vmatprep.subr.mxu0 0.0
    %2437 = vmatpush1.msra.mxu0 0.0
    %2438 = vmatprep.subr.mxu0 0.0
    %2439 = vmatpush1.msra.mxu0 0.0
    %2440 = vmatprep.subr.mxu0 0.0
    %2441 = vmatpush1.msra.mxu0 0.0
    %2442 = vmatprep.subr.mxu0 0.0
    %2443 = vmatpush1.msra.mxu0 0.0
    %2444 = vmatprep.subr.mxu0 0.0
    %2445 = vmatpush1.msra.mxu0 0.0
    %2446 = vmatprep.subr.mxu0 0.0
    %2447 = vmatpush1.msra.mxu0 0.0
    %2448 = vmatprep.subr.mxu0 0.0
    %2449 = vmatpush1.msra.mxu0 0.0
    %2450 = vmatprep.subr.mxu0 0.0
    %2451 = vmatpush1.msra.mxu0 0.0
    %2452 = vmatprep.subr.mxu0 0.0
    %2453 = vmatpush1.msra.mxu0 0.0
    %2454 = vmatprep.subr.mxu0 0.0
    %2455 = vmatpush1.msra.mxu0 0.0
    %2456 = vmatprep.subr.mxu0 0.0
    %2457 = vmatpush1.msra.mxu0 0.0
    %2458 = vmatprep.subr.mxu0 0.0
    %2459 = vmatpush1.msra.mxu0 0.0
    %2460 = vmatprep.subr.mxu0 0.0
    %2461 = vmatpush1.msra.mxu0 0.0
    %2462 = vmatprep.subr.mxu0 0.0
    %2463 = vmatpush1.msra.mxu0 0.0
    %2464 = vmatprep.subr.mxu0 0.0
    %2465 = vmatpush1.msra.mxu0 0.0
    %2466 = vmatprep.subr.mxu0 0.0
    %2467 = vmatpush1.msra.mxu0 0.0
    %2468 = vmatprep.subr.mxu0 0.0
    %2469 = vmatpush1.msra.mxu0 0.0
    %2470 = vmatprep.subr.mxu0 0.0
    %2471 = vmatpush1.msra.mxu0 0.0
    %2472 = vmatprep.subr.mxu0 0.0
    %2473 = vmatpush1.msra.mxu0 0.0
    %2474 = vmatprep.subr.mxu0 0.0
    %2475 = vmatpush1.msra.mxu0 0.0
    %2476 = vmatprep.subr.mxu0 0.0
    %2477 = vmatpush1.msra.mxu0 0.0
    %2478 = vmatprep.subr.mxu0 0.0
    %2479 = vmatpush1.msra.mxu0 0.0
    %2480 = vmatprep.subr.mxu0 0.0
    %2481 = vmatpush1.msra.mxu0 0.0
    %2482 = vmatprep.subr.mxu0 0.0
    %2483 = vmatpush1.msra.mxu0 0.0
    %2484 = vmatprep.subr.mxu0 0.0
    %2485 = vmatpush1.msra.mxu0 0.0
    %2486 = vmatprep.subr.mxu0 0.0
    %2487 = vmatpush1.msra.mxu0 0.0
    %2488 = vmatprep.mubr.f32.mxu0 0.0
    %2489 = vmatmul.mubr.f32.gmra.mrb[0].mxu0 %v2282
    %v2490 = vpop.f32.mrb[0].mxu0
    %v2491 = vadd.f32 %v720, %v2490
    %v2492 = vpop.f32.mrb[0].mxu0
    %2493 = vdwg.mxu0
    %v2495 = vrot.slane %v2351, 2
    %v2496 = vrot.slane %v2351, 3
    %v2499 = vadd.f32 %v372, %v2495
    %v2500 = vadd.f32 %v377, %v2496
    %v2501 = vxor.u32 %v2499, 2147483648
    %v2502 = vxor.u32 %v2500, 2147483648
    %v2503 = vmul.f32 %v2501, 1.442695
    %v2504 = vpow.pop %v2503
    %v2505 = vmul.f32 %v2502, 1.442695
    %v2506 = vpow.pop %v2505
    %v2507 = vadd.f32 %v2504, 1.0
    %v2508 = vadd.f32 %v2506, 1.0
    %v2509 = vrcp.pop %v2507
    %v2510 = vmul.f32 1.0, %v2509
    %v2511 = vrcp.pop %v2508
    %v2512 = vmul.f32 1.0, %v2511
    %v2514 = vrot.slane %v2421, 2
    %v2515 = vrot.slane %v2421, 3
    %v2518 = vadd.f32 %v458, %v2514
    %v2519 = vadd.f32 %v463, %v2515
    %v2520 = vxor.u32 %v2518, 2147483648
    %v2521 = vxor.u32 %v2519, 2147483648
    %v2522 = vmul.f32 %v2520, 1.442695
    %v2523 = vpow.pop %v2522
    %v2524 = vmul.f32 %v2521, 1.442695
    %v2525 = vpow.pop %v2524
    %v2526 = vadd.f32 %v2523, 1.0
    %v2527 = vadd.f32 %v2525, 1.0
    %v2528 = vrcp.pop %v2526
    %v2529 = vmul.f32 1.0, %v2528
    %v2530 = vrcp.pop %v2527
    %v2531 = vmul.f32 1.0, %v2530
    %v2533 = vrot.slane %v2491, 2
    %v2534 = vrot.slane %v2491, 3
    %v2537 = vmul.f32 %v2510, %v2533
    %v2538 = vmul.f32 %v2512, %v2534
    %v2539 = vadd.f32 %v544, %v2537
    %v2540 = vadd.f32 %v549, %v2538
    %v2541 = vtanh.pop %v2539
    %v2542 = vtanh.pop %v2540
    %v2543 = vsub.f32 1.0, %v2529
    %v2544 = vsub.f32 1.0, %v2531
    %v2545 = vmul.f32 %v2543, %v2541
    %v2546 = vmul.f32 %v2544, %v2542
    %v2547 = vrot.slane %v2280, 2
    %v2548 = vrot.slane %v2280, 3
    %v2551 = vmul.f32 %v2529, %v2547
    %v2552 = vmul.f32 %v2531, %v2548
    %v2553 = vadd.f32 %v2545, %v2551
    %v2554 = vadd.f32 %v2546, %v2552
    %2555 = vset.pattern.permute.xlu0 6
    %2556 = vperm.xlu0 %2555, %v849
    %v2557 = vpop.permute.xlu0 %2556
    %vm2558 = vcmp.eq.s32.totalorder %v2557, 1
    %v2561 = vrot.slane %v2553, 6
    %v2562 = vrot.slane %v2554, 5
    %v2563 = vsel %vm857, %v2562, %v2561
    %v2565 = vsel %vm2558, %v2563, %v2280
    %v2567 = vsel %vm204, %v2565, 0
    %2569 = vmatprep.subr.mxu0 0.0
    %2570 = vmatpush1.msra.mxu0 %v559
    %2571 = vmatprep.subr.mxu0 0.0
    %2572 = vmatpush1.msra.mxu0 %v560
    %2573 = vmatprep.subr.mxu0 0.0
    %2574 = vmatpush1.msra.mxu0 %v561
    %2575 = vmatprep.subr.mxu0 0.0
    %2576 = vmatpush1.msra.mxu0 %v562
    %2577 = vmatprep.subr.mxu0 0.0
    %2578 = vmatpush1.msra.mxu0 0.0
    %2579 = vmatprep.subr.mxu0 0.0
    %2580 = vmatpush1.msra.mxu0 0.0
    %2581 = vmatprep.subr.mxu0 0.0
    %2582 = vmatpush1.msra.mxu0 0.0
    %2583 = vmatprep.subr.mxu0 0.0
    %2584 = vmatpush1.msra.mxu0 0.0
    %2585 = vmatprep.subr.mxu0 0.0
    %2586 = vmatpush1.msra.mxu0 0.0
    %2587 = vmatprep.subr.mxu0 0.0
    %2588 = vmatpush1.msra.mxu0 0.0
    %2589 = vmatprep.subr.mxu0 0.0
    %2590 = vmatpush1.msra.mxu0 0.0
    %2591 = vmatprep.subr.mxu0 0.0
    %2592 = vmatpush1.msra.mxu0 0.0
    %2593 = vmatprep.subr.mxu0 0.0
    %2594 = vmatpush1.msra.mxu0 0.0
    %2595 = vmatprep.subr.mxu0 0.0
    %2596 = vmatpush1.msra.mxu0 0.0
    %2597 = vmatprep.subr.mxu0 0.0
    %2598 = vmatpush1.msra.mxu0 0.0
    %2599 = vmatprep.subr.mxu0 0.0
    %2600 = vmatpush1.msra.mxu0 0.0
    %2601 = vmatprep.subr.mxu0 0.0
    %2602 = vmatpush1.msra.mxu0 0.0
    %2603 = vmatprep.subr.mxu0 0.0
    %2604 = vmatpush1.msra.mxu0 0.0
    %2605 = vmatprep.subr.mxu0 0.0
    %2606 = vmatpush1.msra.mxu0 0.0
    %2607 = vmatprep.subr.mxu0 0.0
    %2608 = vmatpush1.msra.mxu0 0.0
    %2609 = vmatprep.subr.mxu0 0.0
    %2610 = vmatpush1.msra.mxu0 0.0
    %2611 = vmatprep.subr.mxu0 0.0
    %2612 = vmatpush1.msra.mxu0 0.0
    %2613 = vmatprep.subr.mxu0 0.0
    %2614 = vmatpush1.msra.mxu0 0.0
    %2615 = vmatprep.subr.mxu0 0.0
    %2616 = vmatpush1.msra.mxu0 0.0
    %2617 = vmatprep.subr.mxu0 0.0
    %2618 = vmatpush1.msra.mxu0 0.0
    %2619 = vmatprep.subr.mxu0 0.0
    %2620 = vmatpush1.msra.mxu0 0.0
    %2621 = vmatprep.subr.mxu0 0.0
    %2622 = vmatpush1.msra.mxu0 0.0
    %2623 = vmatprep.subr.mxu0 0.0
    %2624 = vmatpush1.msra.mxu0 0.0
    %2625 = vmatprep.subr.mxu0 0.0
    %2626 = vmatpush1.msra.mxu0 0.0
    %2627 = vmatprep.subr.mxu0 0.0
    %2628 = vmatpush1.msra.mxu0 0.0
    %2629 = vmatprep.subr.mxu0 0.0
    %2630 = vmatpush1.msra.mxu0 0.0
    %2631 = vmatprep.subr.mxu0 0.0
    %2632 = vmatpush1.msra.mxu0 0.0
    %2633 = vmatprep.mubr.f32.mxu0 0.0
    %2634 = vmatmul.mubr.f32.gmra.mrb[0].mxu0 %v2567
    %v2635 = vpop.f32.mrb[0].mxu0
    %v2636 = vadd.f32 0.0, %v2635
    %v2637 = vpop.f32.mrb[0].mxu0
    %2638 = vdwg.mxu0
    %2639 = vmatprep.subr.mxu0 0.0
    %2640 = vmatpush1.msra.mxu0 %v563
    %2641 = vmatprep.subr.mxu0 0.0
    %2642 = vmatpush1.msra.mxu0 %v564
    %2643 = vmatprep.subr.mxu0 0.0
    %2644 = vmatpush1.msra.mxu0 %v565
    %2645 = vmatprep.subr.mxu0 0.0
    %2646 = vmatpush1.msra.mxu0 %v566
    %2647 = vmatprep.subr.mxu0 0.0
    %2648 = vmatpush1.msra.mxu0 0.0
    %2649 = vmatprep.subr.mxu0 0.0
    %2650 = vmatpush1.msra.mxu0 0.0
    %2651 = vmatprep.subr.mxu0 0.0
    %2652 = vmatpush1.msra.mxu0 0.0
    %2653 = vmatprep.subr.mxu0 0.0
    %2654 = vmatpush1.msra.mxu0 0.0
    %2655 = vmatprep.subr.mxu0 0.0
    %2656 = vmatpush1.msra.mxu0 0.0
    %2657 = vmatprep.subr.mxu0 0.0
    %2658 = vmatpush1.msra.mxu0 0.0
    %2659 = vmatprep.subr.mxu0 0.0
    %2660 = vmatpush1.msra.mxu0 0.0
    %2661 = vmatprep.subr.mxu0 0.0
    %2662 = vmatpush1.msra.mxu0 0.0
    %2663 = vmatprep.subr.mxu0 0.0
    %2664 = vmatpush1.msra.mxu0 0.0
    %2665 = vmatprep.subr.mxu0 0.0
    %2666 = vmatpush1.msra.mxu0 0.0
    %2667 = vmatprep.subr.mxu0 0.0
    %2668 = vmatpush1.msra.mxu0 0.0
    %2669 = vmatprep.subr.mxu0 0.0
    %2670 = vmatpush1.msra.mxu0 0.0
    %2671 = vmatprep.subr.mxu0 0.0
    %2672 = vmatpush1.msra.mxu0 0.0
    %2673 = vmatprep.subr.mxu0 0.0
    %2674 = vmatpush1.msra.mxu0 0.0
    %2675 = vmatprep.subr.mxu0 0.0
    %2676 = vmatpush1.msra.mxu0 0.0
    %2677 = vmatprep.subr.mxu0 0.0
    %2678 = vmatpush1.msra.mxu0 0.0
    %2679 = vmatprep.subr.mxu0 0.0
    %2680 = vmatpush1.msra.mxu0 0.0
    %2681 = vmatprep.subr.mxu0 0.0
    %2682 = vmatpush1.msra.mxu0 0.0
    %2683 = vmatprep.subr.mxu0 0.0
    %2684 = vmatpush1.msra.mxu0 0.0
    %2685 = vmatprep.subr.mxu0 0.0
    %2686 = vmatpush1.msra.mxu0 0.0
    %2687 = vmatprep.subr.mxu0 0.0
    %2688 = vmatpush1.msra.mxu0 0.0
    %2689 = vmatprep.subr.mxu0 0.0
    %2690 = vmatpush1.msra.mxu0 0.0
    %2691 = vmatprep.subr.mxu0 0.0
    %2692 = vmatpush1.msra.mxu0 0.0
    %2693 = vmatprep.subr.mxu0 0.0
    %2694 = vmatpush1.msra.mxu0 0.0
    %2695 = vmatprep.subr.mxu0 0.0
    %2696 = vmatpush1.msra.mxu0 0.0
    %2697 = vmatprep.subr.mxu0 0.0
    %2698 = vmatpush1.msra.mxu0 0.0
    %2699 = vmatprep.subr.mxu0 0.0
    %2700 = vmatpush1.msra.mxu0 0.0
    %2701 = vmatprep.subr.mxu0 0.0
    %2702 = vmatpush1.msra.mxu0 0.0
    %2703 = vmatprep.mubr.f32.mxu0 0.0
    %2704 = vmatmul.mubr.f32.gmra.mrb[0].mxu0 %v2567
    %v2705 = vpop.f32.mrb[0].mxu0
    %v2706 = vadd.f32 0.0, %v2705
    %v2707 = vpop.f32.mrb[0].mxu0
    %2708 = vdwg.mxu0
    %2709 = vmatprep.subr.mxu0 0.0
    %2710 = vmatpush1.msra.mxu0 %v567
    %2711 = vmatprep.subr.mxu0 0.0
    %2712 = vmatpush1.msra.mxu0 %v568
    %2713 = vmatprep.subr.mxu0 0.0
    %2714 = vmatpush1.msra.mxu0 %v569
    %2715 = vmatprep.subr.mxu0 0.0
    %2716 = vmatpush1.msra.mxu0 %v570
    %2717 = vmatprep.subr.mxu0 0.0
    %2718 = vmatpush1.msra.mxu0 0.0
    %2719 = vmatprep.subr.mxu0 0.0
    %2720 = vmatpush1.msra.mxu0 0.0
    %2721 = vmatprep.subr.mxu0 0.0
    %2722 = vmatpush1.msra.mxu0 0.0
    %2723 = vmatprep.subr.mxu0 0.0
    %2724 = vmatpush1.msra.mxu0 0.0
    %2725 = vmatprep.subr.mxu0 0.0
    %2726 = vmatpush1.msra.mxu0 0.0
    %2727 = vmatprep.subr.mxu0 0.0
    %2728 = vmatpush1.msra.mxu0 0.0
    %2729 = vmatprep.subr.mxu0 0.0
    %2730 = vmatpush1.msra.mxu0 0.0
    %2731 = vmatprep.subr.mxu0 0.0
    %2732 = vmatpush1.msra.mxu0 0.0
    %2733 = vmatprep.subr.mxu0 0.0
    %2734 = vmatpush1.msra.mxu0 0.0
    %2735 = vmatprep.subr.mxu0 0.0
    %2736 = vmatpush1.msra.mxu0 0.0
    %2737 = vmatprep.subr.mxu0 0.0
    %2738 = vmatpush1.msra.mxu0 0.0
    %2739 = vmatprep.subr.mxu0 0.0
    %2740 = vmatpush1.msra.mxu0 0.0
    %2741 = vmatprep.subr.mxu0 0.0
    %2742 = vmatpush1.msra.mxu0 0.0
    %2743 = vmatprep.subr.mxu0 0.0
    %2744 = vmatpush1.msra.mxu0 0.0
    %2745 = vmatprep.subr.mxu0 0.0
    %2746 = vmatpush1.msra.mxu0 0.0
    %2747 = vmatprep.subr.mxu0 0.0
    %2748 = vmatpush1.msra.mxu0 0.0
    %2749 = vmatprep.subr.mxu0 0.0
    %2750 = vmatpush1.msra.mxu0 0.0
    %2751 = vmatprep.subr.mxu0 0.0
    %2752 = vmatpush1.msra.mxu0 0.0
    %2753 = vmatprep.subr.mxu0 0.0
    %2754 = vmatpush1.msra.mxu0 0.0
    %2755 = vmatprep.subr.mxu0 0.0
    %2756 = vmatpush1.msra.mxu0 0.0
    %2757 = vmatprep.subr.mxu0 0.0
    %2758 = vmatpush1.msra.mxu0 0.0
    %2759 = vmatprep.subr.mxu0 0.0
    %2760 = vmatpush1.msra.mxu0 0.0
    %2761 = vmatprep.subr.mxu0 0.0
    %2762 = vmatpush1.msra.mxu0 0.0
    %2763 = vmatprep.subr.mxu0 0.0
    %2764 = vmatpush1.msra.mxu0 0.0
    %2765 = vmatprep.subr.mxu0 0.0
    %2766 = vmatpush1.msra.mxu0 0.0
    %2767 = vmatprep.subr.mxu0 0.0
    %2768 = vmatpush1.msra.mxu0 0.0
    %2769 = vmatprep.subr.mxu0 0.0
    %2770 = vmatpush1.msra.mxu0 0.0
    %2771 = vmatprep.subr.mxu0 0.0
    %2772 = vmatpush1.msra.mxu0 0.0
    %2773 = vmatprep.mubr.f32.mxu0 0.0
    %2774 = vmatmul.mubr.f32.gmra.mrb[0].mxu0 %v2567
    %v2775 = vpop.f32.mrb[0].mxu0
    %v2776 = vadd.f32 %v720, %v2775
    %v2777 = vpop.f32.mrb[0].mxu0
    %2778 = vdwg.mxu0
    %v2780 = vrot.slane %v2636, 1
    %v2781 = vrot.slane %v2636, 2
    %v2784 = vadd.f32 %v372, %v2780
    %v2785 = vadd.f32 %v377, %v2781
    %v2786 = vxor.u32 %v2784, 2147483648
    %v2787 = vxor.u32 %v2785, 2147483648
    %v2788 = vmul.f32 %v2786, 1.442695
    %v2789 = vpow.pop %v2788
    %v2790 = vmul.f32 %v2787, 1.442695
    %v2791 = vpow.pop %v2790
    %v2792 = vadd.f32 %v2789, 1.0
    %v2793 = vadd.f32 %v2791, 1.0
    %v2794 = vrcp.pop %v2792
    %v2795 = vmul.f32 1.0, %v2794
    %v2796 = vrcp.pop %v2793
    %v2797 = vmul.f32 1.0, %v2796
    %v2799 = vrot.slane %v2706, 1
    %v2800 = vrot.slane %v2706, 2
    %v2803 = vadd.f32 %v458, %v2799
    %v2804 = vadd.f32 %v463, %v2800
    %v2805 = vxor.u32 %v2803, 2147483648
    %v2806 = vxor.u32 %v2804, 2147483648
    %v2807 = vmul.f32 %v2805, 1.442695
    %v2808 = vpow.pop %v2807
    %v2809 = vmul.f32 %v2806, 1.442695
    %v2810 = vpow.pop %v2809
    %v2811 = vadd.f32 %v2808, 1.0
    %v2812 = vadd.f32 %v2810, 1.0
    %v2813 = vrcp.pop %v2811
    %v2814 = vmul.f32 1.0, %v2813
    %v2815 = vrcp.pop %v2812
    %v2816 = vmul.f32 1.0, %v2815
    %v2818 = vrot.slane %v2776, 1
    %v2819 = vrot.slane %v2776, 2
    %v2822 = vmul.f32 %v2795, %v2818
    %v2823 = vmul.f32 %v2797, %v2819
    %v2824 = vadd.f32 %v544, %v2822
    %v2825 = vadd.f32 %v549, %v2823
    %v2826 = vtanh.pop %v2824
    %v2827 = vtanh.pop %v2825
    %v2828 = vsub.f32 1.0, %v2814
    %v2829 = vsub.f32 1.0, %v2816
    %v2830 = vmul.f32 %v2828, %v2826
    %v2831 = vmul.f32 %v2829, %v2827
    %v2832 = vrot.slane %v2565, 1
    %v2833 = vrot.slane %v2565, 2
    %v2836 = vmul.f32 %v2814, %v2832
    %v2837 = vmul.f32 %v2816, %v2833
    %v2838 = vadd.f32 %v2830, %v2836
    %v2839 = vadd.f32 %v2831, %v2837
    %2840 = vset.pattern.permute.xlu0 7
    %2841 = vperm.xlu0 %2840, %v849
    %v2842 = vpop.permute.xlu0 %2841
    %vm2843 = vcmp.eq.s32.totalorder %v2842, 1
    %v2846 = vrot.slane %v2838, 7
    %v2847 = vrot.slane %v2839, 6
    %v2848 = vsel %vm857, %v2847, %v2846
    %v2850 = vsel %vm2843, %v2848, %v2565
    %vm2851 = vcmask 254976
    %2852 = vst.msk [vmem:[#allocation4] sm:$0x3] %vm2851, %v2850
    %v2853 = vld [vmem:[%s19] sm:$0xff]
    %v2854 = vld [vmem:[%s19 + $0x8] sm:$0xff]
    %v2855 = vld [vmem:[%s19 + $0x10] sm:$0xff]
    %v2856 = vld [vmem:[%s19 + $0x18] sm:$0xff]
    %v2857 = vld [vmem:[%s20] sm:$0x1]
    %v2859 = vlaneseq
    %v2860 = vshrl.u32 %v2859, 7
    %v2861 = vsub.s32 0, %v2860
    %v2862 = vrot.slane %v2857, %v2861
    %v2865 = vsel %vm204, %v2850, 0
    %2867 = vmatprep.subr.mxu0 0.0
    %2868 = vmatpush1.msra.mxu0 %v2853
    %2869 = vmatprep.subr.mxu0 0.0
    %2870 = vmatpush1.msra.mxu0 %v2854
    %2871 = vmatprep.subr.mxu0 0.0
    %2872 = vmatpush1.msra.mxu0 %v2855
    %2873 = vmatprep.subr.mxu0 0.0
    %2874 = vmatpush1.msra.mxu0 %v2856
    %2875 = vmatprep.subr.mxu0 0.0
    %2876 = vmatpush1.msra.mxu0 0.0
    %2877 = vmatprep.subr.mxu0 0.0
    %2878 = vmatpush1.msra.mxu0 0.0
    %2879 = vmatprep.subr.mxu0 0.0
    %2880 = vmatpush1.msra.mxu0 0.0
    %2881 = vmatprep.subr.mxu0 0.0
    %2882 = vmatpush1.msra.mxu0 0.0
    %2883 = vmatprep.subr.mxu0 0.0
    %2884 = vmatpush1.msra.mxu0 0.0
    %2885 = vmatprep.subr.mxu0 0.0
    %2886 = vmatpush1.msra.mxu0 0.0
    %2887 = vmatprep.subr.mxu0 0.0
    %2888 = vmatpush1.msra.mxu0 0.0
    %2889 = vmatprep.subr.mxu0 0.0
    %2890 = vmatpush1.msra.mxu0 0.0
    %2891 = vmatprep.subr.mxu0 0.0
    %2892 = vmatpush1.msra.mxu0 0.0
    %2893 = vmatprep.subr.mxu0 0.0
    %2894 = vmatpush1.msra.mxu0 0.0
    %2895 = vmatprep.subr.mxu0 0.0
    %2896 = vmatpush1.msra.mxu0 0.0
    %2897 = vmatprep.subr.mxu0 0.0
    %2898 = vmatpush1.msra.mxu0 0.0
    %2899 = vmatprep.subr.mxu0 0.0
    %2900 = vmatpush1.msra.mxu0 0.0
    %2901 = vmatprep.subr.mxu0 0.0
    %2902 = vmatpush1.msra.mxu0 0.0
    %2903 = vmatprep.subr.mxu0 0.0
    %2904 = vmatpush1.msra.mxu0 0.0
    %2905 = vmatprep.subr.mxu0 0.0
    %2906 = vmatpush1.msra.mxu0 0.0
    %2907 = vmatprep.subr.mxu0 0.0
    %2908 = vmatpush1.msra.mxu0 0.0
    %2909 = vmatprep.subr.mxu0 0.0
    %2910 = vmatpush1.msra.mxu0 0.0
    %2911 = vmatprep.subr.mxu0 0.0
    %2912 = vmatpush1.msra.mxu0 0.0
    %2913 = vmatprep.subr.mxu0 0.0
    %2914 = vmatpush1.msra.mxu0 0.0
    %2915 = vmatprep.subr.mxu0 0.0
    %2916 = vmatpush1.msra.mxu0 0.0
    %2917 = vmatprep.subr.mxu0 0.0
    %2918 = vmatpush1.msra.mxu0 0.0
    %2919 = vmatprep.subr.mxu0 0.0
    %2920 = vmatpush1.msra.mxu0 0.0
    %2921 = vmatprep.subr.mxu0 0.0
    %2922 = vmatpush1.msra.mxu0 0.0
    %2923 = vmatprep.subr.mxu0 0.0
    %2924 = vmatpush1.msra.mxu0 0.0
    %2925 = vmatprep.subr.mxu0 0.0
    %2926 = vmatpush1.msra.mxu0 0.0
    %2927 = vmatprep.subr.mxu0 0.0
    %2928 = vmatpush1.msra.mxu0 0.0
    %2929 = vmatprep.subr.mxu0 0.0
    %2930 = vmatpush1.msra.mxu0 0.0
    %2931 = vmatprep.mubr.f32.mxu0 0.0
    %2932 = vmatmul.mubr.f32.gmra.mrb[0].mxu0 %v2865
    %v2933 = vpop.f32.mrb[0].mxu0
    %v2934 = vadd.f32 %v2862, %v2933
    %v2935 = vpop.f32.mrb[0].mxu0
    %2936 = vdwg.mxu0
    %v2937 = vmax.f32 %v2934, 0.0
    %2938 = vst.msk [vmem:[#allocation2] sm:$0x3] %vm2851, %v2937
    // Predicated region
    $region86: #{lstm_pretext_forward.1} parent=1 // pred_check
      _
    $region87: #{lstm_pretext_forward.1} parent=1 // pred_check_branch
      %2940 = sbr.rel (0) target = $region89
    $region88: #{lstm_pretext_forward.1} parent=1 // pred_region
      %s2942 = ssub.s32 32, 32
      %2943 = vsyncadd [#allocation3], %s2942
      %s2945 = sshll.u32 [#allocation2], 4
      %s2946 = int_to_ptr.vmem [resolvable:$true] %s2945
      %2948 = dma.vmem_to_hbm [thread:$0]  %s2946, 32, %s21, [#allocation3]
    $region89: #{lstm_pretext_forward.1} parent=1 // pred_fallthru
      _
    // Predicated region
    $region90: #{lstm_pretext_forward.1} parent=1 // pred_check
      _
    $region91: #{lstm_pretext_forward.1} parent=1 // pred_check_branch
      %2950 = sbr.rel (0) target = $region93
    $region92: #{lstm_pretext_forward.1} parent=1 // pred_region
      %s2952 = ssub.s32 32, 32
      %2953 = vsyncadd [#allocation5], %s2952
      %s2955 = sshll.u32 [#allocation4], 4
      %s2956 = int_to_ptr.vmem [resolvable:$true] %s2955
      %2958 = dma.vmem_to_hbm [thread:$0]  %s2956, 32, %s22, [#allocation5]
    $region93: #{lstm_pretext_forward.1} parent=1 // pred_fallthru
      _
    // Predicated region
    $region94: #{lstm_pretext_forward.1} parent=1 // pred_check
      _
    $region95: #{lstm_pretext_forward.1} parent=1 // pred_check_branch
      %2960 = sbr.rel (0) target = $region97
    $region96: #{lstm_pretext_forward.1} parent=1 // pred_region
      %2961 = dma.done [#allocation3], 32
    $region97: #{lstm_pretext_forward.1} parent=1 // pred_fallthru
      _
    // Predicated region
    $region98: #{lstm_pretext_forward.1} parent=1 // pred_check
      _
    $region99: #{lstm_pretext_forward.1} parent=1 // pred_check_branch
      %2963 = sbr.rel (0) target = $region101
    $region100: #{lstm_pretext_forward.1} parent=1 // pred_region
      %2964 = dma.done [#allocation5], 32
    $region101: #{lstm_pretext_forward.1} parent=1 // pred_fallthru
      _
    %2965 = vsyncpa [#allocation3], 1
    %2966 = vsyncpa [#allocation5], 1

</llo_original>
